<compile_context>
chip_gen: v5e
topology: v5e:2x2
jax: 0.10.0
libtpu: 0.0.40
codegen_flags: <defaults>
</compile_context>

<pallas_src>
import numpy as np

import jax
import jax.numpy as jnp
from jax.experimental import pallas as pl
from jax.experimental.pallas import tpu as pltpu

LANE = 128      # TPU vreg lane width
SUBLANE = 8     # TPU vreg sublane count (f32)

# Module configuration: ConvolutionalNetwork(input_layer_size=(16, 16, 3),
#                                            hidden_layers_size=[(8, 3, 1), (16, 3, 2)],
#                                            output_layer_size=10)
INPUT_HWC = (16, 16, 3)
HIDDEN = [(8, 3, 1), (16, 3, 2)]
OUTPUT_SIZE = 10


def _round_up(x, m):
    return ((x + m - 1) // m) * m


def _conv_shapes(input_hwc, hidden):
    """Static per-layer geometry (padding=0 convs, exactly as the torch module)."""
    h, w, c = input_hwc
    shapes = []
    for (oc, k, s) in hidden:
        oh = (h - k) // s + 1
        ow = (w - k) // s + 1
        shapes.append(dict(ic=c, ih=h, iw=w, oc=oc, oh=oh, ow=ow, k=k, stride=s))
        c, h, w = oc, oh, ow
    return shapes


# --------------------------- one-time parameter prep --------------------------- #

def prepare_params(params, input_hwc, hidden, output_size):
    """One-time conversion of torch-layout parameters into padded kernel constants."""
    shapes = _conv_shapes(input_hwc, hidden)
    layers = []
    for (w, b), g in zip(params["convs"], shapes):
        ic, iw, oc = g["ic"], g["iw"], g["oc"]
        oh, ow, k, s = g["oh"], g["ow"], g["k"], g["stride"]
        ic_p = _round_up(ic, SUBLANE)
        oc_p = _round_up(oc, SUBLANE)
        in_sp = _round_up(g["ih"] * g["iw"], LANE)
        out_sp = _round_up(oh * ow, LANE)

        # Per-tap conv weights (K*K, OC_pad, IC_pad); padded rows/cols are zero.
        wnp = np.asarray(w, np.float32)
        wt = np.zeros((k * k, oc_p, ic_p), np.float32)
        for ki in range(k):
            for kj in range(k):
                wt[ki * k + kj, :oc, :ic] = wnp[:, :, ki, kj]

        # Per-tap 0/1 spatial-selection matrices (K*K, in_sp, out_sp):
        #   S[t, p, q] = 1  iff  p == (qy*stride + ki)*IW + (qx*stride + kj),
        # so (h_in @ S[t])[c, q] is the input pixel under kernel tap (ki, kj) for output
        # position q = qy*OW + qx.  Padding rows/cols stay zero, which also guarantees
        # that relu(bias) junk living in padded lanes never propagates to the next layer.
        sel = np.zeros((k * k, in_sp, out_sp), np.float32)
        for ki in range(k):
            for kj in range(k):
                t = ki * k + kj
                for qy in range(oh):
                    for qx in range(ow):
                        p = (qy * s + ki) * iw + (qx * s + kj)
                        sel[t, p, qy * ow + qx] = 1.0

        bp = np.zeros((oc_p, 1), np.float32)
        bp[:oc, 0] = np.asarray(b, np.float32)

        layers.append(dict(
            w=jnp.asarray(wt), b=jnp.asarray(bp), s=jnp.asarray(sel),
            ic_p=ic_p, oc=oc, oc_p=oc_p, in_sp=in_sp, out_sp=out_sp, taps=k * k))

    # Final Linear, decomposed per channel of the last conv output so the kernel never
    # needs an in-kernel (OC, OHW) -> (OC*OHW,) reshape:
    #   y[n] = bl[n] + sum_c  h_last[c, :] @ Wl_block[c, :, n]
    # with Wl_block[c, q, n] = Wl[n, c*(OH*OW) + q]   (torch Flatten(start_dim=0) order).
    last = shapes[-1]
    ohw = last["oh"] * last["ow"]
    out_sp = _round_up(ohw, LANE)
    n_pad = _round_up(output_size, LANE)           # lane-dense padded output width
    wl, bl = params["linear"]
    wlnp = np.asarray(wl, np.float32).reshape(output_size, last["oc"], ohw)
    wlr = np.zeros((last["oc"], out_sp, n_pad), np.float32)
    wlr[:, :ohw, :output_size] = np.transpose(wlnp, (1, 2, 0))
    blp = np.zeros((1, n_pad), np.float32)
    blp[0, :output_size] = np.asarray(bl, np.float32)

    return dict(layers=layers, wl=jnp.asarray(wlr), bl=jnp.asarray(blp),
                n_pad=n_pad, output_size=output_size)


# --------------------------------- fused kernel -------------------------------- #

def _make_fused_kernel(layers_meta, last_oc):
    """Builds the fused conv->ReLU->...->flatten->linear kernel body, statically
    unrolled over layers, kernel taps and linear channel blocks."""
    n_layers = len(layers_meta)

    def kernel(*refs):
        x_ref = refs[0]
        wl_ref = refs[1 + 3 * n_layers]
        bl_ref = refs[2 + 3 * n_layers]
        o_ref = refs[3 + 3 * n_layers]

        h = x_ref[0]                                    # (IC_pad, IHW_pad) of this image
        for l in range(n_layers):
            w_ref = refs[1 + 3 * l]
            b_ref = refs[2 + 3 * l]
            s_ref = refs[3 + 3 * l]
            acc = None
            for t in range(layers_meta[l]["taps"]):     # unrolled kernel taps
                tap = jnp.dot(h, s_ref[t],              # (IC_pad, OHW_pad): spatial gather
                              preferred_element_type=jnp.float32)
                part = jnp.dot(w_ref[t], tap,           # (OC_pad, OHW_pad): channel mix
                               preferred_element_type=jnp.float32)
                acc = part if acc is None else acc + part
            h = jnp.maximum(acc + b_ref[...], 0.0)      # Conv2d bias + ReLU

        # Flatten(start_dim=0) + Linear: accumulate per conv output channel, so the
        # C-major flatten is realised purely through the prepared weight layout.
        y = bl_ref[...]                                 # (1, N_pad), lane-dense
        for c in range(last_oc):
            y = y + jnp.dot(h[c:c + 1, :], wl_ref[c],
                            preferred_element_type=jnp.float32)
        o_ref[0] = y                                    # single lane-dense HBM store

    return kernel


def make_forward_fns(params, input_hwc=INPUT_HWC, hidden=HIDDEN, output_size=OUTPUT_SIZE):
    prepared = prepare_params(params, input_hwc, hidden, output_size)
    layers = prepared["layers"]
    last_oc = layers[-1]["oc"]
    n_pad = prepared["n_pad"]
    ih, iw, ic = input_hwc
    ic_p0 = layers[0]["ic_p"]
    in_sp0 = layers[0]["in_sp"]

    kernel = _make_fused_kernel(layers, last_oc)

    # Parameters: constant index maps -> DMA'd into VMEM once, resident across grid steps.
    param_operands = []
    param_specs = []
    for layer in layers:
        for arr in (layer["w"], layer["b"], layer["s"]):
            param_operands.append(arr)
            param_specs.append(pl.BlockSpec(arr.shape, lambda i, nd=arr.ndim: (0,) * nd))
    for arr in (prepared["wl"], prepared["bl"]):
        param_operands.append(arr)
        param_specs.append(pl.BlockSpec(arr.shape, lambda i, nd=arr.ndim: (0,) * nd))

    @jax.jit
    def batched_chw(x_bchw):
        """Fused network on a batch of CHW images -> (B, output_size)."""
        b = x_bchw.shape[0]
        x = x_bchw.astype(jnp.float32).reshape(b, ic, ih * iw)          # (B, C, H*W)
        x = jnp.pad(x, ((0, 0), (0, ic_p0 - ic), (0, in_sp0 - ih * iw)))  # aligned tiles

        out = pl.pallas_call(
            kernel,
            out_shape=jax.ShapeDtypeStruct((b, 1, n_pad), jnp.float32),
            grid=(b,),
            in_specs=[pl.BlockSpec((1, ic_p0, in_sp0), lambda i: (i, 0, 0))] + param_specs,
            out_specs=pl.BlockSpec((1, 1, n_pad), lambda i: (i, 0, 0)),
            compiler_params=pltpu.CompilerParams(
                dimension_semantics=("parallel",),     # megacore: shard batch on v7x
                vmem_limit_bytes=32 * 1024 * 1024,
            ),
        )(x, *param_operands)
        return out[:, 0, :output_size]                  # drop the 10 -> 128 lane padding

    def forward(x):
        """Single-image forward with the exact torch-module semantics."""
        if x.ndim >= 3 and x.shape[-1] == 3:            # torch: permute(2, 0, 1)
            x = jnp.transpose(x, (2, 0, 1))             # HWC -> CHW
        return batched_chw(x[None])[0]                  # (output_size,)

    def forward_batched(x_bhwc):
        """Convenience batched entry point (stack of HWC images)."""
        return batched_chw(jnp.transpose(x_bhwc, (0, 3, 1, 2)))

    return forward, forward_batched


# ------------------------- init + pure-JAX reference --------------------------- #

def init_params(key, input_hwc, hidden, output_size):
    """Deterministic init mirroring torch's default U(-1/sqrt(fan_in), 1/sqrt(fan_in))."""
    h, w, c = input_hwc
    params = {"convs": []}
    ch = c
    for (oc, k, s) in hidden:
        key, k1, k2 = jax.random.split(key, 3)
        bound = 1.0 / float(ch * k * k) ** 0.5
        wgt = jax.random.uniform(k1, (oc, ch, k, k), jnp.float32, -bound, bound)
        b = jax.random.uniform(k2, (oc,), jnp.float32, -bound, bound)
        params["convs"].append((wgt, b))
        ch = oc
        h = (h - k) // s + 1
        w = (w - k) // s + 1
    flat = ch * h * w
    key, k1, k2 = jax.random.split(key, 3)
    bound = 1.0 / float(flat) ** 0.5
    wl = jax.random.uniform(k1, (output_size, flat), jnp.float32, -bound, bound)
    bl = jax.random.uniform(k2, (output_size,), jnp.float32, -bound, bound)
    params["linear"] = (wl, bl)
    return params


def reference_forward(x, params, hidden=HIDDEN):
    """Pure-JAX (lax.conv) re-implementation of the torch module, used as a self-check."""
    if x.ndim >= 3 and x.shape[-1] == 3:
        x = jnp.transpose(x, (2, 0, 1))
    h = x[None].astype(jnp.float32)                     # (1, C, H, W)
    for (w, b), (_, _, s) in zip(params["convs"], hidden):
        h = jax.lax.conv_general_dilated(
            h, w.astype(jnp.float32), (s, s), "VALID",
            dimension_numbers=("NCHW", "OIHW", "NCHW"),
            precision=jax.lax.Precision.HIGHEST)
        h = jnp.maximum(h + b[None, :, None, None], 0.0)
    flat = h.reshape(-1)                                # Flatten(start_dim=0) on CHW
    wl, bl = params["linear"]
    return jnp.dot(wl, flat, precision=jax.lax.Precision.HIGHEST) + bl


# ------------------------------------- demo ------------------------------------ #

if __name__ == "__main__":
    H, W, C = INPUT_HWC
    key = jax.random.PRNGKey(0)
    key, kx, kb = jax.random.split(key, 3)

    params = init_params(key, INPUT_HWC, HIDDEN, OUTPUT_SIZE)
    forward, forward_batched = make_forward_fns(params)

    # Single unbatched HWC image (the module's forward path, incl. the permute).
    x = jax.random.normal(kx, (H, W, C), jnp.float32)
    y = forward(x)
    jax.block_until_ready(y)
    assert y.shape == (OUTPUT_SIZE,) and y.dtype == jnp.float32

    # Small batch through the gridded, megacore-parallel path.
    xb = jax.random.normal(kb, (4, H, W, C), jnp.float32)
    yb = forward_batched(xb)
    jax.block_until_ready(yb)
    assert yb.shape == (4, OUTPUT_SIZE)

    # Numerical self-check against a pure-JAX reference of the same module.
    y_ref = reference_forward(x, params)
    yb_ref = jnp.stack([reference_forward(xb[i], params) for i in range(xb.shape[0])])
    assert jnp.allclose(y, y_ref, rtol=2e-2, atol=2e-2)
    assert jnp.allclose(yb, yb_ref, rtol=2e-2, atol=2e-2)

    print("KERNEL_OK")
</pallas_src>

<mosaic_0001>
module attributes {stable_mosaic.version = 11 : i64} {
  func.func @kernel(%arg0: i32, %arg1: memref<1x8x256xf32, #tpu.memory_space<vmem>>, %arg2: memref<9x8x8xf32, #tpu.memory_space<vmem>>, %arg3: memref<8x1xf32, #tpu.memory_space<vmem>>, %arg4: memref<9x256x256xf32, #tpu.memory_space<vmem>>, %arg5: memref<9x16x8xf32, #tpu.memory_space<vmem>>, %arg6: memref<16x1xf32, #tpu.memory_space<vmem>>, %arg7: memref<9x256x128xf32, #tpu.memory_space<vmem>>, %arg8: memref<16x128x128xf32, #tpu.memory_space<vmem>>, %arg9: memref<1x128xf32, #tpu.memory_space<vmem>>, %arg10: memref<1x1x128xf32, #tpu.memory_space<vmem>>) attributes {dimension_semantics = [#tpu.dimension_semantics<parallel>], iteration_bounds = array<i64: 1>, scalar_prefetch = 0 : i64, scratch_operands = 0 : i64, tpu.core_type = #tpu.core_type<tc>, window_params = [{transform_indices = @transform_0, window_bounds = array<i64: 1, 8, 256>}, {pipeline_mode = #tpu.pipeline_mode<synchronous>, transform_indices = @transform_1, window_bounds = array<i64: 9, 8, 8>}, {pipeline_mode = #tpu.pipeline_mode<synchronous>, transform_indices = @transform_2, window_bounds = array<i64: 8, 1>}, {pipeline_mode = #tpu.pipeline_mode<synchronous>, transform_indices = @transform_3, window_bounds = array<i64: 9, 256, 256>}, {pipeline_mode = #tpu.pipeline_mode<synchronous>, transform_indices = @transform_4, window_bounds = array<i64: 9, 16, 8>}, {pipeline_mode = #tpu.pipeline_mode<synchronous>, transform_indices = @transform_5, window_bounds = array<i64: 16, 1>}, {pipeline_mode = #tpu.pipeline_mode<synchronous>, transform_indices = @transform_6, window_bounds = array<i64: 9, 256, 128>}, {pipeline_mode = #tpu.pipeline_mode<synchronous>, transform_indices = @transform_7, window_bounds = array<i64: 16, 128, 128>}, {pipeline_mode = #tpu.pipeline_mode<synchronous>, transform_indices = @transform_8, window_bounds = array<i64: 1, 128>}, {transform_indices = @transform_9, window_bounds = array<i64: 1, 1, 128>}]} {
    %c0 = arith.constant 0 : index
    %c0_0 = arith.constant 0 : index
    %c0_1 = arith.constant 0 : index
    %0 = vector.load %arg1[%c0, %c0_0, %c0_1] : memref<1x8x256xf32, #tpu.memory_space<vmem>>, vector<1x8x256xf32>
    %1 = vector.shape_cast %0 : vector<1x8x256xf32> to vector<8x256xf32>
    %c0_2 = arith.constant 0 : index
    %c0_3 = arith.constant 0 : index
    %c0_4 = arith.constant 0 : index
    %2 = vector.load %arg4[%c0_2, %c0_3, %c0_4] : memref<9x256x256xf32, #tpu.memory_space<vmem>>, vector<1x256x256xf32>
    %3 = vector.shape_cast %2 : vector<1x256x256xf32> to vector<256x256xf32>
    %cst = arith.constant dense<0.000000e+00> : vector<8x256xf32>
    %4 = tpu.matmul %1, %3, %cst {dimension_numbers = #tpu.dot_dimension_numbers<[1], [0], [0], [1], [0, 0, 1, 1], [], []>} : vector<8x256xf32>, vector<256x256xf32>, vector<8x256xf32> -> vector<8x256xf32>
    %c0_5 = arith.constant 0 : index
    %c0_6 = arith.constant 0 : index
    %c0_7 = arith.constant 0 : index
    %5 = vector.load %arg2[%c0_5, %c0_6, %c0_7] : memref<9x8x8xf32, #tpu.memory_space<vmem>>, vector<1x8x8xf32>
    %6 = vector.shape_cast %5 : vector<1x8x8xf32> to vector<8x8xf32>
    %cst_8 = arith.constant dense<0.000000e+00> : vector<8x256xf32>
    %7 = tpu.matmul %6, %4, %cst_8 {dimension_numbers = #tpu.dot_dimension_numbers<[1], [0], [0], [1], [0, 0, 1, 1], [], []>} : vector<8x8xf32>, vector<8x256xf32>, vector<8x256xf32> -> vector<8x256xf32>
    %c1 = arith.constant 1 : index
    %c0_9 = arith.constant 0 : index
    %c0_10 = arith.constant 0 : index
    %8 = vector.load %arg4[%c1, %c0_9, %c0_10] : memref<9x256x256xf32, #tpu.memory_space<vmem>>, vector<1x256x256xf32>
    %9 = vector.shape_cast %8 : vector<1x256x256xf32> to vector<256x256xf32>
    %cst_11 = arith.constant dense<0.000000e+00> : vector<8x256xf32>
    %10 = tpu.matmul %1, %9, %cst_11 {dimension_numbers = #tpu.dot_dimension_numbers<[1], [0], [0], [1], [0, 0, 1, 1], [], []>} : vector<8x256xf32>, vector<256x256xf32>, vector<8x256xf32> -> vector<8x256xf32>
    %c1_12 = arith.constant 1 : index
    %c0_13 = arith.constant 0 : index
    %c0_14 = arith.constant 0 : index
    %11 = vector.load %arg2[%c1_12, %c0_13, %c0_14] : memref<9x8x8xf32, #tpu.memory_space<vmem>>, vector<1x8x8xf32>
    %12 = vector.shape_cast %11 : vector<1x8x8xf32> to vector<8x8xf32>
    %cst_15 = arith.constant dense<0.000000e+00> : vector<8x256xf32>
    %13 = tpu.matmul %12, %10, %cst_15 {dimension_numbers = #tpu.dot_dimension_numbers<[1], [0], [0], [1], [0, 0, 1, 1], [], []>} : vector<8x8xf32>, vector<8x256xf32>, vector<8x256xf32> -> vector<8x256xf32>
    %14 = arith.addf %7, %13 : vector<8x256xf32>
    %c2 = arith.constant 2 : index
    %c0_16 = arith.constant 0 : index
    %c0_17 = arith.constant 0 : index
    %15 = vector.load %arg4[%c2, %c0_16, %c0_17] : memref<9x256x256xf32, #tpu.memory_space<vmem>>, vector<1x256x256xf32>
    %16 = vector.shape_cast %15 : vector<1x256x256xf32> to vector<256x256xf32>
    %cst_18 = arith.constant dense<0.000000e+00> : vector<8x256xf32>
    %17 = tpu.matmul %1, %16, %cst_18 {dimension_numbers = #tpu.dot_dimension_numbers<[1], [0], [0], [1], [0, 0, 1, 1], [], []>} : vector<8x256xf32>, vector<256x256xf32>, vector<8x256xf32> -> vector<8x256xf32>
    %c2_19 = arith.constant 2 : index
    %c0_20 = arith.constant 0 : index
    %c0_21 = arith.constant 0 : index
    %18 = vector.load %arg2[%c2_19, %c0_20, %c0_21] : memref<9x8x8xf32, #tpu.memory_space<vmem>>, vector<1x8x8xf32>
    %19 = vector.shape_cast %18 : vector<1x8x8xf32> to vector<8x8xf32>
    %cst_22 = arith.constant dense<0.000000e+00> : vector<8x256xf32>
    %20 = tpu.matmul %19, %17, %cst_22 {dimension_numbers = #tpu.dot_dimension_numbers<[1], [0], [0], [1], [0, 0, 1, 1], [], []>} : vector<8x8xf32>, vector<8x256xf32>, vector<8x256xf32> -> vector<8x256xf32>
    %21 = arith.addf %14, %20 : vector<8x256xf32>
    %c3 = arith.constant 3 : index
    %c0_23 = arith.constant 0 : index
    %c0_24 = arith.constant 0 : index
    %22 = vector.load %arg4[%c3, %c0_23, %c0_24] : memref<9x256x256xf32, #tpu.memory_space<vmem>>, vector<1x256x256xf32>
    %23 = vector.shape_cast %22 : vector<1x256x256xf32> to vector<256x256xf32>
    %cst_25 = arith.constant dense<0.000000e+00> : vector<8x256xf32>
    %24 = tpu.matmul %1, %23, %cst_25 {dimension_numbers = #tpu.dot_dimension_numbers<[1], [0], [0], [1], [0, 0, 1, 1], [], []>} : vector<8x256xf32>, vector<256x256xf32>, vector<8x256xf32> -> vector<8x256xf32>
    %c3_26 = arith.constant 3 : index
    %c0_27 = arith.constant 0 : index
    %c0_28 = arith.constant 0 : index
    %25 = vector.load %arg2[%c3_26, %c0_27, %c0_28] : memref<9x8x8xf32, #tpu.memory_space<vmem>>, vector<1x8x8xf32>
    %26 = vector.shape_cast %25 : vector<1x8x8xf32> to vector<8x8xf32>
    %cst_29 = arith.constant dense<0.000000e+00> : vector<8x256xf32>
    %27 = tpu.matmul %26, %24, %cst_29 {dimension_numbers = #tpu.dot_dimension_numbers<[1], [0], [0], [1], [0, 0, 1, 1], [], []>} : vector<8x8xf32>, vector<8x256xf32>, vector<8x256xf32> -> vector<8x256xf32>
    %28 = arith.addf %21, %27 : vector<8x256xf32>
    %c4 = arith.constant 4 : index
    %c0_30 = arith.constant 0 : index
    %c0_31 = arith.constant 0 : index
    %29 = vector.load %arg4[%c4, %c0_30, %c0_31] : memref<9x256x256xf32, #tpu.memory_space<vmem>>, vector<1x256x256xf32>
    %30 = vector.shape_cast %29 : vector<1x256x256xf32> to vector<256x256xf32>
    %cst_32 = arith.constant dense<0.000000e+00> : vector<8x256xf32>
    %31 = tpu.matmul %1, %30, %cst_32 {dimension_numbers = #tpu.dot_dimension_numbers<[1], [0], [0], [1], [0, 0, 1, 1], [], []>} : vector<8x256xf32>, vector<256x256xf32>, vector<8x256xf32> -> vector<8x256xf32>
    %c4_33 = arith.constant 4 : index
    %c0_34 = arith.constant 0 : index
    %c0_35 = arith.constant 0 : index
    %32 = vector.load %arg2[%c4_33, %c0_34, %c0_35] : memref<9x8x8xf32, #tpu.memory_space<vmem>>, vector<1x8x8xf32>
    %33 = vector.shape_cast %32 : vector<1x8x8xf32> to vector<8x8xf32>
    %cst_36 = arith.constant dense<0.000000e+00> : vector<8x256xf32>
    %34 = tpu.matmul %33, %31, %cst_36 {dimension_numbers = #tpu.dot_dimension_numbers<[1], [0], [0], [1], [0, 0, 1, 1], [], []>} : vector<8x8xf32>, vector<8x256xf32>, vector<8x256xf32> -> vector<8x256xf32>
    %35 = arith.addf %28, %34 : vector<8x256xf32>
    %c5 = arith.constant 5 : index
    %c0_37 = arith.constant 0 : index
    %c0_38 = arith.constant 0 : index
    %36 = vector.load %arg4[%c5, %c0_37, %c0_38] : memref<9x256x256xf32, #tpu.memory_space<vmem>>, vector<1x256x256xf32>
    %37 = vector.shape_cast %36 : vector<1x256x256xf32> to vector<256x256xf32>
    %cst_39 = arith.constant dense<0.000000e+00> : vector<8x256xf32>
    %38 = tpu.matmul %1, %37, %cst_39 {dimension_numbers = #tpu.dot_dimension_numbers<[1], [0], [0], [1], [0, 0, 1, 1], [], []>} : vector<8x256xf32>, vector<256x256xf32>, vector<8x256xf32> -> vector<8x256xf32>
    %c5_40 = arith.constant 5 : index
    %c0_41 = arith.constant 0 : index
    %c0_42 = arith.constant 0 : index
    %39 = vector.load %arg2[%c5_40, %c0_41, %c0_42] : memref<9x8x8xf32, #tpu.memory_space<vmem>>, vector<1x8x8xf32>
    %40 = vector.shape_cast %39 : vector<1x8x8xf32> to vector<8x8xf32>
    %cst_43 = arith.constant dense<0.000000e+00> : vector<8x256xf32>
    %41 = tpu.matmul %40, %38, %cst_43 {dimension_numbers = #tpu.dot_dimension_numbers<[1], [0], [0], [1], [0, 0, 1, 1], [], []>} : vector<8x8xf32>, vector<8x256xf32>, vector<8x256xf32> -> vector<8x256xf32>
    %42 = arith.addf %35, %41 : vector<8x256xf32>
    %c6 = arith.constant 6 : index
    %c0_44 = arith.constant 0 : index
    %c0_45 = arith.constant 0 : index
    %43 = vector.load %arg4[%c6, %c0_44, %c0_45] : memref<9x256x256xf32, #tpu.memory_space<vmem>>, vector<1x256x256xf32>
    %44 = vector.shape_cast %43 : vector<1x256x256xf32> to vector<256x256xf32>
    %cst_46 = arith.constant dense<0.000000e+00> : vector<8x256xf32>
    %45 = tpu.matmul %1, %44, %cst_46 {dimension_numbers = #tpu.dot_dimension_numbers<[1], [0], [0], [1], [0, 0, 1, 1], [], []>} : vector<8x256xf32>, vector<256x256xf32>, vector<8x256xf32> -> vector<8x256xf32>
    %c6_47 = arith.constant 6 : index
    %c0_48 = arith.constant 0 : index
    %c0_49 = arith.constant 0 : index
    %46 = vector.load %arg2[%c6_47, %c0_48, %c0_49] : memref<9x8x8xf32, #tpu.memory_space<vmem>>, vector<1x8x8xf32>
    %47 = vector.shape_cast %46 : vector<1x8x8xf32> to vector<8x8xf32>
    %cst_50 = arith.constant dense<0.000000e+00> : vector<8x256xf32>
    %48 = tpu.matmul %47, %45, %cst_50 {dimension_numbers = #tpu.dot_dimension_numbers<[1], [0], [0], [1], [0, 0, 1, 1], [], []>} : vector<8x8xf32>, vector<8x256xf32>, vector<8x256xf32> -> vector<8x256xf32>
    %49 = arith.addf %42, %48 : vector<8x256xf32>
    %c7 = arith.constant 7 : index
    %c0_51 = arith.constant 0 : index
    %c0_52 = arith.constant 0 : index
    %50 = vector.load %arg4[%c7, %c0_51, %c0_52] : memref<9x256x256xf32, #tpu.memory_space<vmem>>, vector<1x256x256xf32>
    %51 = vector.shape_cast %50 : vector<1x256x256xf32> to vector<256x256xf32>
    %cst_53 = arith.constant dense<0.000000e+00> : vector<8x256xf32>
    %52 = tpu.matmul %1, %51, %cst_53 {dimension_numbers = #tpu.dot_dimension_numbers<[1], [0], [0], [1], [0, 0, 1, 1], [], []>} : vector<8x256xf32>, vector<256x256xf32>, vector<8x256xf32> -> vector<8x256xf32>
    %c7_54 = arith.constant 7 : index
    %c0_55 = arith.constant 0 : index
    %c0_56 = arith.constant 0 : index
    %53 = vector.load %arg2[%c7_54, %c0_55, %c0_56] : memref<9x8x8xf32, #tpu.memory_space<vmem>>, vector<1x8x8xf32>
    %54 = vector.shape_cast %53 : vector<1x8x8xf32> to vector<8x8xf32>
    %cst_57 = arith.constant dense<0.000000e+00> : vector<8x256xf32>
    %55 = tpu.matmul %54, %52, %cst_57 {dimension_numbers = #tpu.dot_dimension_numbers<[1], [0], [0], [1], [0, 0, 1, 1], [], []>} : vector<8x8xf32>, vector<8x256xf32>, vector<8x256xf32> -> vector<8x256xf32>
    %56 = arith.addf %49, %55 : vector<8x256xf32>
    %c8 = arith.constant 8 : index
    %c0_58 = arith.constant 0 : index
    %c0_59 = arith.constant 0 : index
    %57 = vector.load %arg4[%c8, %c0_58, %c0_59] : memref<9x256x256xf32, #tpu.memory_space<vmem>>, vector<1x256x256xf32>
    %58 = vector.shape_cast %57 : vector<1x256x256xf32> to vector<256x256xf32>
    %cst_60 = arith.constant dense<0.000000e+00> : vector<8x256xf32>
    %59 = tpu.matmul %1, %58, %cst_60 {dimension_numbers = #tpu.dot_dimension_numbers<[1], [0], [0], [1], [0, 0, 1, 1], [], []>} : vector<8x256xf32>, vector<256x256xf32>, vector<8x256xf32> -> vector<8x256xf32>
    %c8_61 = arith.constant 8 : index
    %c0_62 = arith.constant 0 : index
    %c0_63 = arith.constant 0 : index
    %60 = vector.load %arg2[%c8_61, %c0_62, %c0_63] : memref<9x8x8xf32, #tpu.memory_space<vmem>>, vector<1x8x8xf32>
    %61 = vector.shape_cast %60 : vector<1x8x8xf32> to vector<8x8xf32>
    %cst_64 = arith.constant dense<0.000000e+00> : vector<8x256xf32>
    %62 = tpu.matmul %61, %59, %cst_64 {dimension_numbers = #tpu.dot_dimension_numbers<[1], [0], [0], [1], [0, 0, 1, 1], [], []>} : vector<8x8xf32>, vector<8x256xf32>, vector<8x256xf32> -> vector<8x256xf32>
    %63 = arith.addf %56, %62 : vector<8x256xf32>
    %c0_65 = arith.constant 0 : index
    %c0_66 = arith.constant 0 : index
    %64 = vector.load %arg3[%c0_65, %c0_66] : memref<8x1xf32, #tpu.memory_space<vmem>>, vector<8x1xf32>
    %65 = vector.broadcast %64 : vector<8x1xf32> to vector<8x256xf32>
    %66 = arith.addf %63, %65 : vector<8x256xf32>
    %cst_67 = arith.constant 0.000000e+00 : f32
    %67 = vector.broadcast %cst_67 : f32 to vector<8x256xf32>
    %68 = arith.maximumf %66, %67 : vector<8x256xf32>
    %c0_68 = arith.constant 0 : index
    %c0_69 = arith.constant 0 : index
    %c0_70 = arith.constant 0 : index
    %69 = vector.load %arg7[%c0_68, %c0_69, %c0_70] : memref<9x256x128xf32, #tpu.memory_space<vmem>>, vector<1x256x128xf32>
    %70 = vector.shape_cast %69 : vector<1x256x128xf32> to vector<256x128xf32>
    %cst_71 = arith.constant dense<0.000000e+00> : vector<8x128xf32>
    %71 = tpu.matmul %68, %70, %cst_71 {dimension_numbers = #tpu.dot_dimension_numbers<[1], [0], [0], [1], [0, 0, 1, 1], [], []>} : vector<8x256xf32>, vector<256x128xf32>, vector<8x128xf32> -> vector<8x128xf32>
    %c0_72 = arith.constant 0 : index
    %c0_73 = arith.constant 0 : index
    %c0_74 = arith.constant 0 : index
    %72 = vector.load %arg5[%c0_72, %c0_73, %c0_74] : memref<9x16x8xf32, #tpu.memory_space<vmem>>, vector<1x16x8xf32>
    %73 = vector.shape_cast %72 : vector<1x16x8xf32> to vector<16x8xf32>
    %cst_75 = arith.constant dense<0.000000e+00> : vector<16x128xf32>
    %74 = tpu.matmul %73, %71, %cst_75 {dimension_numbers = #tpu.dot_dimension_numbers<[1], [0], [0], [1], [0, 0, 1, 1], [], []>} : vector<16x8xf32>, vector<8x128xf32>, vector<16x128xf32> -> vector<16x128xf32>
    %c1_76 = arith.constant 1 : index
    %c0_77 = arith.constant 0 : index
    %c0_78 = arith.constant 0 : index
    %75 = vector.load %arg7[%c1_76, %c0_77, %c0_78] : memref<9x256x128xf32, #tpu.memory_space<vmem>>, vector<1x256x128xf32>
    %76 = vector.shape_cast %75 : vector<1x256x128xf32> to vector<256x128xf32>
    %cst_79 = arith.constant dense<0.000000e+00> : vector<8x128xf32>
    %77 = tpu.matmul %68, %76, %cst_79 {dimension_numbers = #tpu.dot_dimension_numbers<[1], [0], [0], [1], [0, 0, 1, 1], [], []>} : vector<8x256xf32>, vector<256x128xf32>, vector<8x128xf32> -> vector<8x128xf32>
    %c1_80 = arith.constant 1 : index
    %c0_81 = arith.constant 0 : index
    %c0_82 = arith.constant 0 : index
    %78 = vector.load %arg5[%c1_80, %c0_81, %c0_82] : memref<9x16x8xf32, #tpu.memory_space<vmem>>, vector<1x16x8xf32>
    %79 = vector.shape_cast %78 : vector<1x16x8xf32> to vector<16x8xf32>
    %cst_83 = arith.constant dense<0.000000e+00> : vector<16x128xf32>
    %80 = tpu.matmul %79, %77, %cst_83 {dimension_numbers = #tpu.dot_dimension_numbers<[1], [0], [0], [1], [0, 0, 1, 1], [], []>} : vector<16x8xf32>, vector<8x128xf32>, vector<16x128xf32> -> vector<16x128xf32>
    %81 = arith.addf %74, %80 : vector<16x128xf32>
    %c2_84 = arith.constant 2 : index
    %c0_85 = arith.constant 0 : index
    %c0_86 = arith.constant 0 : index
    %82 = vector.load %arg7[%c2_84, %c0_85, %c0_86] : memref<9x256x128xf32, #tpu.memory_space<vmem>>, vector<1x256x128xf32>
    %83 = vector.shape_cast %82 : vector<1x256x128xf32> to vector<256x128xf32>
    %cst_87 = arith.constant dense<0.000000e+00> : vector<8x128xf32>
    %84 = tpu.matmul %68, %83, %cst_87 {dimension_numbers = #tpu.dot_dimension_numbers<[1], [0], [0], [1], [0, 0, 1, 1], [], []>} : vector<8x256xf32>, vector<256x128xf32>, vector<8x128xf32> -> vector<8x128xf32>
    %c2_88 = arith.constant 2 : index
    %c0_89 = arith.constant 0 : index
    %c0_90 = arith.constant 0 : index
    %85 = vector.load %arg5[%c2_88, %c0_89, %c0_90] : memref<9x16x8xf32, #tpu.memory_space<vmem>>, vector<1x16x8xf32>
    %86 = vector.shape_cast %85 : vector<1x16x8xf32> to vector<16x8xf32>
    %cst_91 = arith.constant dense<0.000000e+00> : vector<16x128xf32>
    %87 = tpu.matmul %86, %84, %cst_91 {dimension_numbers = #tpu.dot_dimension_numbers<[1], [0], [0], [1], [0, 0, 1, 1], [], []>} : vector<16x8xf32>, vector<8x128xf32>, vector<16x128xf32> -> vector<16x128xf32>
    %88 = arith.addf %81, %87 : vector<16x128xf32>
    %c3_92 = arith.constant 3 : index
    %c0_93 = arith.constant 0 : index
    %c0_94 = arith.constant 0 : index
    %89 = vector.load %arg7[%c3_92, %c0_93, %c0_94] : memref<9x256x128xf32, #tpu.memory_space<vmem>>, vector<1x256x128xf32>
    %90 = vector.shape_cast %89 : vector<1x256x128xf32> to vector<256x128xf32>
    %cst_95 = arith.constant dense<0.000000e+00> : vector<8x128xf32>
    %91 = tpu.matmul %68, %90, %cst_95 {dimension_numbers = #tpu.dot_dimension_numbers<[1], [0], [0], [1], [0, 0, 1, 1], [], []>} : vector<8x256xf32>, vector<256x128xf32>, vector<8x128xf32> -> vector<8x128xf32>
    %c3_96 = arith.constant 3 : index
    %c0_97 = arith.constant 0 : index
    %c0_98 = arith.constant 0 : index
    %92 = vector.load %arg5[%c3_96, %c0_97, %c0_98] : memref<9x16x8xf32, #tpu.memory_space<vmem>>, vector<1x16x8xf32>
    %93 = vector.shape_cast %92 : vector<1x16x8xf32> to vector<16x8xf32>
    %cst_99 = arith.constant dense<0.000000e+00> : vector<16x128xf32>
    %94 = tpu.matmul %93, %91, %cst_99 {dimension_numbers = #tpu.dot_dimension_numbers<[1], [0], [0], [1], [0, 0, 1, 1], [], []>} : vector<16x8xf32>, vector<8x128xf32>, vector<16x128xf32> -> vector<16x128xf32>
    %95 = arith.addf %88, %94 : vector<16x128xf32>
    %c4_100 = arith.constant 4 : index
    %c0_101 = arith.constant 0 : index
    %c0_102 = arith.constant 0 : index
    %96 = vector.load %arg7[%c4_100, %c0_101, %c0_102] : memref<9x256x128xf32, #tpu.memory_space<vmem>>, vector<1x256x128xf32>
    %97 = vector.shape_cast %96 : vector<1x256x128xf32> to vector<256x128xf32>
    %cst_103 = arith.constant dense<0.000000e+00> : vector<8x128xf32>
    %98 = tpu.matmul %68, %97, %cst_103 {dimension_numbers = #tpu.dot_dimension_numbers<[1], [0], [0], [1], [0, 0, 1, 1], [], []>} : vector<8x256xf32>, vector<256x128xf32>, vector<8x128xf32> -> vector<8x128xf32>
    %c4_104 = arith.constant 4 : index
    %c0_105 = arith.constant 0 : index
    %c0_106 = arith.constant 0 : index
    %99 = vector.load %arg5[%c4_104, %c0_105, %c0_106] : memref<9x16x8xf32, #tpu.memory_space<vmem>>, vector<1x16x8xf32>
    %100 = vector.shape_cast %99 : vector<1x16x8xf32> to vector<16x8xf32>
    %cst_107 = arith.constant dense<0.000000e+00> : vector<16x128xf32>
    %101 = tpu.matmul %100, %98, %cst_107 {dimension_numbers = #tpu.dot_dimension_numbers<[1], [0], [0], [1], [0, 0, 1, 1], [], []>} : vector<16x8xf32>, vector<8x128xf32>, vector<16x128xf32> -> vector<16x128xf32>
    %102 = arith.addf %95, %101 : vector<16x128xf32>
    %c5_108 = arith.constant 5 : index
    %c0_109 = arith.constant 0 : index
    %c0_110 = arith.constant 0 : index
    %103 = vector.load %arg7[%c5_108, %c0_109, %c0_110] : memref<9x256x128xf32, #tpu.memory_space<vmem>>, vector<1x256x128xf32>
    %104 = vector.shape_cast %103 : vector<1x256x128xf32> to vector<256x128xf32>
    %cst_111 = arith.constant dense<0.000000e+00> : vector<8x128xf32>
    %105 = tpu.matmul %68, %104, %cst_111 {dimension_numbers = #tpu.dot_dimension_numbers<[1], [0], [0], [1], [0, 0, 1, 1], [], []>} : vector<8x256xf32>, vector<256x128xf32>, vector<8x128xf32> -> vector<8x128xf32>
    %c5_112 = arith.constant 5 : index
    %c0_113 = arith.constant 0 : index
    %c0_114 = arith.constant 0 : index
    %106 = vector.load %arg5[%c5_112, %c0_113, %c0_114] : memref<9x16x8xf32, #tpu.memory_space<vmem>>, vector<1x16x8xf32>
    %107 = vector.shape_cast %106 : vector<1x16x8xf32> to vector<16x8xf32>
    %cst_115 = arith.constant dense<0.000000e+00> : vector<16x128xf32>
    %108 = tpu.matmul %107, %105, %cst_115 {dimension_numbers = #tpu.dot_dimension_numbers<[1], [0], [0], [1], [0, 0, 1, 1], [], []>} : vector<16x8xf32>, vector<8x128xf32>, vector<16x128xf32> -> vector<16x128xf32>
    %109 = arith.addf %102, %108 : vector<16x128xf32>
    %c6_116 = arith.constant 6 : index
    %c0_117 = arith.constant 0 : index
    %c0_118 = arith.constant 0 : index
    %110 = vector.load %arg7[%c6_116, %c0_117, %c0_118] : memref<9x256x128xf32, #tpu.memory_space<vmem>>, vector<1x256x128xf32>
    %111 = vector.shape_cast %110 : vector<1x256x128xf32> to vector<256x128xf32>
    %cst_119 = arith.constant dense<0.000000e+00> : vector<8x128xf32>
    %112 = tpu.matmul %68, %111, %cst_119 {dimension_numbers = #tpu.dot_dimension_numbers<[1], [0], [0], [1], [0, 0, 1, 1], [], []>} : vector<8x256xf32>, vector<256x128xf32>, vector<8x128xf32> -> vector<8x128xf32>
    %c6_120 = arith.constant 6 : index
    %c0_121 = arith.constant 0 : index
    %c0_122 = arith.constant 0 : index
    %113 = vector.load %arg5[%c6_120, %c0_121, %c0_122] : memref<9x16x8xf32, #tpu.memory_space<vmem>>, vector<1x16x8xf32>
    %114 = vector.shape_cast %113 : vector<1x16x8xf32> to vector<16x8xf32>
    %cst_123 = arith.constant dense<0.000000e+00> : vector<16x128xf32>
    %115 = tpu.matmul %114, %112, %cst_123 {dimension_numbers = #tpu.dot_dimension_numbers<[1], [0], [0], [1], [0, 0, 1, 1], [], []>} : vector<16x8xf32>, vector<8x128xf32>, vector<16x128xf32> -> vector<16x128xf32>
    %116 = arith.addf %109, %115 : vector<16x128xf32>
    %c7_124 = arith.constant 7 : index
    %c0_125 = arith.constant 0 : index
    %c0_126 = arith.constant 0 : index
    %117 = vector.load %arg7[%c7_124, %c0_125, %c0_126] : memref<9x256x128xf32, #tpu.memory_space<vmem>>, vector<1x256x128xf32>
    %118 = vector.shape_cast %117 : vector<1x256x128xf32> to vector<256x128xf32>
    %cst_127 = arith.constant dense<0.000000e+00> : vector<8x128xf32>
    %119 = tpu.matmul %68, %118, %cst_127 {dimension_numbers = #tpu.dot_dimension_numbers<[1], [0], [0], [1], [0, 0, 1, 1], [], []>} : vector<8x256xf32>, vector<256x128xf32>, vector<8x128xf32> -> vector<8x128xf32>
    %c7_128 = arith.constant 7 : index
    %c0_129 = arith.constant 0 : index
    %c0_130 = arith.constant 0 : index
    %120 = vector.load %arg5[%c7_128, %c0_129, %c0_130] : memref<9x16x8xf32, #tpu.memory_space<vmem>>, vector<1x16x8xf32>
    %121 = vector.shape_cast %120 : vector<1x16x8xf32> to vector<16x8xf32>
    %cst_131 = arith.constant dense<0.000000e+00> : vector<16x128xf32>
    %122 = tpu.matmul %121, %119, %cst_131 {dimension_numbers = #tpu.dot_dimension_numbers<[1], [0], [0], [1], [0, 0, 1, 1], [], []>} : vector<16x8xf32>, vector<8x128xf32>, vector<16x128xf32> -> vector<16x128xf32>
    %123 = arith.addf %116, %122 : vector<16x128xf32>
    %c8_132 = arith.constant 8 : index
    %c0_133 = arith.constant 0 : index
    %c0_134 = arith.constant 0 : index
    %124 = vector.load %arg7[%c8_132, %c0_133, %c0_134] : memref<9x256x128xf32, #tpu.memory_space<vmem>>, vector<1x256x128xf32>
    %125 = vector.shape_cast %124 : vector<1x256x128xf32> to vector<256x128xf32>
    %cst_135 = arith.constant dense<0.000000e+00> : vector<8x128xf32>
    %126 = tpu.matmul %68, %125, %cst_135 {dimension_numbers = #tpu.dot_dimension_numbers<[1], [0], [0], [1], [0, 0, 1, 1], [], []>} : vector<8x256xf32>, vector<256x128xf32>, vector<8x128xf32> -> vector<8x128xf32>
    %c8_136 = arith.constant 8 : index
    %c0_137 = arith.constant 0 : index
    %c0_138 = arith.constant 0 : index
    %127 = vector.load %arg5[%c8_136, %c0_137, %c0_138] : memref<9x16x8xf32, #tpu.memory_space<vmem>>, vector<1x16x8xf32>
    %128 = vector.shape_cast %127 : vector<1x16x8xf32> to vector<16x8xf32>
    %cst_139 = arith.constant dense<0.000000e+00> : vector<16x128xf32>
    %129 = tpu.matmul %128, %126, %cst_139 {dimension_numbers = #tpu.dot_dimension_numbers<[1], [0], [0], [1], [0, 0, 1, 1], [], []>} : vector<16x8xf32>, vector<8x128xf32>, vector<16x128xf32> -> vector<16x128xf32>
    %130 = arith.addf %123, %129 : vector<16x128xf32>
    %c0_140 = arith.constant 0 : index
    %c0_141 = arith.constant 0 : index
    %131 = vector.load %arg6[%c0_140, %c0_141] : memref<16x1xf32, #tpu.memory_space<vmem>>, vector<16x1xf32>
    %132 = vector.broadcast %131 : vector<16x1xf32> to vector<16x128xf32>
    %133 = arith.addf %130, %132 : vector<16x128xf32>
    %cst_142 = arith.constant 0.000000e+00 : f32
    %134 = vector.broadcast %cst_142 : f32 to vector<16x128xf32>
    %135 = arith.maximumf %133, %134 : vector<16x128xf32>
    %c0_143 = arith.constant 0 : index
    %c0_144 = arith.constant 0 : index
    %136 = vector.load %arg9[%c0_143, %c0_144] : memref<1x128xf32, #tpu.memory_space<vmem>>, vector<1x128xf32>
    %137 = vector.extract_strided_slice %135 {offsets = [0, 0], sizes = [1, 128], strides = [1, 1]} : vector<16x128xf32> to vector<1x128xf32>
    %c0_145 = arith.constant 0 : index
    %c0_146 = arith.constant 0 : index
    %c0_147 = arith.constant 0 : index
    %138 = vector.load %arg8[%c0_145, %c0_146, %c0_147] : memref<16x128x128xf32, #tpu.memory_space<vmem>>, vector<1x128x128xf32>
    %139 = vector.shape_cast %138 : vector<1x128x128xf32> to vector<128x128xf32>
    %cst_148 = arith.constant dense<0.000000e+00> : vector<1x128xf32>
    %140 = tpu.matmul %137, %139, %cst_148 {dimension_numbers = #tpu.dot_dimension_numbers<[1], [0], [0], [1], [0, 0, 1, 1], [], []>} : vector<1x128xf32>, vector<128x128xf32>, vector<1x128xf32> -> vector<1x128xf32>
    %141 = arith.addf %136, %140 : vector<1x128xf32>
    %142 = vector.extract_strided_slice %135 {offsets = [1, 0], sizes = [1, 128], strides = [1, 1]} : vector<16x128xf32> to vector<1x128xf32>
    %c1_149 = arith.constant 1 : index
    %c0_150 = arith.constant 0 : index
    %c0_151 = arith.constant 0 : index
    %143 = vector.load %arg8[%c1_149, %c0_150, %c0_151] : memref<16x128x128xf32, #tpu.memory_space<vmem>>, vector<1x128x128xf32>
    %144 = vector.shape_cast %143 : vector<1x128x128xf32> to vector<128x128xf32>
    %cst_152 = arith.constant dense<0.000000e+00> : vector<1x128xf32>
    %145 = tpu.matmul %142, %144, %cst_152 {dimension_numbers = #tpu.dot_dimension_numbers<[1], [0], [0], [1], [0, 0, 1, 1], [], []>} : vector<1x128xf32>, vector<128x128xf32>, vector<1x128xf32> -> vector<1x128xf32>
    %146 = arith.addf %141, %145 : vector<1x128xf32>
    %147 = vector.extract_strided_slice %135 {offsets = [2, 0], sizes = [1, 128], strides = [1, 1]} : vector<16x128xf32> to vector<1x128xf32>
    %c2_153 = arith.constant 2 : index
    %c0_154 = arith.constant 0 : index
    %c0_155 = arith.constant 0 : index
    %148 = vector.load %arg8[%c2_153, %c0_154, %c0_155] : memref<16x128x128xf32, #tpu.memory_space<vmem>>, vector<1x128x128xf32>
    %149 = vector.shape_cast %148 : vector<1x128x128xf32> to vector<128x128xf32>
    %cst_156 = arith.constant dense<0.000000e+00> : vector<1x128xf32>
    %150 = tpu.matmul %147, %149, %cst_156 {dimension_numbers = #tpu.dot_dimension_numbers<[1], [0], [0], [1], [0, 0, 1, 1], [], []>} : vector<1x128xf32>, vector<128x128xf32>, vector<1x128xf32> -> vector<1x128xf32>
    %151 = arith.addf %146, %150 : vector<1x128xf32>
    %152 = vector.extract_strided_slice %135 {offsets = [3, 0], sizes = [1, 128], strides = [1, 1]} : vector<16x128xf32> to vector<1x128xf32>
    %c3_157 = arith.constant 3 : index
    %c0_158 = arith.constant 0 : index
    %c0_159 = arith.constant 0 : index
    %153 = vector.load %arg8[%c3_157, %c0_158, %c0_159] : memref<16x128x128xf32, #tpu.memory_space<vmem>>, vector<1x128x128xf32>
    %154 = vector.shape_cast %153 : vector<1x128x128xf32> to vector<128x128xf32>
    %cst_160 = arith.constant dense<0.000000e+00> : vector<1x128xf32>
    %155 = tpu.matmul %152, %154, %cst_160 {dimension_numbers = #tpu.dot_dimension_numbers<[1], [0], [0], [1], [0, 0, 1, 1], [], []>} : vector<1x128xf32>, vector<128x128xf32>, vector<1x128xf32> -> vector<1x128xf32>
    %156 = arith.addf %151, %155 : vector<1x128xf32>
    %157 = vector.extract_strided_slice %135 {offsets = [4, 0], sizes = [1, 128], strides = [1, 1]} : vector<16x128xf32> to vector<1x128xf32>
    %c4_161 = arith.constant 4 : index
    %c0_162 = arith.constant 0 : index
    %c0_163 = arith.constant 0 : index
    %158 = vector.load %arg8[%c4_161, %c0_162, %c0_163] : memref<16x128x128xf32, #tpu.memory_space<vmem>>, vector<1x128x128xf32>
    %159 = vector.shape_cast %158 : vector<1x128x128xf32> to vector<128x128xf32>
    %cst_164 = arith.constant dense<0.000000e+00> : vector<1x128xf32>
    %160 = tpu.matmul %157, %159, %cst_164 {dimension_numbers = #tpu.dot_dimension_numbers<[1], [0], [0], [1], [0, 0, 1, 1], [], []>} : vector<1x128xf32>, vector<128x128xf32>, vector<1x128xf32> -> vector<1x128xf32>
    %161 = arith.addf %156, %160 : vector<1x128xf32>
    %162 = vector.extract_strided_slice %135 {offsets = [5, 0], sizes = [1, 128], strides = [1, 1]} : vector<16x128xf32> to vector<1x128xf32>
    %c5_165 = arith.constant 5 : index
    %c0_166 = arith.constant 0 : index
    %c0_167 = arith.constant 0 : index
    %163 = vector.load %arg8[%c5_165, %c0_166, %c0_167] : memref<16x128x128xf32, #tpu.memory_space<vmem>>, vector<1x128x128xf32>
    %164 = vector.shape_cast %163 : vector<1x128x128xf32> to vector<128x128xf32>
    %cst_168 = arith.constant dense<0.000000e+00> : vector<1x128xf32>
    %165 = tpu.matmul %162, %164, %cst_168 {dimension_numbers = #tpu.dot_dimension_numbers<[1], [0], [0], [1], [0, 0, 1, 1], [], []>} : vector<1x128xf32>, vector<128x128xf32>, vector<1x128xf32> -> vector<1x128xf32>
    %166 = arith.addf %161, %165 : vector<1x128xf32>
    %167 = vector.extract_strided_slice %135 {offsets = [6, 0], sizes = [1, 128], strides = [1, 1]} : vector<16x128xf32> to vector<1x128xf32>
    %c6_169 = arith.constant 6 : index
    %c0_170 = arith.constant 0 : index
    %c0_171 = arith.constant 0 : index
    %168 = vector.load %arg8[%c6_169, %c0_170, %c0_171] : memref<16x128x128xf32, #tpu.memory_space<vmem>>, vector<1x128x128xf32>
    %169 = vector.shape_cast %168 : vector<1x128x128xf32> to vector<128x128xf32>
    %cst_172 = arith.constant dense<0.000000e+00> : vector<1x128xf32>
    %170 = tpu.matmul %167, %169, %cst_172 {dimension_numbers = #tpu.dot_dimension_numbers<[1], [0], [0], [1], [0, 0, 1, 1], [], []>} : vector<1x128xf32>, vector<128x128xf32>, vector<1x128xf32> -> vector<1x128xf32>
    %171 = arith.addf %166, %170 : vector<1x128xf32>
    %172 = vector.extract_strided_slice %135 {offsets = [7, 0], sizes = [1, 128], strides = [1, 1]} : vector<16x128xf32> to vector<1x128xf32>
    %c7_173 = arith.constant 7 : index
    %c0_174 = arith.constant 0 : index
    %c0_175 = arith.constant 0 : index
    %173 = vector.load %arg8[%c7_173, %c0_174, %c0_175] : memref<16x128x128xf32, #tpu.memory_space<vmem>>, vector<1x128x128xf32>
    %174 = vector.shape_cast %173 : vector<1x128x128xf32> to vector<128x128xf32>
    %cst_176 = arith.constant dense<0.000000e+00> : vector<1x128xf32>
    %175 = tpu.matmul %172, %174, %cst_176 {dimension_numbers = #tpu.dot_dimension_numbers<[1], [0], [0], [1], [0, 0, 1, 1], [], []>} : vector<1x128xf32>, vector<128x128xf32>, vector<1x128xf32> -> vector<1x128xf32>
    %176 = arith.addf %171, %175 : vector<1x128xf32>
    %177 = vector.extract_strided_slice %135 {offsets = [8, 0], sizes = [1, 128], strides = [1, 1]} : vector<16x128xf32> to vector<1x128xf32>
    %c8_177 = arith.constant 8 : index
    %c0_178 = arith.constant 0 : index
    %c0_179 = arith.constant 0 : index
    %178 = vector.load %arg8[%c8_177, %c0_178, %c0_179] : memref<16x128x128xf32, #tpu.memory_space<vmem>>, vector<1x128x128xf32>
    %179 = vector.shape_cast %178 : vector<1x128x128xf32> to vector<128x128xf32>
    %cst_180 = arith.constant dense<0.000000e+00> : vector<1x128xf32>
    %180 = tpu.matmul %177, %179, %cst_180 {dimension_numbers = #tpu.dot_dimension_numbers<[1], [0], [0], [1], [0, 0, 1, 1], [], []>} : vector<1x128xf32>, vector<128x128xf32>, vector<1x128xf32> -> vector<1x128xf32>
    %181 = arith.addf %176, %180 : vector<1x128xf32>
    %182 = vector.extract_strided_slice %135 {offsets = [9, 0], sizes = [1, 128], strides = [1, 1]} : vector<16x128xf32> to vector<1x128xf32>
    %c9 = arith.constant 9 : index
    %c0_181 = arith.constant 0 : index
    %c0_182 = arith.constant 0 : index
    %183 = vector.load %arg8[%c9, %c0_181, %c0_182] : memref<16x128x128xf32, #tpu.memory_space<vmem>>, vector<1x128x128xf32>
    %184 = vector.shape_cast %183 : vector<1x128x128xf32> to vector<128x128xf32>
    %cst_183 = arith.constant dense<0.000000e+00> : vector<1x128xf32>
    %185 = tpu.matmul %182, %184, %cst_183 {dimension_numbers = #tpu.dot_dimension_numbers<[1], [0], [0], [1], [0, 0, 1, 1], [], []>} : vector<1x128xf32>, vector<128x128xf32>, vector<1x128xf32> -> vector<1x128xf32>
    %186 = arith.addf %181, %185 : vector<1x128xf32>
    %187 = vector.extract_strided_slice %135 {offsets = [10, 0], sizes = [1, 128], strides = [1, 1]} : vector<16x128xf32> to vector<1x128xf32>
    %c10 = arith.constant 10 : index
    %c0_184 = arith.constant 0 : index
    %c0_185 = arith.constant 0 : index
    %188 = vector.load %arg8[%c10, %c0_184, %c0_185] : memref<16x128x128xf32, #tpu.memory_space<vmem>>, vector<1x128x128xf32>
    %189 = vector.shape_cast %188 : vector<1x128x128xf32> to vector<128x128xf32>
    %cst_186 = arith.constant dense<0.000000e+00> : vector<1x128xf32>
    %190 = tpu.matmul %187, %189, %cst_186 {dimension_numbers = #tpu.dot_dimension_numbers<[1], [0], [0], [1], [0, 0, 1, 1], [], []>} : vector<1x128xf32>, vector<128x128xf32>, vector<1x128xf32> -> vector<1x128xf32>
    %191 = arith.addf %186, %190 : vector<1x128xf32>
    %192 = vector.extract_strided_slice %135 {offsets = [11, 0], sizes = [1, 128], strides = [1, 1]} : vector<16x128xf32> to vector<1x128xf32>
    %c11 = arith.constant 11 : index
    %c0_187 = arith.constant 0 : index
    %c0_188 = arith.constant 0 : index
    %193 = vector.load %arg8[%c11, %c0_187, %c0_188] : memref<16x128x128xf32, #tpu.memory_space<vmem>>, vector<1x128x128xf32>
    %194 = vector.shape_cast %193 : vector<1x128x128xf32> to vector<128x128xf32>
    %cst_189 = arith.constant dense<0.000000e+00> : vector<1x128xf32>
    %195 = tpu.matmul %192, %194, %cst_189 {dimension_numbers = #tpu.dot_dimension_numbers<[1], [0], [0], [1], [0, 0, 1, 1], [], []>} : vector<1x128xf32>, vector<128x128xf32>, vector<1x128xf32> -> vector<1x128xf32>
    %196 = arith.addf %191, %195 : vector<1x128xf32>
    %197 = vector.extract_strided_slice %135 {offsets = [12, 0], sizes = [1, 128], strides = [1, 1]} : vector<16x128xf32> to vector<1x128xf32>
    %c12 = arith.constant 12 : index
    %c0_190 = arith.constant 0 : index
    %c0_191 = arith.constant 0 : index
    %198 = vector.load %arg8[%c12, %c0_190, %c0_191] : memref<16x128x128xf32, #tpu.memory_space<vmem>>, vector<1x128x128xf32>
    %199 = vector.shape_cast %198 : vector<1x128x128xf32> to vector<128x128xf32>
    %cst_192 = arith.constant dense<0.000000e+00> : vector<1x128xf32>
    %200 = tpu.matmul %197, %199, %cst_192 {dimension_numbers = #tpu.dot_dimension_numbers<[1], [0], [0], [1], [0, 0, 1, 1], [], []>} : vector<1x128xf32>, vector<128x128xf32>, vector<1x128xf32> -> vector<1x128xf32>
    %201 = arith.addf %196, %200 : vector<1x128xf32>
    %202 = vector.extract_strided_slice %135 {offsets = [13, 0], sizes = [1, 128], strides = [1, 1]} : vector<16x128xf32> to vector<1x128xf32>
    %c13 = arith.constant 13 : index
    %c0_193 = arith.constant 0 : index
    %c0_194 = arith.constant 0 : index
    %203 = vector.load %arg8[%c13, %c0_193, %c0_194] : memref<16x128x128xf32, #tpu.memory_space<vmem>>, vector<1x128x128xf32>
    %204 = vector.shape_cast %203 : vector<1x128x128xf32> to vector<128x128xf32>
    %cst_195 = arith.constant dense<0.000000e+00> : vector<1x128xf32>
    %205 = tpu.matmul %202, %204, %cst_195 {dimension_numbers = #tpu.dot_dimension_numbers<[1], [0], [0], [1], [0, 0, 1, 1], [], []>} : vector<1x128xf32>, vector<128x128xf32>, vector<1x128xf32> -> vector<1x128xf32>
    %206 = arith.addf %201, %205 : vector<1x128xf32>
    %207 = vector.extract_strided_slice %135 {offsets = [14, 0], sizes = [1, 128], strides = [1, 1]} : vector<16x128xf32> to vector<1x128xf32>
    %c14 = arith.constant 14 : index
    %c0_196 = arith.constant 0 : index
    %c0_197 = arith.constant 0 : index
    %208 = vector.load %arg8[%c14, %c0_196, %c0_197] : memref<16x128x128xf32, #tpu.memory_space<vmem>>, vector<1x128x128xf32>
    %209 = vector.shape_cast %208 : vector<1x128x128xf32> to vector<128x128xf32>
    %cst_198 = arith.constant dense<0.000000e+00> : vector<1x128xf32>
    %210 = tpu.matmul %207, %209, %cst_198 {dimension_numbers = #tpu.dot_dimension_numbers<[1], [0], [0], [1], [0, 0, 1, 1], [], []>} : vector<1x128xf32>, vector<128x128xf32>, vector<1x128xf32> -> vector<1x128xf32>
    %211 = arith.addf %206, %210 : vector<1x128xf32>
    %212 = vector.extract_strided_slice %135 {offsets = [15, 0], sizes = [1, 128], strides = [1, 1]} : vector<16x128xf32> to vector<1x128xf32>
    %c15 = arith.constant 15 : index
    %c0_199 = arith.constant 0 : index
    %c0_200 = arith.constant 0 : index
    %213 = vector.load %arg8[%c15, %c0_199, %c0_200] : memref<16x128x128xf32, #tpu.memory_space<vmem>>, vector<1x128x128xf32>
    %214 = vector.shape_cast %213 : vector<1x128x128xf32> to vector<128x128xf32>
    %cst_201 = arith.constant dense<0.000000e+00> : vector<1x128xf32>
    %215 = tpu.matmul %212, %214, %cst_201 {dimension_numbers = #tpu.dot_dimension_numbers<[1], [0], [0], [1], [0, 0, 1, 1], [], []>} : vector<1x128xf32>, vector<128x128xf32>, vector<1x128xf32> -> vector<1x128xf32>
    %216 = arith.addf %211, %215 : vector<1x128xf32>
    %c0_202 = arith.constant 0 : index
    %c0_203 = arith.constant 0 : index
    %c0_204 = arith.constant 0 : index
    %217 = vector.load %arg10[%c0_202, %c0_203, %c0_204] : memref<1x1x128xf32, #tpu.memory_space<vmem>>, vector<1x1x128xf32>
    %218 = vector.shape_cast %217 : vector<1x1x128xf32> to vector<1x128xf32>
    %219 = vector.shape_cast %216 : vector<1x128xf32> to vector<1x1x128xf32>
    tpu.vector_store %arg10[%c0_202, %c0_203, %c0_204], %219 {strides = array<i32>} : memref<1x1x128xf32, #tpu.memory_space<vmem>>, vector<1x1x128xf32>,
    return
  }
  func.func @transform_0(%arg0: i32) -> (i32, i32, i32) {
    %c0_i32 = arith.constant 0 : i32
    %c0_i32_0 = arith.constant 0 : i32
    %c0_i32_1 = arith.constant 0 : i32
    return %arg0, %c0_i32, %c0_i32_0 : i32, i32, i32
  }
  func.func @transform_1(%arg0: i32) -> (i32, i32, i32) {
    %c0_i32 = arith.constant 0 : i32
    %c0_i32_0 = arith.constant 0 : i32
    %c0_i32_1 = arith.constant 0 : i32
    %c0_i32_2 = arith.constant 0 : i32
    return %c0_i32, %c0_i32_0, %c0_i32_1 : i32, i32, i32
  }
  func.func @transform_2(%arg0: i32) -> (i32, i32) {
    %c0_i32 = arith.constant 0 : i32
    %c0_i32_0 = arith.constant 0 : i32
    %c0_i32_1 = arith.constant 0 : i32
    return %c0_i32, %c0_i32_0 : i32, i32
  }
  func.func @transform_3(%arg0: i32) -> (i32, i32, i32) {
    %c0_i32 = arith.constant 0 : i32
    %c0_i32_0 = arith.constant 0 : i32
    %c0_i32_1 = arith.constant 0 : i32
    %c0_i32_2 = arith.constant 0 : i32
    return %c0_i32, %c0_i32_0, %c0_i32_1 : i32, i32, i32
  }
  func.func @transform_4(%arg0: i32) -> (i32, i32, i32) {
    %c0_i32 = arith.constant 0 : i32
    %c0_i32_0 = arith.constant 0 : i32
    %c0_i32_1 = arith.constant 0 : i32
    %c0_i32_2 = arith.constant 0 : i32
    return %c0_i32, %c0_i32_0, %c0_i32_1 : i32, i32, i32
  }
  func.func @transform_5(%arg0: i32) -> (i32, i32) {
    %c0_i32 = arith.constant 0 : i32
    %c0_i32_0 = arith.constant 0 : i32
    %c0_i32_1 = arith.constant 0 : i32
    return %c0_i32, %c0_i32_0 : i32, i32
  }
  func.func @transform_6(%arg0: i32) -> (i32, i32, i32) {
    %c0_i32 = arith.constant 0 : i32
    %c0_i32_0 = arith.constant 0 : i32
    %c0_i32_1 = arith.constant 0 : i32
    %c0_i32_2 = arith.constant 0 : i32
    return %c0_i32, %c0_i32_0, %c0_i32_1 : i32, i32, i32
  }
  func.func @transform_7(%arg0: i32) -> (i32, i32, i32) {
    %c0_i32 = arith.constant 0 : i32
    %c0_i32_0 = arith.constant 0 : i32
    %c0_i32_1 = arith.constant 0 : i32
    %c0_i32_2 = arith.constant 0 : i32
    return %c0_i32, %c0_i32_0, %c0_i32_1 : i32, i32, i32
  }
  func.func @transform_8(%arg0: i32) -> (i32, i32) {
    %c0_i32 = arith.constant 0 : i32
    %c0_i32_0 = arith.constant 0 : i32
    %c0_i32_1 = arith.constant 0 : i32
    return %c0_i32, %c0_i32_0 : i32, i32
  }
  func.func @transform_9(%arg0: i32) -> (i32, i32, i32) {
    %c0_i32 = arith.constant 0 : i32
    %c0_i32_0 = arith.constant 0 : i32
    %c0_i32_1 = arith.constant 0 : i32
    return %arg0, %c0_i32, %c0_i32_0 : i32, i32, i32
  }
}

</mosaic_0001>

<llo_original>
// kernel: batched_chw.1
$region0: #{batched_chw.1}
  #allocation0 [shape = 'u32[]', space=smem, size = 0x4, offset = 0x4, fixed_abs, tag = 'smem constant byte address 0x4 - core index']
  #allocation1 [shape = 'u32[72,128]{1,0:T(1,128)}', space=vmem, size = 0x9000, scoped, tag = 'internal scratch']
  %s0 = inlined_call_operand.vmem [shape: f32[1,8,256], index: 0, kind: input, shape index: {}]
  %s1 = inlined_call_operand.hbm [shape: f32[9,8,8], index: 1, kind: input, shape index: {}]
  %s2 = inlined_call_operand.hbm [shape: f32[8,1], index: 2, kind: input, shape index: {}]
  %s3 = inlined_call_operand.hbm [shape: f32[9,256,256], index: 3, kind: input, shape index: {}]
  %s4 = inlined_call_operand.hbm [shape: f32[9,16,8], index: 4, kind: input, shape index: {}]
  %s5 = inlined_call_operand.hbm [shape: f32[16,1], index: 5, kind: input, shape index: {}]
  %s6 = inlined_call_operand.hbm [shape: f32[9,256,128], index: 6, kind: input, shape index: {}]
  %s7 = inlined_call_operand.hbm [shape: f32[16,128,128], index: 7, kind: input, shape index: {}]
  %s8 = inlined_call_operand.hbm [shape: f32[1,128], index: 8, kind: input, shape index: {}]
  %s9 = inlined_call_operand.vmem [shape: f32[1,1,128], index: 9, kind: output, shape index: {}]
  %s10 = sld [smem:[#allocation0]]
  $region78: #{batched_chw.1} parent=0
    _
  %s12 = ssub.s32 1, %s10
  %s13 = scalar_select 0, %s12, %s10
  $region1: #{batched_chw.1} parent=0
    #allocation2 [shape = 'u8[36864]{0}', space=vmem, size = 0x9000, scoped, tag = 'input window, operand 1, single buffered']
    #allocation3 [shape = 's32[1]{0}', space=sflag, size = 0x4, scoped, tag = 'scoped memory for batched_chw.1']
    #allocation4 [shape = 'u8[4096]{0}', space=vmem, size = 0x1000, scoped, tag = 'input window, operand 2, single buffered']
    #allocation5 [shape = 's32[1]{0}', space=sflag, size = 0x4, scoped, tag = 'scoped memory for batched_chw.1']
    #allocation6 [shape = 'u8[2359296]{0}', space=vmem, size = 0x240000, scoped, tag = 'input window, operand 3, single buffered']
    #allocation7 [shape = 'u8[73728]{0}', space=vmem, size = 0x12000, scoped, tag = 'input window, operand 4, single buffered']
    #allocation8 [shape = 's32[1]{0}', space=sflag, size = 0x4, scoped, tag = 'scoped memory for batched_chw.1']
    #allocation9 [shape = 'u8[8192]{0}', space=vmem, size = 0x2000, scoped, tag = 'input window, operand 5, single buffered']
    #allocation10 [shape = 'u8[1179648]{0}', space=vmem, size = 0x120000, scoped, tag = 'input window, operand 6, single buffered']
    #allocation11 [shape = 's32[1]{0}', space=sflag, size = 0x4, scoped, tag = 'scoped memory for batched_chw.1']
    #allocation12 [shape = 'u8[1048576]{0}', space=vmem, size = 0x100000, scoped, tag = 'input window, operand 7, single buffered']
    #allocation13 [shape = 'u8[512]{0}', space=vmem, size = 0x400, scoped, tag = 'input window, operand 8, single buffered']
    #allocation14 [shape = 's32[1]{0}', space=sflag, size = 0x4, scoped, tag = 'scoped memory for batched_chw.1']
    %14 = vsyncpa [#allocation3], 0
    %15 = vsyncpa [#allocation5], 0
    %16 = vsyncpa [#allocation8], 0
    %17 = vsyncpa [#allocation11], 0
    %18 = vsyncpa [#allocation14], 0
    // Predicated region
    $region2: #{batched_chw.1} parent=1 // pred_check
      _
    $region3: #{batched_chw.1} parent=1 // pred_check_branch
      %20 = sbr.rel (0) target = $region5
    $region4: #{batched_chw.1} parent=1 // pred_region
      _
    $region5: #{batched_chw.1} parent=1 // pred_fallthru
      _
    // Predicated region
    $region6: #{batched_chw.1} parent=1 // pred_check
      _
    $region7: #{batched_chw.1} parent=1 // pred_check_branch
      %22 = sbr.rel (0) target = $region9
    $region8: #{batched_chw.1} parent=1 // pred_region
      %24 = vsyncadd [#allocation3], 0
      %s25 = sshll.u32 %s1, 4
      %s26 = int_to_ptr.hbm [resolvable:$true] %s25
      %s27 = sshll.u32 [#allocation2], 4
      %s28 = int_to_ptr.vmem [resolvable:$true] %s27
      %33 = dma.hbm_to_vmem [thread:$0]  %s26, 1152, %s28, [#allocation3], 128, 128, 8
    $region9: #{batched_chw.1} parent=1 // pred_fallthru
      _
    // Predicated region
    $region10: #{batched_chw.1} parent=1 // pred_check
      _
    $region11: #{batched_chw.1} parent=1 // pred_check_branch
      %35 = sbr.rel (0) target = $region13
    $region12: #{batched_chw.1} parent=1 // pred_region
      %37 = vsyncadd [#allocation5], 0
      %s39 = sshll.u32 %s2, 4
      %s40 = int_to_ptr.hbm [resolvable:$true] %s39
      %s41 = sshll.u32 [#allocation4], 4
      %s42 = int_to_ptr.vmem [resolvable:$true] %s41
      %44 = dma.hbm_to_vmem [thread:$0]  %s40, 128, %s42, [#allocation5]
    $region13: #{batched_chw.1} parent=1 // pred_fallthru
      _
    // Predicated region
    $region14: #{batched_chw.1} parent=1 // pred_check
      _
    $region15: #{batched_chw.1} parent=1 // pred_check_branch
      %46 = sbr.rel (0) target = $region17
    $region16: #{batched_chw.1} parent=1 // pred_region
      %48 = vsyncadd [#allocation5], 0
      %s49 = sshll.u32 %s3, 4
      %s50 = int_to_ptr.hbm [resolvable:$true] %s49
      %s51 = sshll.u32 [#allocation6], 4
      %s52 = int_to_ptr.vmem [resolvable:$true] %s51
      %57 = dma.hbm_to_vmem [thread:$0]  %s50, 73728, %s52, [#allocation5], 256, 256, 16
    $region17: #{batched_chw.1} parent=1 // pred_fallthru
      _
    // Predicated region
    $region18: #{batched_chw.1} parent=1 // pred_check
      _
    $region19: #{batched_chw.1} parent=1 // pred_check_branch
      %59 = sbr.rel (0) target = $region21
    $region20: #{batched_chw.1} parent=1 // pred_region
      %61 = vsyncadd [#allocation8], 0
      %s62 = sshll.u32 %s4, 4
      %s63 = int_to_ptr.hbm [resolvable:$true] %s62
      %s64 = sshll.u32 [#allocation7], 4
      %s65 = int_to_ptr.vmem [resolvable:$true] %s64
      %70 = dma.hbm_to_vmem [thread:$0]  %s63, 2304, %s65, [#allocation8], 128, 128, 8
    $region21: #{batched_chw.1} parent=1 // pred_fallthru
      _
    // Predicated region
    $region22: #{batched_chw.1} parent=1 // pred_check
      _
    $region23: #{batched_chw.1} parent=1 // pred_check_branch
      %72 = sbr.rel (0) target = $region25
    $region24: #{batched_chw.1} parent=1 // pred_region
      %74 = vsyncadd [#allocation8], 0
      %s75 = sshll.u32 %s5, 4
      %s76 = int_to_ptr.hbm [resolvable:$true] %s75
      %s77 = sshll.u32 [#allocation9], 4
      %s78 = int_to_ptr.vmem [resolvable:$true] %s77
      %83 = dma.hbm_to_vmem [thread:$0]  %s76, 256, %s78, [#allocation8], 128, 128, 8
    $region25: #{batched_chw.1} parent=1 // pred_fallthru
      _
    // Predicated region
    $region26: #{batched_chw.1} parent=1 // pred_check
      _
    $region27: #{batched_chw.1} parent=1 // pred_check_branch
      %85 = sbr.rel (0) target = $region29
    $region28: #{batched_chw.1} parent=1 // pred_region
      %87 = vsyncadd [#allocation11], 0
      %s88 = sshll.u32 %s6, 4
      %s89 = int_to_ptr.hbm [resolvable:$true] %s88
      %s90 = sshll.u32 [#allocation10], 4
      %s91 = int_to_ptr.vmem [resolvable:$true] %s90
      %96 = dma.hbm_to_vmem [thread:$0]  %s89, 36864, %s91, [#allocation11], 128, 128, 8
    $region29: #{batched_chw.1} parent=1 // pred_fallthru
      _
    // Predicated region
    $region30: #{batched_chw.1} parent=1 // pred_check
      _
    $region31: #{batched_chw.1} parent=1 // pred_check_branch
      %98 = sbr.rel (0) target = $region33
    $region32: #{batched_chw.1} parent=1 // pred_region
      %100 = vsyncadd [#allocation11], 0
      %s101 = sshll.u32 %s7, 4
      %s102 = int_to_ptr.hbm [resolvable:$true] %s101
      %s103 = sshll.u32 [#allocation12], 4
      %s104 = int_to_ptr.vmem [resolvable:$true] %s103
      %109 = dma.hbm_to_vmem [thread:$0]  %s102, 32768, %s104, [#allocation11], 128, 128, 8
    $region33: #{batched_chw.1} parent=1 // pred_fallthru
      _
    // Predicated region
    $region34: #{batched_chw.1} parent=1 // pred_check
      _
    $region35: #{batched_chw.1} parent=1 // pred_check_branch
      %111 = sbr.rel (0) target = $region37
    $region36: #{batched_chw.1} parent=1 // pred_region
      %113 = vsyncadd [#allocation14], 0
      %s115 = sshll.u32 %s8, 4
      %s116 = int_to_ptr.hbm [resolvable:$true] %s115
      %s117 = sshll.u32 [#allocation13], 4
      %s118 = int_to_ptr.vmem [resolvable:$true] %s117
      %120 = dma.hbm_to_vmem [thread:$0]  %s116, 16, %s118, [#allocation14]
    $region37: #{batched_chw.1} parent=1 // pred_fallthru
      _
    // Predicated region
    $region38: #{batched_chw.1} parent=1 // pred_check
      _
    $region39: #{batched_chw.1} parent=1 // pred_check_branch
      %122 = sbr.rel (0) target = $region41
    $region40: #{batched_chw.1} parent=1 // pred_region
      %124 = dma.done [#allocation3], 1152
    $region41: #{batched_chw.1} parent=1 // pred_fallthru
      _
    // Predicated region
    $region42: #{batched_chw.1} parent=1 // pred_check
      _
    $region43: #{batched_chw.1} parent=1 // pred_check_branch
      %126 = sbr.rel (0) target = $region45
    $region44: #{batched_chw.1} parent=1 // pred_region
      %128 = dma.done [#allocation5], 128
    $region45: #{batched_chw.1} parent=1 // pred_fallthru
      _
    // Predicated region
    $region46: #{batched_chw.1} parent=1 // pred_check
      _
    $region47: #{batched_chw.1} parent=1 // pred_check_branch
      %130 = sbr.rel (0) target = $region49
    $region48: #{batched_chw.1} parent=1 // pred_region
      %132 = dma.done [#allocation5], 73728
    $region49: #{batched_chw.1} parent=1 // pred_fallthru
      _
    // Predicated region
    $region50: #{batched_chw.1} parent=1 // pred_check
      _
    $region51: #{batched_chw.1} parent=1 // pred_check_branch
      %134 = sbr.rel (0) target = $region53
    $region52: #{batched_chw.1} parent=1 // pred_region
      %136 = dma.done [#allocation8], 2304
    $region53: #{batched_chw.1} parent=1 // pred_fallthru
      _
    // Predicated region
    $region54: #{batched_chw.1} parent=1 // pred_check
      _
    $region55: #{batched_chw.1} parent=1 // pred_check_branch
      %138 = sbr.rel (0) target = $region57
    $region56: #{batched_chw.1} parent=1 // pred_region
      %140 = dma.done [#allocation8], 256
    $region57: #{batched_chw.1} parent=1 // pred_fallthru
      _
    // Predicated region
    $region58: #{batched_chw.1} parent=1 // pred_check
      _
    $region59: #{batched_chw.1} parent=1 // pred_check_branch
      %142 = sbr.rel (0) target = $region61
    $region60: #{batched_chw.1} parent=1 // pred_region
      %144 = dma.done [#allocation11], 36864
    $region61: #{batched_chw.1} parent=1 // pred_fallthru
      _
    // Predicated region
    $region62: #{batched_chw.1} parent=1 // pred_check
      _
    $region63: #{batched_chw.1} parent=1 // pred_check_branch
      %146 = sbr.rel (0) target = $region65
    $region64: #{batched_chw.1} parent=1 // pred_region
      %148 = dma.done [#allocation11], 32768
    $region65: #{batched_chw.1} parent=1 // pred_fallthru
      _
    // Predicated region
    $region66: #{batched_chw.1} parent=1 // pred_check
      _
    $region67: #{batched_chw.1} parent=1 // pred_check_branch
      %150 = sbr.rel (0) target = $region69
    $region68: #{batched_chw.1} parent=1 // pred_region
      %152 = dma.done [#allocation14], 16
    $region69: #{batched_chw.1} parent=1 // pred_fallthru
      _
    %v153 = vld [vmem:[%s0] sm:$0xff]
    %v154 = vld [vmem:[%s0 + $0x8] sm:$0xff]
    %v155 = vld [vmem:[#allocation6] sm:$0xff]
    %v156 = vld [vmem:[#allocation6 + $0x8] sm:$0xff]
    %v157 = vld [vmem:[#allocation6 + $0x10] sm:$0xff]
    %v158 = vld [vmem:[#allocation6 + $0x18] sm:$0xff]
    %v159 = vld [vmem:[#allocation6 + $0x20] sm:$0xff]
    %v160 = vld [vmem:[#allocation6 + $0x28] sm:$0xff]
    %v161 = vld [vmem:[#allocation6 + $0x30] sm:$0xff]
    %v162 = vld [vmem:[#allocation6 + $0x38] sm:$0xff]
    %v163 = vld [vmem:[#allocation6 + $0x40] sm:$0xff]
    %v164 = vld [vmem:[#allocation6 + $0x48] sm:$0xff]
    %v165 = vld [vmem:[#allocation6 + $0x50] sm:$0xff]
    %v166 = vld [vmem:[#allocation6 + $0x58] sm:$0xff]
    %v167 = vld [vmem:[#allocation6 + $0x60] sm:$0xff]
    %v168 = vld [vmem:[#allocation6 + $0x68] sm:$0xff]
    %v169 = vld [vmem:[#allocation6 + $0x70] sm:$0xff]
    %v170 = vld [vmem:[#allocation6 + $0x78] sm:$0xff]
    %v171 = vld [vmem:[#allocation6 + $0x80] sm:$0xff]
    %v172 = vld [vmem:[#allocation6 + $0x88] sm:$0xff]
    %v173 = vld [vmem:[#allocation6 + $0x90] sm:$0xff]
    %v174 = vld [vmem:[#allocation6 + $0x98] sm:$0xff]
    %v175 = vld [vmem:[#allocation6 + $0xa0] sm:$0xff]
    %v176 = vld [vmem:[#allocation6 + $0xa8] sm:$0xff]
    %v177 = vld [vmem:[#allocation6 + $0xb0] sm:$0xff]
    %v178 = vld [vmem:[#allocation6 + $0xb8] sm:$0xff]
    %v179 = vld [vmem:[#allocation6 + $0xc0] sm:$0xff]
    %v180 = vld [vmem:[#allocation6 + $0xc8] sm:$0xff]
    %v181 = vld [vmem:[#allocation6 + $0xd0] sm:$0xff]
    %v182 = vld [vmem:[#allocation6 + $0xd8] sm:$0xff]
    %v183 = vld [vmem:[#allocation6 + $0xe0] sm:$0xff]
    %v184 = vld [vmem:[#allocation6 + $0xe8] sm:$0xff]
    %v185 = vld [vmem:[#allocation6 + $0xf0] sm:$0xff]
    %v186 = vld [vmem:[#allocation6 + $0xf8] sm:$0xff]
    %v187 = vld [vmem:[#allocation6 + $0x100] sm:$0xff]
    %v188 = vld [vmem:[#allocation6 + $0x108] sm:$0xff]
    %v189 = vld [vmem:[#allocation6 + $0x110] sm:$0xff]
    %v190 = vld [vmem:[#allocation6 + $0x118] sm:$0xff]
    %v191 = vld [vmem:[#allocation6 + $0x120] sm:$0xff]
    %v192 = vld [vmem:[#allocation6 + $0x128] sm:$0xff]
    %v193 = vld [vmem:[#allocation6 + $0x130] sm:$0xff]
    %v194 = vld [vmem:[#allocation6 + $0x138] sm:$0xff]
    %v195 = vld [vmem:[#allocation6 + $0x140] sm:$0xff]
    %v196 = vld [vmem:[#allocation6 + $0x148] sm:$0xff]
    %v197 = vld [vmem:[#allocation6 + $0x150] sm:$0xff]
    %v198 = vld [vmem:[#allocation6 + $0x158] sm:$0xff]
    %v199 = vld [vmem:[#allocation6 + $0x160] sm:$0xff]
    %v200 = vld [vmem:[#allocation6 + $0x168] sm:$0xff]
    %v201 = vld [vmem:[#allocation6 + $0x170] sm:$0xff]
    %v202 = vld [vmem:[#allocation6 + $0x178] sm:$0xff]
    %v203 = vld [vmem:[#allocation6 + $0x180] sm:$0xff]
    %v204 = vld [vmem:[#allocation6 + $0x188] sm:$0xff]
    %v205 = vld [vmem:[#allocation6 + $0x190] sm:$0xff]
    %v206 = vld [vmem:[#allocation6 + $0x198] sm:$0xff]
    %v207 = vld [vmem:[#allocation6 + $0x1a0] sm:$0xff]
    %v208 = vld [vmem:[#allocation6 + $0x1a8] sm:$0xff]
    %v209 = vld [vmem:[#allocation6 + $0x1b0] sm:$0xff]
    %v210 = vld [vmem:[#allocation6 + $0x1b8] sm:$0xff]
    %v211 = vld [vmem:[#allocation6 + $0x1c0] sm:$0xff]
    %v212 = vld [vmem:[#allocation6 + $0x1c8] sm:$0xff]
    %v213 = vld [vmem:[#allocation6 + $0x1d0] sm:$0xff]
    %v214 = vld [vmem:[#allocation6 + $0x1d8] sm:$0xff]
    %v215 = vld [vmem:[#allocation6 + $0x1e0] sm:$0xff]
    %v216 = vld [vmem:[#allocation6 + $0x1e8] sm:$0xff]
    %v217 = vld [vmem:[#allocation6 + $0x1f0] sm:$0xff]
    %v218 = vld [vmem:[#allocation6 + $0x1f8] sm:$0xff]
    %219 = vmatpush.msra.mxu0 %v185
    %220 = vmatpush.msra.mxu0 %v183
    %221 = vmatpush.msra.mxu0 %v181
    %222 = vmatpush.msra.mxu0 %v179
    %223 = vmatpush.msra.mxu0 %v177
    %224 = vmatpush.msra.mxu0 %v175
    %225 = vmatpush.msra.mxu0 %v173
    %226 = vmatpush.msra.mxu0 %v171
    %227 = vmatpush.msra.mxu0 %v169
    %228 = vmatpush.msra.mxu0 %v167
    %229 = vmatpush.msra.mxu0 %v165
    %230 = vmatpush.msra.mxu0 %v163
    %231 = vmatpush.msra.mxu0 %v161
    %232 = vmatpush.msra.mxu0 %v159
    %233 = vmatpush.msra.mxu0 %v157
    %234 = vmatpush.msra.mxu0 %v155
    %235 = vmatmul.f32.gmra.mxu0 %v153
    %v236 = vpop.f32.mrf.mxu0
    %v237 = vadd.f32 0.0, %v236
    %238 = vdwg.mxu0
    %239 = vmatpush.msra.mxu0 %v217
    %240 = vmatpush.msra.mxu0 %v215
    %241 = vmatpush.msra.mxu0 %v213
    %242 = vmatpush.msra.mxu0 %v211
    %243 = vmatpush.msra.mxu0 %v209
    %244 = vmatpush.msra.mxu0 %v207
    %245 = vmatpush.msra.mxu0 %v205
    %246 = vmatpush.msra.mxu0 %v203
    %247 = vmatpush.msra.mxu0 %v201
    %248 = vmatpush.msra.mxu0 %v199
    %249 = vmatpush.msra.mxu0 %v197
    %250 = vmatpush.msra.mxu0 %v195
    %251 = vmatpush.msra.mxu0 %v193
    %252 = vmatpush.msra.mxu0 %v191
    %253 = vmatpush.msra.mxu0 %v189
    %254 = vmatpush.msra.mxu0 %v187
    %255 = vmatmul.f32.gmra.mxu0 %v154
    %v256 = vpop.f32.mrf.mxu0
    %v257 = vadd.f32 %v237, %v256
    %258 = vdwg.mxu0
    %259 = vmatpush.msra.mxu0 %v186
    %260 = vmatpush.msra.mxu0 %v184
    %261 = vmatpush.msra.mxu0 %v182
    %262 = vmatpush.msra.mxu0 %v180
    %263 = vmatpush.msra.mxu0 %v178
    %264 = vmatpush.msra.mxu0 %v176
    %265 = vmatpush.msra.mxu0 %v174
    %266 = vmatpush.msra.mxu0 %v172
    %267 = vmatpush.msra.mxu0 %v170
    %268 = vmatpush.msra.mxu0 %v168
    %269 = vmatpush.msra.mxu0 %v166
    %270 = vmatpush.msra.mxu0 %v164
    %271 = vmatpush.msra.mxu0 %v162
    %272 = vmatpush.msra.mxu0 %v160
    %273 = vmatpush.msra.mxu0 %v158
    %274 = vmatpush.msra.mxu0 %v156
    %275 = vmatmul.f32.gmra.mxu0 %v153
    %v276 = vpop.f32.mrf.mxu0
    %v277 = vadd.f32 0.0, %v276
    %278 = vdwg.mxu0
    %279 = vmatpush.msra.mxu0 %v218
    %280 = vmatpush.msra.mxu0 %v216
    %281 = vmatpush.msra.mxu0 %v214
    %282 = vmatpush.msra.mxu0 %v212
    %283 = vmatpush.msra.mxu0 %v210
    %284 = vmatpush.msra.mxu0 %v208
    %285 = vmatpush.msra.mxu0 %v206
    %286 = vmatpush.msra.mxu0 %v204
    %287 = vmatpush.msra.mxu0 %v202
    %288 = vmatpush.msra.mxu0 %v200
    %289 = vmatpush.msra.mxu0 %v198
    %290 = vmatpush.msra.mxu0 %v196
    %291 = vmatpush.msra.mxu0 %v194
    %292 = vmatpush.msra.mxu0 %v192
    %293 = vmatpush.msra.mxu0 %v190
    %294 = vmatpush.msra.mxu0 %v188
    %295 = vmatmul.f32.gmra.mxu0 %v154
    %v296 = vpop.f32.mrf.mxu0
    %v297 = vadd.f32 %v277, %v296
    %298 = vdwg.mxu0
    %v299 = vld [vmem:[#allocation2] sm:$0xff]
    %s300 = scalar_lea.vmem [#allocation6], 512
    %v301 = vld [vmem:[%s300] sm:$0xff]
    %v302 = vld [vmem:[%s300 + $0x8] sm:$0xff]
    %v303 = vld [vmem:[%s300 + $0x10] sm:$0xff]
    %v304 = vld [vmem:[%s300 + $0x18] sm:$0xff]
    %v305 = vld [vmem:[%s300 + $0x20] sm:$0xff]
    %v306 = vld [vmem:[%s300 + $0x28] sm:$0xff]
    %v307 = vld [vmem:[%s300 + $0x30] sm:$0xff]
    %v308 = vld [vmem:[%s300 + $0x38] sm:$0xff]
    %v309 = vld [vmem:[%s300 + $0x40] sm:$0xff]
    %v310 = vld [vmem:[%s300 + $0x48] sm:$0xff]
    %v311 = vld [vmem:[%s300 + $0x50] sm:$0xff]
    %v312 = vld [vmem:[%s300 + $0x58] sm:$0xff]
    %v313 = vld [vmem:[%s300 + $0x60] sm:$0xff]
    %v314 = vld [vmem:[%s300 + $0x68] sm:$0xff]
    %v315 = vld [vmem:[%s300 + $0x70] sm:$0xff]
    %v316 = vld [vmem:[%s300 + $0x78] sm:$0xff]
    %v317 = vld [vmem:[%s300 + $0x80] sm:$0xff]
    %v318 = vld [vmem:[%s300 + $0x88] sm:$0xff]
    %v319 = vld [vmem:[%s300 + $0x90] sm:$0xff]
    %v320 = vld [vmem:[%s300 + $0x98] sm:$0xff]
    %v321 = vld [vmem:[%s300 + $0xa0] sm:$0xff]
    %v322 = vld [vmem:[%s300 + $0xa8] sm:$0xff]
    %v323 = vld [vmem:[%s300 + $0xb0] sm:$0xff]
    %v324 = vld [vmem:[%s300 + $0xb8] sm:$0xff]
    %v325 = vld [vmem:[%s300 + $0xc0] sm:$0xff]
    %v326 = vld [vmem:[%s300 + $0xc8] sm:$0xff]
    %v327 = vld [vmem:[%s300 + $0xd0] sm:$0xff]
    %v328 = vld [vmem:[%s300 + $0xd8] sm:$0xff]
    %v329 = vld [vmem:[%s300 + $0xe0] sm:$0xff]
    %v330 = vld [vmem:[%s300 + $0xe8] sm:$0xff]
    %v331 = vld [vmem:[%s300 + $0xf0] sm:$0xff]
    %v332 = vld [vmem:[%s300 + $0xf8] sm:$0xff]
    %v333 = vld [vmem:[%s300 + $0x100] sm:$0xff]
    %v334 = vld [vmem:[%s300 + $0x108] sm:$0xff]
    %v335 = vld [vmem:[%s300 + $0x110] sm:$0xff]
    %v336 = vld [vmem:[%s300 + $0x118] sm:$0xff]
    %v337 = vld [vmem:[%s300 + $0x120] sm:$0xff]
    %v338 = vld [vmem:[%s300 + $0x128] sm:$0xff]
    %v339 = vld [vmem:[%s300 + $0x130] sm:$0xff]
    %v340 = vld [vmem:[%s300 + $0x138] sm:$0xff]
    %v341 = vld [vmem:[%s300 + $0x140] sm:$0xff]
    %v342 = vld [vmem:[%s300 + $0x148] sm:$0xff]
    %v343 = vld [vmem:[%s300 + $0x150] sm:$0xff]
    %v344 = vld [vmem:[%s300 + $0x158] sm:$0xff]
    %v345 = vld [vmem:[%s300 + $0x160] sm:$0xff]
    %v346 = vld [vmem:[%s300 + $0x168] sm:$0xff]
    %v347 = vld [vmem:[%s300 + $0x170] sm:$0xff]
    %v348 = vld [vmem:[%s300 + $0x178] sm:$0xff]
    %v349 = vld [vmem:[%s300 + $0x180] sm:$0xff]
    %v350 = vld [vmem:[%s300 + $0x188] sm:$0xff]
    %v351 = vld [vmem:[%s300 + $0x190] sm:$0xff]
    %v352 = vld [vmem:[%s300 + $0x198] sm:$0xff]
    %v353 = vld [vmem:[%s300 + $0x1a0] sm:$0xff]
    %v354 = vld [vmem:[%s300 + $0x1a8] sm:$0xff]
    %v355 = vld [vmem:[%s300 + $0x1b0] sm:$0xff]
    %v356 = vld [vmem:[%s300 + $0x1b8] sm:$0xff]
    %v357 = vld [vmem:[%s300 + $0x1c0] sm:$0xff]
    %v358 = vld [vmem:[%s300 + $0x1c8] sm:$0xff]
    %v359 = vld [vmem:[%s300 + $0x1d0] sm:$0xff]
    %v360 = vld [vmem:[%s300 + $0x1d8] sm:$0xff]
    %v361 = vld [vmem:[%s300 + $0x1e0] sm:$0xff]
    %v362 = vld [vmem:[%s300 + $0x1e8] sm:$0xff]
    %v363 = vld [vmem:[%s300 + $0x1f0] sm:$0xff]
    %v364 = vld [vmem:[%s300 + $0x1f8] sm:$0xff]
    %365 = vmatpush.msra.mxu0 %v331
    %366 = vmatpush.msra.mxu0 %v329
    %367 = vmatpush.msra.mxu0 %v327
    %368 = vmatpush.msra.mxu0 %v325
    %369 = vmatpush.msra.mxu0 %v323
    %370 = vmatpush.msra.mxu0 %v321
    %371 = vmatpush.msra.mxu0 %v319
    %372 = vmatpush.msra.mxu0 %v317
    %373 = vmatpush.msra.mxu0 %v315
    %374 = vmatpush.msra.mxu0 %v313
    %375 = vmatpush.msra.mxu0 %v311
    %376 = vmatpush.msra.mxu0 %v309
    %377 = vmatpush.msra.mxu0 %v307
    %378 = vmatpush.msra.mxu0 %v305
    %379 = vmatpush.msra.mxu0 %v303
    %380 = vmatpush.msra.mxu0 %v301
    %381 = vmatmul.f32.gmra.mxu0 %v153
    %v382 = vpop.f32.mrf.mxu0
    %v383 = vadd.f32 0.0, %v382
    %384 = vdwg.mxu0
    %385 = vmatpush.msra.mxu0 %v363
    %386 = vmatpush.msra.mxu0 %v361
    %387 = vmatpush.msra.mxu0 %v359
    %388 = vmatpush.msra.mxu0 %v357
    %389 = vmatpush.msra.mxu0 %v355
    %390 = vmatpush.msra.mxu0 %v353
    %391 = vmatpush.msra.mxu0 %v351
    %392 = vmatpush.msra.mxu0 %v349
    %393 = vmatpush.msra.mxu0 %v347
    %394 = vmatpush.msra.mxu0 %v345
    %395 = vmatpush.msra.mxu0 %v343
    %396 = vmatpush.msra.mxu0 %v341
    %397 = vmatpush.msra.mxu0 %v339
    %398 = vmatpush.msra.mxu0 %v337
    %399 = vmatpush.msra.mxu0 %v335
    %400 = vmatpush.msra.mxu0 %v333
    %401 = vmatmul.f32.gmra.mxu0 %v154
    %v402 = vpop.f32.mrf.mxu0
    %v403 = vadd.f32 %v383, %v402
    %404 = vdwg.mxu0
    %405 = vmatpush.msra.mxu0 %v332
    %406 = vmatpush.msra.mxu0 %v330
    %407 = vmatpush.msra.mxu0 %v328
    %408 = vmatpush.msra.mxu0 %v326
    %409 = vmatpush.msra.mxu0 %v324
    %410 = vmatpush.msra.mxu0 %v322
    %411 = vmatpush.msra.mxu0 %v320
    %412 = vmatpush.msra.mxu0 %v318
    %413 = vmatpush.msra.mxu0 %v316
    %414 = vmatpush.msra.mxu0 %v314
    %415 = vmatpush.msra.mxu0 %v312
    %416 = vmatpush.msra.mxu0 %v310
    %417 = vmatpush.msra.mxu0 %v308
    %418 = vmatpush.msra.mxu0 %v306
    %419 = vmatpush.msra.mxu0 %v304
    %420 = vmatpush.msra.mxu0 %v302
    %421 = vmatmul.f32.gmra.mxu0 %v153
    %v422 = vpop.f32.mrf.mxu0
    %v423 = vadd.f32 0.0, %v422
    %424 = vdwg.mxu0
    %425 = vmatpush.msra.mxu0 %v364
    %426 = vmatpush.msra.mxu0 %v362
    %427 = vmatpush.msra.mxu0 %v360
    %428 = vmatpush.msra.mxu0 %v358
    %429 = vmatpush.msra.mxu0 %v356
    %430 = vmatpush.msra.mxu0 %v354
    %431 = vmatpush.msra.mxu0 %v352
    %432 = vmatpush.msra.mxu0 %v350
    %433 = vmatpush.msra.mxu0 %v348
    %434 = vmatpush.msra.mxu0 %v346
    %435 = vmatpush.msra.mxu0 %v344
    %436 = vmatpush.msra.mxu0 %v342
    %437 = vmatpush.msra.mxu0 %v340
    %438 = vmatpush.msra.mxu0 %v338
    %439 = vmatpush.msra.mxu0 %v336
    %440 = vmatpush.msra.mxu0 %v334
    %441 = vmatmul.f32.gmra.mxu0 %v154
    %v442 = vpop.f32.mrf.mxu0
    %v443 = vadd.f32 %v423, %v442
    %444 = vdwg.mxu0
    %s445 = scalar_lea.vmem [#allocation2], 8
    %v446 = vld [vmem:[%s445] sm:$0xff]
    %vm447 = vcmask 64512
    %v449 = vsel %vm447, %v446, 0
    %451 = vmatpush.msra.mxu0 0.0
    %452 = vmatpush.msra.mxu0 0.0
    %453 = vmatpush.msra.mxu0 0.0
    %454 = vmatpush.msra.mxu0 0.0
    %455 = vmatpush.msra.mxu0 0.0
    %456 = vmatpush.msra.mxu0 0.0
    %457 = vmatpush.msra.mxu0 0.0
    %458 = vmatpush.msra.mxu0 0.0
    %459 = vmatpush.msra.mxu0 0.0
    %460 = vmatpush.msra.mxu0 0.0
    %461 = vmatpush.msra.mxu0 0.0
    %462 = vmatpush.msra.mxu0 0.0
    %463 = vmatpush.msra.mxu0 0.0
    %464 = vmatpush.msra.mxu0 0.0
    %465 = vmatpush.msra.mxu0 0.0
    %466 = vmatpush.msra.mxu0 %v403
    %467 = vmatmul.f32.gmra.mxu0 %v449
    %v468 = vpop.f32.mrf.mxu0
    %v469 = vadd.f32 0.0, %v468
    %470 = vdwg.mxu0
    %471 = vmatpush.msra.mxu0 0.0
    %472 = vmatpush.msra.mxu0 0.0
    %473 = vmatpush.msra.mxu0 0.0
    %474 = vmatpush.msra.mxu0 0.0
    %475 = vmatpush.msra.mxu0 0.0
    %476 = vmatpush.msra.mxu0 0.0
    %477 = vmatpush.msra.mxu0 0.0
    %478 = vmatpush.msra.mxu0 0.0
    %479 = vmatpush.msra.mxu0 0.0
    %480 = vmatpush.msra.mxu0 0.0
    %481 = vmatpush.msra.mxu0 0.0
    %482 = vmatpush.msra.mxu0 0.0
    %483 = vmatpush.msra.mxu0 0.0
    %484 = vmatpush.msra.mxu0 0.0
    %485 = vmatpush.msra.mxu0 0.0
    %486 = vmatpush.msra.mxu0 %v443
    %487 = vmatmul.f32.gmra.mxu0 %v449
    %v488 = vpop.f32.mrf.mxu0
    %v489 = vadd.f32 0.0, %v488
    %490 = vdwg.mxu0
    %v492 = vsel %vm447, %v299, 0
    %494 = vmatpush.msra.mxu0 0.0
    %495 = vmatpush.msra.mxu0 0.0
    %496 = vmatpush.msra.mxu0 0.0
    %497 = vmatpush.msra.mxu0 0.0
    %498 = vmatpush.msra.mxu0 0.0
    %499 = vmatpush.msra.mxu0 0.0
    %500 = vmatpush.msra.mxu0 0.0
    %501 = vmatpush.msra.mxu0 0.0
    %502 = vmatpush.msra.mxu0 0.0
    %503 = vmatpush.msra.mxu0 0.0
    %504 = vmatpush.msra.mxu0 0.0
    %505 = vmatpush.msra.mxu0 0.0
    %506 = vmatpush.msra.mxu0 0.0
    %507 = vmatpush.msra.mxu0 0.0
    %508 = vmatpush.msra.mxu0 0.0
    %509 = vmatpush.msra.mxu0 %v257
    %510 = vmatmul.f32.gmra.mxu0 %v492
    %v511 = vpop.f32.mrf.mxu0
    %v512 = vadd.f32 %v469, %v511
    %513 = vdwg.mxu0
    %514 = vmatpush.msra.mxu0 0.0
    %515 = vmatpush.msra.mxu0 0.0
    %516 = vmatpush.msra.mxu0 0.0
    %517 = vmatpush.msra.mxu0 0.0
    %518 = vmatpush.msra.mxu0 0.0
    %519 = vmatpush.msra.mxu0 0.0
    %520 = vmatpush.msra.mxu0 0.0
    %521 = vmatpush.msra.mxu0 0.0
    %522 = vmatpush.msra.mxu0 0.0
    %523 = vmatpush.msra.mxu0 0.0
    %524 = vmatpush.msra.mxu0 0.0
    %525 = vmatpush.msra.mxu0 0.0
    %526 = vmatpush.msra.mxu0 0.0
    %527 = vmatpush.msra.mxu0 0.0
    %528 = vmatpush.msra.mxu0 0.0
    %529 = vmatpush.msra.mxu0 %v297
    %530 = vmatmul.f32.gmra.mxu0 %v492
    %v531 = vpop.f32.mrf.mxu0
    %v532 = vadd.f32 %v489, %v531
    %533 = vdwg.mxu0
    %s534 = scalar_lea.vmem [#allocation6], 1024
    %v535 = vld [vmem:[%s534] sm:$0xff]
    %v536 = vld [vmem:[%s534 + $0x8] sm:$0xff]
    %v537 = vld [vmem:[%s534 + $0x10] sm:$0xff]
    %v538 = vld [vmem:[%s534 + $0x18] sm:$0xff]
    %v539 = vld [vmem:[%s534 + $0x20] sm:$0xff]
    %v540 = vld [vmem:[%s534 + $0x28] sm:$0xff]
    %v541 = vld [vmem:[%s534 + $0x30] sm:$0xff]
    %v542 = vld [vmem:[%s534 + $0x38] sm:$0xff]
    %v543 = vld [vmem:[%s534 + $0x40] sm:$0xff]
    %v544 = vld [vmem:[%s534 + $0x48] sm:$0xff]
    %v545 = vld [vmem:[%s534 + $0x50] sm:$0xff]
    %v546 = vld [vmem:[%s534 + $0x58] sm:$0xff]
    %v547 = vld [vmem:[%s534 + $0x60] sm:$0xff]
    %v548 = vld [vmem:[%s534 + $0x68] sm:$0xff]
    %v549 = vld [vmem:[%s534 + $0x70] sm:$0xff]
    %v550 = vld [vmem:[%s534 + $0x78] sm:$0xff]
    %v551 = vld [vmem:[%s534 + $0x80] sm:$0xff]
    %v552 = vld [vmem:[%s534 + $0x88] sm:$0xff]
    %v553 = vld [vmem:[%s534 + $0x90] sm:$0xff]
    %v554 = vld [vmem:[%s534 + $0x98] sm:$0xff]
    %v555 = vld [vmem:[%s534 + $0xa0] sm:$0xff]
    %v556 = vld [vmem:[%s534 + $0xa8] sm:$0xff]
    %v557 = vld [vmem:[%s534 + $0xb0] sm:$0xff]
    %v558 = vld [vmem:[%s534 + $0xb8] sm:$0xff]
    %v559 = vld [vmem:[%s534 + $0xc0] sm:$0xff]
    %v560 = vld [vmem:[%s534 + $0xc8] sm:$0xff]
    %v561 = vld [vmem:[%s534 + $0xd0] sm:$0xff]
    %v562 = vld [vmem:[%s534 + $0xd8] sm:$0xff]
    %v563 = vld [vmem:[%s534 + $0xe0] sm:$0xff]
    %v564 = vld [vmem:[%s534 + $0xe8] sm:$0xff]
    %v565 = vld [vmem:[%s534 + $0xf0] sm:$0xff]
    %v566 = vld [vmem:[%s534 + $0xf8] sm:$0xff]
    %v567 = vld [vmem:[%s534 + $0x100] sm:$0xff]
    %v568 = vld [vmem:[%s534 + $0x108] sm:$0xff]
    %v569 = vld [vmem:[%s534 + $0x110] sm:$0xff]
    %v570 = vld [vmem:[%s534 + $0x118] sm:$0xff]
    %v571 = vld [vmem:[%s534 + $0x120] sm:$0xff]
    %v572 = vld [vmem:[%s534 + $0x128] sm:$0xff]
    %v573 = vld [vmem:[%s534 + $0x130] sm:$0xff]
    %v574 = vld [vmem:[%s534 + $0x138] sm:$0xff]
    %v575 = vld [vmem:[%s534 + $0x140] sm:$0xff]
    %v576 = vld [vmem:[%s534 + $0x148] sm:$0xff]
    %v577 = vld [vmem:[%s534 + $0x150] sm:$0xff]
    %v578 = vld [vmem:[%s534 + $0x158] sm:$0xff]
    %v579 = vld [vmem:[%s534 + $0x160] sm:$0xff]
    %v580 = vld [vmem:[%s534 + $0x168] sm:$0xff]
    %v581 = vld [vmem:[%s534 + $0x170] sm:$0xff]
    %v582 = vld [vmem:[%s534 + $0x178] sm:$0xff]
    %v583 = vld [vmem:[%s534 + $0x180] sm:$0xff]
    %v584 = vld [vmem:[%s534 + $0x188] sm:$0xff]
    %v585 = vld [vmem:[%s534 + $0x190] sm:$0xff]
    %v586 = vld [vmem:[%s534 + $0x198] sm:$0xff]
    %v587 = vld [vmem:[%s534 + $0x1a0] sm:$0xff]
    %v588 = vld [vmem:[%s534 + $0x1a8] sm:$0xff]
    %v589 = vld [vmem:[%s534 + $0x1b0] sm:$0xff]
    %v590 = vld [vmem:[%s534 + $0x1b8] sm:$0xff]
    %v591 = vld [vmem:[%s534 + $0x1c0] sm:$0xff]
    %v592 = vld [vmem:[%s534 + $0x1c8] sm:$0xff]
    %v593 = vld [vmem:[%s534 + $0x1d0] sm:$0xff]
    %v594 = vld [vmem:[%s534 + $0x1d8] sm:$0xff]
    %v595 = vld [vmem:[%s534 + $0x1e0] sm:$0xff]
    %v596 = vld [vmem:[%s534 + $0x1e8] sm:$0xff]
    %v597 = vld [vmem:[%s534 + $0x1f0] sm:$0xff]
    %v598 = vld [vmem:[%s534 + $0x1f8] sm:$0xff]
    %599 = vmatpush.msra.mxu0 %v565
    %600 = vmatpush.msra.mxu0 %v563
    %601 = vmatpush.msra.mxu0 %v561
    %602 = vmatpush.msra.mxu0 %v559
    %603 = vmatpush.msra.mxu0 %v557
    %604 = vmatpush.msra.mxu0 %v555
    %605 = vmatpush.msra.mxu0 %v553
    %606 = vmatpush.msra.mxu0 %v551
    %607 = vmatpush.msra.mxu0 %v549
    %608 = vmatpush.msra.mxu0 %v547
    %609 = vmatpush.msra.mxu0 %v545
    %610 = vmatpush.msra.mxu0 %v543
    %611 = vmatpush.msra.mxu0 %v541
    %612 = vmatpush.msra.mxu0 %v539
    %613 = vmatpush.msra.mxu0 %v537
    %614 = vmatpush.msra.mxu0 %v535
    %615 = vmatmul.f32.gmra.mxu0 %v153
    %v616 = vpop.f32.mrf.mxu0
    %v617 = vadd.f32 0.0, %v616
    %618 = vdwg.mxu0
    %619 = vmatpush.msra.mxu0 %v597
    %620 = vmatpush.msra.mxu0 %v595
    %621 = vmatpush.msra.mxu0 %v593
    %622 = vmatpush.msra.mxu0 %v591
    %623 = vmatpush.msra.mxu0 %v589
    %624 = vmatpush.msra.mxu0 %v587
    %625 = vmatpush.msra.mxu0 %v585
    %626 = vmatpush.msra.mxu0 %v583
    %627 = vmatpush.msra.mxu0 %v581
    %628 = vmatpush.msra.mxu0 %v579
    %629 = vmatpush.msra.mxu0 %v577
    %630 = vmatpush.msra.mxu0 %v575
    %631 = vmatpush.msra.mxu0 %v573
    %632 = vmatpush.msra.mxu0 %v571
    %633 = vmatpush.msra.mxu0 %v569
    %634 = vmatpush.msra.mxu0 %v567
    %635 = vmatmul.f32.gmra.mxu0 %v154
    %v636 = vpop.f32.mrf.mxu0
    %v637 = vadd.f32 %v617, %v636
    %638 = vdwg.mxu0
    %639 = vmatpush.msra.mxu0 %v566
    %640 = vmatpush.msra.mxu0 %v564
    %641 = vmatpush.msra.mxu0 %v562
    %642 = vmatpush.msra.mxu0 %v560
    %643 = vmatpush.msra.mxu0 %v558
    %644 = vmatpush.msra.mxu0 %v556
    %645 = vmatpush.msra.mxu0 %v554
    %646 = vmatpush.msra.mxu0 %v552
    %647 = vmatpush.msra.mxu0 %v550
    %648 = vmatpush.msra.mxu0 %v548
    %649 = vmatpush.msra.mxu0 %v546
    %650 = vmatpush.msra.mxu0 %v544
    %651 = vmatpush.msra.mxu0 %v542
    %652 = vmatpush.msra.mxu0 %v540
    %653 = vmatpush.msra.mxu0 %v538
    %654 = vmatpush.msra.mxu0 %v536
    %655 = vmatmul.f32.gmra.mxu0 %v153
    %v656 = vpop.f32.mrf.mxu0
    %v657 = vadd.f32 0.0, %v656
    %658 = vdwg.mxu0
    %659 = vmatpush.msra.mxu0 %v598
    %660 = vmatpush.msra.mxu0 %v596
    %661 = vmatpush.msra.mxu0 %v594
    %662 = vmatpush.msra.mxu0 %v592
    %663 = vmatpush.msra.mxu0 %v590
    %664 = vmatpush.msra.mxu0 %v588
    %665 = vmatpush.msra.mxu0 %v586
    %666 = vmatpush.msra.mxu0 %v584
    %667 = vmatpush.msra.mxu0 %v582
    %668 = vmatpush.msra.mxu0 %v580
    %669 = vmatpush.msra.mxu0 %v578
    %670 = vmatpush.msra.mxu0 %v576
    %671 = vmatpush.msra.mxu0 %v574
    %672 = vmatpush.msra.mxu0 %v572
    %673 = vmatpush.msra.mxu0 %v570
    %674 = vmatpush.msra.mxu0 %v568
    %675 = vmatmul.f32.gmra.mxu0 %v154
    %v676 = vpop.f32.mrf.mxu0
    %v677 = vadd.f32 %v657, %v676
    %678 = vdwg.mxu0
    %s679 = scalar_lea.vmem [#allocation2], 16
    %v680 = vld [vmem:[%s679] sm:$0xff]
    %v682 = vsel %vm447, %v680, 0
    %684 = vmatpush.msra.mxu0 0.0
    %685 = vmatpush.msra.mxu0 0.0
    %686 = vmatpush.msra.mxu0 0.0
    %687 = vmatpush.msra.mxu0 0.0
    %688 = vmatpush.msra.mxu0 0.0
    %689 = vmatpush.msra.mxu0 0.0
    %690 = vmatpush.msra.mxu0 0.0
    %691 = vmatpush.msra.mxu0 0.0
    %692 = vmatpush.msra.mxu0 0.0
    %693 = vmatpush.msra.mxu0 0.0
    %694 = vmatpush.msra.mxu0 0.0
    %695 = vmatpush.msra.mxu0 0.0
    %696 = vmatpush.msra.mxu0 0.0
    %697 = vmatpush.msra.mxu0 0.0
    %698 = vmatpush.msra.mxu0 0.0
    %699 = vmatpush.msra.mxu0 %v637
    %700 = vmatmul.f32.gmra.mxu0 %v682
    %v701 = vpop.f32.mrf.mxu0
    %v702 = vadd.f32 0.0, %v701
    %703 = vdwg.mxu0
    %704 = vmatpush.msra.mxu0 0.0
    %705 = vmatpush.msra.mxu0 0.0
    %706 = vmatpush.msra.mxu0 0.0
    %707 = vmatpush.msra.mxu0 0.0
    %708 = vmatpush.msra.mxu0 0.0
    %709 = vmatpush.msra.mxu0 0.0
    %710 = vmatpush.msra.mxu0 0.0
    %711 = vmatpush.msra.mxu0 0.0
    %712 = vmatpush.msra.mxu0 0.0
    %713 = vmatpush.msra.mxu0 0.0
    %714 = vmatpush.msra.mxu0 0.0
    %715 = vmatpush.msra.mxu0 0.0
    %716 = vmatpush.msra.mxu0 0.0
    %717 = vmatpush.msra.mxu0 0.0
    %718 = vmatpush.msra.mxu0 0.0
    %719 = vmatpush.msra.mxu0 %v677
    %720 = vmatmul.f32.gmra.mxu0 %v682
    %v721 = vpop.f32.mrf.mxu0
    %v722 = vadd.f32 0.0, %v721
    %723 = vdwg.mxu0
    %v724 = vadd.f32 %v512, %v702
    %v725 = vadd.f32 %v532, %v722
    %s726 = scalar_lea.vmem [#allocation6], 1536
    %v727 = vld [vmem:[%s726] sm:$0xff]
    %v728 = vld [vmem:[%s726 + $0x8] sm:$0xff]
    %v729 = vld [vmem:[%s726 + $0x10] sm:$0xff]
    %v730 = vld [vmem:[%s726 + $0x18] sm:$0xff]
    %v731 = vld [vmem:[%s726 + $0x20] sm:$0xff]
    %v732 = vld [vmem:[%s726 + $0x28] sm:$0xff]
    %v733 = vld [vmem:[%s726 + $0x30] sm:$0xff]
    %v734 = vld [vmem:[%s726 + $0x38] sm:$0xff]
    %v735 = vld [vmem:[%s726 + $0x40] sm:$0xff]
    %v736 = vld [vmem:[%s726 + $0x48] sm:$0xff]
    %v737 = vld [vmem:[%s726 + $0x50] sm:$0xff]
    %v738 = vld [vmem:[%s726 + $0x58] sm:$0xff]
    %v739 = vld [vmem:[%s726 + $0x60] sm:$0xff]
    %v740 = vld [vmem:[%s726 + $0x68] sm:$0xff]
    %v741 = vld [vmem:[%s726 + $0x70] sm:$0xff]
    %v742 = vld [vmem:[%s726 + $0x78] sm:$0xff]
    %v743 = vld [vmem:[%s726 + $0x80] sm:$0xff]
    %v744 = vld [vmem:[%s726 + $0x88] sm:$0xff]
    %v745 = vld [vmem:[%s726 + $0x90] sm:$0xff]
    %v746 = vld [vmem:[%s726 + $0x98] sm:$0xff]
    %v747 = vld [vmem:[%s726 + $0xa0] sm:$0xff]
    %v748 = vld [vmem:[%s726 + $0xa8] sm:$0xff]
    %v749 = vld [vmem:[%s726 + $0xb0] sm:$0xff]
    %v750 = vld [vmem:[%s726 + $0xb8] sm:$0xff]
    %v751 = vld [vmem:[%s726 + $0xc0] sm:$0xff]
    %v752 = vld [vmem:[%s726 + $0xc8] sm:$0xff]
    %v753 = vld [vmem:[%s726 + $0xd0] sm:$0xff]
    %v754 = vld [vmem:[%s726 + $0xd8] sm:$0xff]
    %v755 = vld [vmem:[%s726 + $0xe0] sm:$0xff]
    %v756 = vld [vmem:[%s726 + $0xe8] sm:$0xff]
    %v757 = vld [vmem:[%s726 + $0xf0] sm:$0xff]
    %v758 = vld [vmem:[%s726 + $0xf8] sm:$0xff]
    %v759 = vld [vmem:[%s726 + $0x100] sm:$0xff]
    %v760 = vld [vmem:[%s726 + $0x108] sm:$0xff]
    %v761 = vld [vmem:[%s726 + $0x110] sm:$0xff]
    %v762 = vld [vmem:[%s726 + $0x118] sm:$0xff]
    %v763 = vld [vmem:[%s726 + $0x120] sm:$0xff]
    %v764 = vld [vmem:[%s726 + $0x128] sm:$0xff]
    %v765 = vld [vmem:[%s726 + $0x130] sm:$0xff]
    %v766 = vld [vmem:[%s726 + $0x138] sm:$0xff]
    %v767 = vld [vmem:[%s726 + $0x140] sm:$0xff]
    %v768 = vld [vmem:[%s726 + $0x148] sm:$0xff]
    %v769 = vld [vmem:[%s726 + $0x150] sm:$0xff]
    %v770 = vld [vmem:[%s726 + $0x158] sm:$0xff]
    %v771 = vld [vmem:[%s726 + $0x160] sm:$0xff]
    %v772 = vld [vmem:[%s726 + $0x168] sm:$0xff]
    %v773 = vld [vmem:[%s726 + $0x170] sm:$0xff]
    %v774 = vld [vmem:[%s726 + $0x178] sm:$0xff]
    %v775 = vld [vmem:[%s726 + $0x180] sm:$0xff]
    %v776 = vld [vmem:[%s726 + $0x188] sm:$0xff]
    %v777 = vld [vmem:[%s726 + $0x190] sm:$0xff]
    %v778 = vld [vmem:[%s726 + $0x198] sm:$0xff]
    %v779 = vld [vmem:[%s726 + $0x1a0] sm:$0xff]
    %v780 = vld [vmem:[%s726 + $0x1a8] sm:$0xff]
    %v781 = vld [vmem:[%s726 + $0x1b0] sm:$0xff]
    %v782 = vld [vmem:[%s726 + $0x1b8] sm:$0xff]
    %v783 = vld [vmem:[%s726 + $0x1c0] sm:$0xff]
    %v784 = vld [vmem:[%s726 + $0x1c8] sm:$0xff]
    %v785 = vld [vmem:[%s726 + $0x1d0] sm:$0xff]
    %v786 = vld [vmem:[%s726 + $0x1d8] sm:$0xff]
    %v787 = vld [vmem:[%s726 + $0x1e0] sm:$0xff]
    %v788 = vld [vmem:[%s726 + $0x1e8] sm:$0xff]
    %v789 = vld [vmem:[%s726 + $0x1f0] sm:$0xff]
    %v790 = vld [vmem:[%s726 + $0x1f8] sm:$0xff]
    %791 = vmatpush.msra.mxu0 %v757
    %792 = vmatpush.msra.mxu0 %v755
    %793 = vmatpush.msra.mxu0 %v753
    %794 = vmatpush.msra.mxu0 %v751
    %795 = vmatpush.msra.mxu0 %v749
    %796 = vmatpush.msra.mxu0 %v747
    %797 = vmatpush.msra.mxu0 %v745
    %798 = vmatpush.msra.mxu0 %v743
    %799 = vmatpush.msra.mxu0 %v741
    %800 = vmatpush.msra.mxu0 %v739
    %801 = vmatpush.msra.mxu0 %v737
    %802 = vmatpush.msra.mxu0 %v735
    %803 = vmatpush.msra.mxu0 %v733
    %804 = vmatpush.msra.mxu0 %v731
    %805 = vmatpush.msra.mxu0 %v729
    %806 = vmatpush.msra.mxu0 %v727
    %807 = vmatmul.f32.gmra.mxu0 %v153
    %v808 = vpop.f32.mrf.mxu0
    %v809 = vadd.f32 0.0, %v808
    %810 = vdwg.mxu0
    %811 = vmatpush.msra.mxu0 %v789
    %812 = vmatpush.msra.mxu0 %v787
    %813 = vmatpush.msra.mxu0 %v785
    %814 = vmatpush.msra.mxu0 %v783
    %815 = vmatpush.msra.mxu0 %v781
    %816 = vmatpush.msra.mxu0 %v779
    %817 = vmatpush.msra.mxu0 %v777
    %818 = vmatpush.msra.mxu0 %v775
    %819 = vmatpush.msra.mxu0 %v773
    %820 = vmatpush.msra.mxu0 %v771
    %821 = vmatpush.msra.mxu0 %v769
    %822 = vmatpush.msra.mxu0 %v767
    %823 = vmatpush.msra.mxu0 %v765
    %824 = vmatpush.msra.mxu0 %v763
    %825 = vmatpush.msra.mxu0 %v761
    %826 = vmatpush.msra.mxu0 %v759
    %827 = vmatmul.f32.gmra.mxu0 %v154
    %v828 = vpop.f32.mrf.mxu0
    %v829 = vadd.f32 %v809, %v828
    %830 = vdwg.mxu0
    %831 = vmatpush.msra.mxu0 %v758
    %832 = vmatpush.msra.mxu0 %v756
    %833 = vmatpush.msra.mxu0 %v754
    %834 = vmatpush.msra.mxu0 %v752
    %835 = vmatpush.msra.mxu0 %v750
    %836 = vmatpush.msra.mxu0 %v748
    %837 = vmatpush.msra.mxu0 %v746
    %838 = vmatpush.msra.mxu0 %v744
    %839 = vmatpush.msra.mxu0 %v742
    %840 = vmatpush.msra.mxu0 %v740
    %841 = vmatpush.msra.mxu0 %v738
    %842 = vmatpush.msra.mxu0 %v736
    %843 = vmatpush.msra.mxu0 %v734
    %844 = vmatpush.msra.mxu0 %v732
    %845 = vmatpush.msra.mxu0 %v730
    %846 = vmatpush.msra.mxu0 %v728
    %847 = vmatmul.f32.gmra.mxu0 %v153
    %v848 = vpop.f32.mrf.mxu0
    %v849 = vadd.f32 0.0, %v848
    %850 = vdwg.mxu0
    %851 = vmatpush.msra.mxu0 %v790
    %852 = vmatpush.msra.mxu0 %v788
    %853 = vmatpush.msra.mxu0 %v786
    %854 = vmatpush.msra.mxu0 %v784
    %855 = vmatpush.msra.mxu0 %v782
    %856 = vmatpush.msra.mxu0 %v780
    %857 = vmatpush.msra.mxu0 %v778
    %858 = vmatpush.msra.mxu0 %v776
    %859 = vmatpush.msra.mxu0 %v774
    %860 = vmatpush.msra.mxu0 %v772
    %861 = vmatpush.msra.mxu0 %v770
    %862 = vmatpush.msra.mxu0 %v768
    %863 = vmatpush.msra.mxu0 %v766
    %864 = vmatpush.msra.mxu0 %v764
    %865 = vmatpush.msra.mxu0 %v762
    %866 = vmatpush.msra.mxu0 %v760
    %867 = vmatmul.f32.gmra.mxu0 %v154
    %v868 = vpop.f32.mrf.mxu0
    %v869 = vadd.f32 %v849, %v868
    %870 = vdwg.mxu0
    %s871 = scalar_lea.vmem [#allocation2], 24
    %v872 = vld [vmem:[%s871] sm:$0xff]
    %v874 = vsel %vm447, %v872, 0
    %876 = vmatpush.msra.mxu0 0.0
    %877 = vmatpush.msra.mxu0 0.0
    %878 = vmatpush.msra.mxu0 0.0
    %879 = vmatpush.msra.mxu0 0.0
    %880 = vmatpush.msra.mxu0 0.0
    %881 = vmatpush.msra.mxu0 0.0
    %882 = vmatpush.msra.mxu0 0.0
    %883 = vmatpush.msra.mxu0 0.0
    %884 = vmatpush.msra.mxu0 0.0
    %885 = vmatpush.msra.mxu0 0.0
    %886 = vmatpush.msra.mxu0 0.0
    %887 = vmatpush.msra.mxu0 0.0
    %888 = vmatpush.msra.mxu0 0.0
    %889 = vmatpush.msra.mxu0 0.0
    %890 = vmatpush.msra.mxu0 0.0
    %891 = vmatpush.msra.mxu0 %v829
    %892 = vmatmul.f32.gmra.mxu0 %v874
    %v893 = vpop.f32.mrf.mxu0
    %v894 = vadd.f32 0.0, %v893
    %895 = vdwg.mxu0
    %896 = vmatpush.msra.mxu0 0.0
    %897 = vmatpush.msra.mxu0 0.0
    %898 = vmatpush.msra.mxu0 0.0
    %899 = vmatpush.msra.mxu0 0.0
    %900 = vmatpush.msra.mxu0 0.0
    %901 = vmatpush.msra.mxu0 0.0
    %902 = vmatpush.msra.mxu0 0.0
    %903 = vmatpush.msra.mxu0 0.0
    %904 = vmatpush.msra.mxu0 0.0
    %905 = vmatpush.msra.mxu0 0.0
    %906 = vmatpush.msra.mxu0 0.0
    %907 = vmatpush.msra.mxu0 0.0
    %908 = vmatpush.msra.mxu0 0.0
    %909 = vmatpush.msra.mxu0 0.0
    %910 = vmatpush.msra.mxu0 0.0
    %911 = vmatpush.msra.mxu0 %v869
    %912 = vmatmul.f32.gmra.mxu0 %v874
    %v913 = vpop.f32.mrf.mxu0
    %v914 = vadd.f32 0.0, %v913
    %915 = vdwg.mxu0
    %v916 = vadd.f32 %v724, %v894
    %v917 = vadd.f32 %v725, %v914
    %s918 = scalar_lea.vmem [#allocation6], 2048
    %v919 = vld [vmem:[%s918] sm:$0xff]
    %v920 = vld [vmem:[%s918 + $0x8] sm:$0xff]
    %v921 = vld [vmem:[%s918 + $0x10] sm:$0xff]
    %v922 = vld [vmem:[%s918 + $0x18] sm:$0xff]
    %v923 = vld [vmem:[%s918 + $0x20] sm:$0xff]
    %v924 = vld [vmem:[%s918 + $0x28] sm:$0xff]
    %v925 = vld [vmem:[%s918 + $0x30] sm:$0xff]
    %v926 = vld [vmem:[%s918 + $0x38] sm:$0xff]
    %v927 = vld [vmem:[%s918 + $0x40] sm:$0xff]
    %v928 = vld [vmem:[%s918 + $0x48] sm:$0xff]
    %v929 = vld [vmem:[%s918 + $0x50] sm:$0xff]
    %v930 = vld [vmem:[%s918 + $0x58] sm:$0xff]
    %v931 = vld [vmem:[%s918 + $0x60] sm:$0xff]
    %v932 = vld [vmem:[%s918 + $0x68] sm:$0xff]
    %v933 = vld [vmem:[%s918 + $0x70] sm:$0xff]
    %v934 = vld [vmem:[%s918 + $0x78] sm:$0xff]
    %v935 = vld [vmem:[%s918 + $0x80] sm:$0xff]
    %v936 = vld [vmem:[%s918 + $0x88] sm:$0xff]
    %v937 = vld [vmem:[%s918 + $0x90] sm:$0xff]
    %v938 = vld [vmem:[%s918 + $0x98] sm:$0xff]
    %v939 = vld [vmem:[%s918 + $0xa0] sm:$0xff]
    %v940 = vld [vmem:[%s918 + $0xa8] sm:$0xff]
    %v941 = vld [vmem:[%s918 + $0xb0] sm:$0xff]
    %v942 = vld [vmem:[%s918 + $0xb8] sm:$0xff]
    %v943 = vld [vmem:[%s918 + $0xc0] sm:$0xff]
    %v944 = vld [vmem:[%s918 + $0xc8] sm:$0xff]
    %v945 = vld [vmem:[%s918 + $0xd0] sm:$0xff]
    %v946 = vld [vmem:[%s918 + $0xd8] sm:$0xff]
    %v947 = vld [vmem:[%s918 + $0xe0] sm:$0xff]
    %v948 = vld [vmem:[%s918 + $0xe8] sm:$0xff]
    %v949 = vld [vmem:[%s918 + $0xf0] sm:$0xff]
    %v950 = vld [vmem:[%s918 + $0xf8] sm:$0xff]
    %v951 = vld [vmem:[%s918 + $0x100] sm:$0xff]
    %v952 = vld [vmem:[%s918 + $0x108] sm:$0xff]
    %v953 = vld [vmem:[%s918 + $0x110] sm:$0xff]
    %v954 = vld [vmem:[%s918 + $0x118] sm:$0xff]
    %v955 = vld [vmem:[%s918 + $0x120] sm:$0xff]
    %v956 = vld [vmem:[%s918 + $0x128] sm:$0xff]
    %v957 = vld [vmem:[%s918 + $0x130] sm:$0xff]
    %v958 = vld [vmem:[%s918 + $0x138] sm:$0xff]
    %v959 = vld [vmem:[%s918 + $0x140] sm:$0xff]
    %v960 = vld [vmem:[%s918 + $0x148] sm:$0xff]
    %v961 = vld [vmem:[%s918 + $0x150] sm:$0xff]
    %v962 = vld [vmem:[%s918 + $0x158] sm:$0xff]
    %v963 = vld [vmem:[%s918 + $0x160] sm:$0xff]
    %v964 = vld [vmem:[%s918 + $0x168] sm:$0xff]
    %v965 = vld [vmem:[%s918 + $0x170] sm:$0xff]
    %v966 = vld [vmem:[%s918 + $0x178] sm:$0xff]
    %v967 = vld [vmem:[%s918 + $0x180] sm:$0xff]
    %v968 = vld [vmem:[%s918 + $0x188] sm:$0xff]
    %v969 = vld [vmem:[%s918 + $0x190] sm:$0xff]
    %v970 = vld [vmem:[%s918 + $0x198] sm:$0xff]
    %v971 = vld [vmem:[%s918 + $0x1a0] sm:$0xff]
    %v972 = vld [vmem:[%s918 + $0x1a8] sm:$0xff]
    %v973 = vld [vmem:[%s918 + $0x1b0] sm:$0xff]
    %v974 = vld [vmem:[%s918 + $0x1b8] sm:$0xff]
    %v975 = vld [vmem:[%s918 + $0x1c0] sm:$0xff]
    %v976 = vld [vmem:[%s918 + $0x1c8] sm:$0xff]
    %v977 = vld [vmem:[%s918 + $0x1d0] sm:$0xff]
    %v978 = vld [vmem:[%s918 + $0x1d8] sm:$0xff]
    %v979 = vld [vmem:[%s918 + $0x1e0] sm:$0xff]
    %v980 = vld [vmem:[%s918 + $0x1e8] sm:$0xff]
    %v981 = vld [vmem:[%s918 + $0x1f0] sm:$0xff]
    %v982 = vld [vmem:[%s918 + $0x1f8] sm:$0xff]
    %983 = vmatpush.msra.mxu0 %v949
    %984 = vmatpush.msra.mxu0 %v947
    %985 = vmatpush.msra.mxu0 %v945
    %986 = vmatpush.msra.mxu0 %v943
    %987 = vmatpush.msra.mxu0 %v941
    %988 = vmatpush.msra.mxu0 %v939
    %989 = vmatpush.msra.mxu0 %v937
    %990 = vmatpush.msra.mxu0 %v935
    %991 = vmatpush.msra.mxu0 %v933
    %992 = vmatpush.msra.mxu0 %v931
    %993 = vmatpush.msra.mxu0 %v929
    %994 = vmatpush.msra.mxu0 %v927
    %995 = vmatpush.msra.mxu0 %v925
    %996 = vmatpush.msra.mxu0 %v923
    %997 = vmatpush.msra.mxu0 %v921
    %998 = vmatpush.msra.mxu0 %v919
    %999 = vmatmul.f32.gmra.mxu0 %v153
    %v1000 = vpop.f32.mrf.mxu0
    %v1001 = vadd.f32 0.0, %v1000
    %1002 = vdwg.mxu0
    %1003 = vmatpush.msra.mxu0 %v981
    %1004 = vmatpush.msra.mxu0 %v979
    %1005 = vmatpush.msra.mxu0 %v977
    %1006 = vmatpush.msra.mxu0 %v975
    %1007 = vmatpush.msra.mxu0 %v973
    %1008 = vmatpush.msra.mxu0 %v971
    %1009 = vmatpush.msra.mxu0 %v969
    %1010 = vmatpush.msra.mxu0 %v967
    %1011 = vmatpush.msra.mxu0 %v965
    %1012 = vmatpush.msra.mxu0 %v963
    %1013 = vmatpush.msra.mxu0 %v961
    %1014 = vmatpush.msra.mxu0 %v959
    %1015 = vmatpush.msra.mxu0 %v957
    %1016 = vmatpush.msra.mxu0 %v955
    %1017 = vmatpush.msra.mxu0 %v953
    %1018 = vmatpush.msra.mxu0 %v951
    %1019 = vmatmul.f32.gmra.mxu0 %v154
    %v1020 = vpop.f32.mrf.mxu0
    %v1021 = vadd.f32 %v1001, %v1020
    %1022 = vdwg.mxu0
    %1023 = vmatpush.msra.mxu0 %v950
    %1024 = vmatpush.msra.mxu0 %v948
    %1025 = vmatpush.msra.mxu0 %v946
    %1026 = vmatpush.msra.mxu0 %v944
    %1027 = vmatpush.msra.mxu0 %v942
    %1028 = vmatpush.msra.mxu0 %v940
    %1029 = vmatpush.msra.mxu0 %v938
    %1030 = vmatpush.msra.mxu0 %v936
    %1031 = vmatpush.msra.mxu0 %v934
    %1032 = vmatpush.msra.mxu0 %v932
    %1033 = vmatpush.msra.mxu0 %v930
    %1034 = vmatpush.msra.mxu0 %v928
    %1035 = vmatpush.msra.mxu0 %v926
    %1036 = vmatpush.msra.mxu0 %v924
    %1037 = vmatpush.msra.mxu0 %v922
    %1038 = vmatpush.msra.mxu0 %v920
    %1039 = vmatmul.f32.gmra.mxu0 %v153
    %v1040 = vpop.f32.mrf.mxu0
    %v1041 = vadd.f32 0.0, %v1040
    %1042 = vdwg.mxu0
    %1043 = vmatpush.msra.mxu0 %v982
    %1044 = vmatpush.msra.mxu0 %v980
    %1045 = vmatpush.msra.mxu0 %v978
    %1046 = vmatpush.msra.mxu0 %v976
    %1047 = vmatpush.msra.mxu0 %v974
    %1048 = vmatpush.msra.mxu0 %v972
    %1049 = vmatpush.msra.mxu0 %v970
    %1050 = vmatpush.msra.mxu0 %v968
    %1051 = vmatpush.msra.mxu0 %v966
    %1052 = vmatpush.msra.mxu0 %v964
    %1053 = vmatpush.msra.mxu0 %v962
    %1054 = vmatpush.msra.mxu0 %v960
    %1055 = vmatpush.msra.mxu0 %v958
    %1056 = vmatpush.msra.mxu0 %v956
    %1057 = vmatpush.msra.mxu0 %v954
    %1058 = vmatpush.msra.mxu0 %v952
    %1059 = vmatmul.f32.gmra.mxu0 %v154
    %v1060 = vpop.f32.mrf.mxu0
    %v1061 = vadd.f32 %v1041, %v1060
    %1062 = vdwg.mxu0
    %s1063 = scalar_lea.vmem [#allocation2], 32
    %v1064 = vld [vmem:[%s1063] sm:$0xff]
    %v1066 = vsel %vm447, %v1064, 0
    %1068 = vmatpush.msra.mxu0 0.0
    %1069 = vmatpush.msra.mxu0 0.0
    %1070 = vmatpush.msra.mxu0 0.0
    %1071 = vmatpush.msra.mxu0 0.0
    %1072 = vmatpush.msra.mxu0 0.0
    %1073 = vmatpush.msra.mxu0 0.0
    %1074 = vmatpush.msra.mxu0 0.0
    %1075 = vmatpush.msra.mxu0 0.0
    %1076 = vmatpush.msra.mxu0 0.0
    %1077 = vmatpush.msra.mxu0 0.0
    %1078 = vmatpush.msra.mxu0 0.0
    %1079 = vmatpush.msra.mxu0 0.0
    %1080 = vmatpush.msra.mxu0 0.0
    %1081 = vmatpush.msra.mxu0 0.0
    %1082 = vmatpush.msra.mxu0 0.0
    %1083 = vmatpush.msra.mxu0 %v1021
    %1084 = vmatmul.f32.gmra.mxu0 %v1066
    %v1085 = vpop.f32.mrf.mxu0
    %v1086 = vadd.f32 0.0, %v1085
    %1087 = vdwg.mxu0
    %1088 = vmatpush.msra.mxu0 0.0
    %1089 = vmatpush.msra.mxu0 0.0
    %1090 = vmatpush.msra.mxu0 0.0
    %1091 = vmatpush.msra.mxu0 0.0
    %1092 = vmatpush.msra.mxu0 0.0
    %1093 = vmatpush.msra.mxu0 0.0
    %1094 = vmatpush.msra.mxu0 0.0
    %1095 = vmatpush.msra.mxu0 0.0
    %1096 = vmatpush.msra.mxu0 0.0
    %1097 = vmatpush.msra.mxu0 0.0
    %1098 = vmatpush.msra.mxu0 0.0
    %1099 = vmatpush.msra.mxu0 0.0
    %1100 = vmatpush.msra.mxu0 0.0
    %1101 = vmatpush.msra.mxu0 0.0
    %1102 = vmatpush.msra.mxu0 0.0
    %1103 = vmatpush.msra.mxu0 %v1061
    %1104 = vmatmul.f32.gmra.mxu0 %v1066
    %v1105 = vpop.f32.mrf.mxu0
    %v1106 = vadd.f32 0.0, %v1105
    %1107 = vdwg.mxu0
    %v1108 = vadd.f32 %v916, %v1086
    %v1109 = vadd.f32 %v917, %v1106
    %s1110 = scalar_lea.vmem [#allocation6], 2560
    %v1111 = vld [vmem:[%s1110] sm:$0xff]
    %v1112 = vld [vmem:[%s1110 + $0x8] sm:$0xff]
    %v1113 = vld [vmem:[%s1110 + $0x10] sm:$0xff]
    %v1114 = vld [vmem:[%s1110 + $0x18] sm:$0xff]
    %v1115 = vld [vmem:[%s1110 + $0x20] sm:$0xff]
    %v1116 = vld [vmem:[%s1110 + $0x28] sm:$0xff]
    %v1117 = vld [vmem:[%s1110 + $0x30] sm:$0xff]
    %v1118 = vld [vmem:[%s1110 + $0x38] sm:$0xff]
    %v1119 = vld [vmem:[%s1110 + $0x40] sm:$0xff]
    %v1120 = vld [vmem:[%s1110 + $0x48] sm:$0xff]
    %v1121 = vld [vmem:[%s1110 + $0x50] sm:$0xff]
    %v1122 = vld [vmem:[%s1110 + $0x58] sm:$0xff]
    %v1123 = vld [vmem:[%s1110 + $0x60] sm:$0xff]
    %v1124 = vld [vmem:[%s1110 + $0x68] sm:$0xff]
    %v1125 = vld [vmem:[%s1110 + $0x70] sm:$0xff]
    %v1126 = vld [vmem:[%s1110 + $0x78] sm:$0xff]
    %v1127 = vld [vmem:[%s1110 + $0x80] sm:$0xff]
    %v1128 = vld [vmem:[%s1110 + $0x88] sm:$0xff]
    %v1129 = vld [vmem:[%s1110 + $0x90] sm:$0xff]
    %v1130 = vld [vmem:[%s1110 + $0x98] sm:$0xff]
    %v1131 = vld [vmem:[%s1110 + $0xa0] sm:$0xff]
    %v1132 = vld [vmem:[%s1110 + $0xa8] sm:$0xff]
    %v1133 = vld [vmem:[%s1110 + $0xb0] sm:$0xff]
    %v1134 = vld [vmem:[%s1110 + $0xb8] sm:$0xff]
    %v1135 = vld [vmem:[%s1110 + $0xc0] sm:$0xff]
    %v1136 = vld [vmem:[%s1110 + $0xc8] sm:$0xff]
    %v1137 = vld [vmem:[%s1110 + $0xd0] sm:$0xff]
    %v1138 = vld [vmem:[%s1110 + $0xd8] sm:$0xff]
    %v1139 = vld [vmem:[%s1110 + $0xe0] sm:$0xff]
    %v1140 = vld [vmem:[%s1110 + $0xe8] sm:$0xff]
    %v1141 = vld [vmem:[%s1110 + $0xf0] sm:$0xff]
    %v1142 = vld [vmem:[%s1110 + $0xf8] sm:$0xff]
    %v1143 = vld [vmem:[%s1110 + $0x100] sm:$0xff]
    %v1144 = vld [vmem:[%s1110 + $0x108] sm:$0xff]
    %v1145 = vld [vmem:[%s1110 + $0x110] sm:$0xff]
    %v1146 = vld [vmem:[%s1110 + $0x118] sm:$0xff]
    %v1147 = vld [vmem:[%s1110 + $0x120] sm:$0xff]
    %v1148 = vld [vmem:[%s1110 + $0x128] sm:$0xff]
    %v1149 = vld [vmem:[%s1110 + $0x130] sm:$0xff]
    %v1150 = vld [vmem:[%s1110 + $0x138] sm:$0xff]
    %v1151 = vld [vmem:[%s1110 + $0x140] sm:$0xff]
    %v1152 = vld [vmem:[%s1110 + $0x148] sm:$0xff]
    %v1153 = vld [vmem:[%s1110 + $0x150] sm:$0xff]
    %v1154 = vld [vmem:[%s1110 + $0x158] sm:$0xff]
    %v1155 = vld [vmem:[%s1110 + $0x160] sm:$0xff]
    %v1156 = vld [vmem:[%s1110 + $0x168] sm:$0xff]
    %v1157 = vld [vmem:[%s1110 + $0x170] sm:$0xff]
    %v1158 = vld [vmem:[%s1110 + $0x178] sm:$0xff]
    %v1159 = vld [vmem:[%s1110 + $0x180] sm:$0xff]
    %v1160 = vld [vmem:[%s1110 + $0x188] sm:$0xff]
    %v1161 = vld [vmem:[%s1110 + $0x190] sm:$0xff]
    %v1162 = vld [vmem:[%s1110 + $0x198] sm:$0xff]
    %v1163 = vld [vmem:[%s1110 + $0x1a0] sm:$0xff]
    %v1164 = vld [vmem:[%s1110 + $0x1a8] sm:$0xff]
    %v1165 = vld [vmem:[%s1110 + $0x1b0] sm:$0xff]
    %v1166 = vld [vmem:[%s1110 + $0x1b8] sm:$0xff]
    %v1167 = vld [vmem:[%s1110 + $0x1c0] sm:$0xff]
    %v1168 = vld [vmem:[%s1110 + $0x1c8] sm:$0xff]
    %v1169 = vld [vmem:[%s1110 + $0x1d0] sm:$0xff]
    %v1170 = vld [vmem:[%s1110 + $0x1d8] sm:$0xff]
    %v1171 = vld [vmem:[%s1110 + $0x1e0] sm:$0xff]
    %v1172 = vld [vmem:[%s1110 + $0x1e8] sm:$0xff]
    %v1173 = vld [vmem:[%s1110 + $0x1f0] sm:$0xff]
    %v1174 = vld [vmem:[%s1110 + $0x1f8] sm:$0xff]
    %1175 = vmatpush.msra.mxu0 %v1141
    %1176 = vmatpush.msra.mxu0 %v1139
    %1177 = vmatpush.msra.mxu0 %v1137
    %1178 = vmatpush.msra.mxu0 %v1135
    %1179 = vmatpush.msra.mxu0 %v1133
    %1180 = vmatpush.msra.mxu0 %v1131
    %1181 = vmatpush.msra.mxu0 %v1129
    %1182 = vmatpush.msra.mxu0 %v1127
    %1183 = vmatpush.msra.mxu0 %v1125
    %1184 = vmatpush.msra.mxu0 %v1123
    %1185 = vmatpush.msra.mxu0 %v1121
    %1186 = vmatpush.msra.mxu0 %v1119
    %1187 = vmatpush.msra.mxu0 %v1117
    %1188 = vmatpush.msra.mxu0 %v1115
    %1189 = vmatpush.msra.mxu0 %v1113
    %1190 = vmatpush.msra.mxu0 %v1111
    %1191 = vmatmul.f32.gmra.mxu0 %v153
    %v1192 = vpop.f32.mrf.mxu0
    %v1193 = vadd.f32 0.0, %v1192
    %1194 = vdwg.mxu0
    %1195 = vmatpush.msra.mxu0 %v1173
    %1196 = vmatpush.msra.mxu0 %v1171
    %1197 = vmatpush.msra.mxu0 %v1169
    %1198 = vmatpush.msra.mxu0 %v1167
    %1199 = vmatpush.msra.mxu0 %v1165
    %1200 = vmatpush.msra.mxu0 %v1163
    %1201 = vmatpush.msra.mxu0 %v1161
    %1202 = vmatpush.msra.mxu0 %v1159
    %1203 = vmatpush.msra.mxu0 %v1157
    %1204 = vmatpush.msra.mxu0 %v1155
    %1205 = vmatpush.msra.mxu0 %v1153
    %1206 = vmatpush.msra.mxu0 %v1151
    %1207 = vmatpush.msra.mxu0 %v1149
    %1208 = vmatpush.msra.mxu0 %v1147
    %1209 = vmatpush.msra.mxu0 %v1145
    %1210 = vmatpush.msra.mxu0 %v1143
    %1211 = vmatmul.f32.gmra.mxu0 %v154
    %v1212 = vpop.f32.mrf.mxu0
    %v1213 = vadd.f32 %v1193, %v1212
    %1214 = vdwg.mxu0
    %1215 = vmatpush.msra.mxu0 %v1142
    %1216 = vmatpush.msra.mxu0 %v1140
    %1217 = vmatpush.msra.mxu0 %v1138
    %1218 = vmatpush.msra.mxu0 %v1136
    %1219 = vmatpush.msra.mxu0 %v1134
    %1220 = vmatpush.msra.mxu0 %v1132
    %1221 = vmatpush.msra.mxu0 %v1130
    %1222 = vmatpush.msra.mxu0 %v1128
    %1223 = vmatpush.msra.mxu0 %v1126
    %1224 = vmatpush.msra.mxu0 %v1124
    %1225 = vmatpush.msra.mxu0 %v1122
    %1226 = vmatpush.msra.mxu0 %v1120
    %1227 = vmatpush.msra.mxu0 %v1118
    %1228 = vmatpush.msra.mxu0 %v1116
    %1229 = vmatpush.msra.mxu0 %v1114
    %1230 = vmatpush.msra.mxu0 %v1112
    %1231 = vmatmul.f32.gmra.mxu0 %v153
    %v1232 = vpop.f32.mrf.mxu0
    %v1233 = vadd.f32 0.0, %v1232
    %1234 = vdwg.mxu0
    %1235 = vmatpush.msra.mxu0 %v1174
    %1236 = vmatpush.msra.mxu0 %v1172
    %1237 = vmatpush.msra.mxu0 %v1170
    %1238 = vmatpush.msra.mxu0 %v1168
    %1239 = vmatpush.msra.mxu0 %v1166
    %1240 = vmatpush.msra.mxu0 %v1164
    %1241 = vmatpush.msra.mxu0 %v1162
    %1242 = vmatpush.msra.mxu0 %v1160
    %1243 = vmatpush.msra.mxu0 %v1158
    %1244 = vmatpush.msra.mxu0 %v1156
    %1245 = vmatpush.msra.mxu0 %v1154
    %1246 = vmatpush.msra.mxu0 %v1152
    %1247 = vmatpush.msra.mxu0 %v1150
    %1248 = vmatpush.msra.mxu0 %v1148
    %1249 = vmatpush.msra.mxu0 %v1146
    %1250 = vmatpush.msra.mxu0 %v1144
    %1251 = vmatmul.f32.gmra.mxu0 %v154
    %v1252 = vpop.f32.mrf.mxu0
    %v1253 = vadd.f32 %v1233, %v1252
    %1254 = vdwg.mxu0
    %s1255 = scalar_lea.vmem [#allocation2], 40
    %v1256 = vld [vmem:[%s1255] sm:$0xff]
    %v1258 = vsel %vm447, %v1256, 0
    %1260 = vmatpush.msra.mxu0 0.0
    %1261 = vmatpush.msra.mxu0 0.0
    %1262 = vmatpush.msra.mxu0 0.0
    %1263 = vmatpush.msra.mxu0 0.0
    %1264 = vmatpush.msra.mxu0 0.0
    %1265 = vmatpush.msra.mxu0 0.0
    %1266 = vmatpush.msra.mxu0 0.0
    %1267 = vmatpush.msra.mxu0 0.0
    %1268 = vmatpush.msra.mxu0 0.0
    %1269 = vmatpush.msra.mxu0 0.0
    %1270 = vmatpush.msra.mxu0 0.0
    %1271 = vmatpush.msra.mxu0 0.0
    %1272 = vmatpush.msra.mxu0 0.0
    %1273 = vmatpush.msra.mxu0 0.0
    %1274 = vmatpush.msra.mxu0 0.0
    %1275 = vmatpush.msra.mxu0 %v1213
    %1276 = vmatmul.f32.gmra.mxu0 %v1258
    %v1277 = vpop.f32.mrf.mxu0
    %v1278 = vadd.f32 0.0, %v1277
    %1279 = vdwg.mxu0
    %1280 = vmatpush.msra.mxu0 0.0
    %1281 = vmatpush.msra.mxu0 0.0
    %1282 = vmatpush.msra.mxu0 0.0
    %1283 = vmatpush.msra.mxu0 0.0
    %1284 = vmatpush.msra.mxu0 0.0
    %1285 = vmatpush.msra.mxu0 0.0
    %1286 = vmatpush.msra.mxu0 0.0
    %1287 = vmatpush.msra.mxu0 0.0
    %1288 = vmatpush.msra.mxu0 0.0
    %1289 = vmatpush.msra.mxu0 0.0
    %1290 = vmatpush.msra.mxu0 0.0
    %1291 = vmatpush.msra.mxu0 0.0
    %1292 = vmatpush.msra.mxu0 0.0
    %1293 = vmatpush.msra.mxu0 0.0
    %1294 = vmatpush.msra.mxu0 0.0
    %1295 = vmatpush.msra.mxu0 %v1253
    %1296 = vmatmul.f32.gmra.mxu0 %v1258
    %v1297 = vpop.f32.mrf.mxu0
    %v1298 = vadd.f32 0.0, %v1297
    %1299 = vdwg.mxu0
    %v1300 = vadd.f32 %v1108, %v1278
    %v1301 = vadd.f32 %v1109, %v1298
    %s1302 = scalar_lea.vmem [#allocation6], 3072
    %v1303 = vld [vmem:[%s1302] sm:$0xff]
    %v1304 = vld [vmem:[%s1302 + $0x8] sm:$0xff]
    %v1305 = vld [vmem:[%s1302 + $0x10] sm:$0xff]
    %v1306 = vld [vmem:[%s1302 + $0x18] sm:$0xff]
    %v1307 = vld [vmem:[%s1302 + $0x20] sm:$0xff]
    %v1308 = vld [vmem:[%s1302 + $0x28] sm:$0xff]
    %v1309 = vld [vmem:[%s1302 + $0x30] sm:$0xff]
    %v1310 = vld [vmem:[%s1302 + $0x38] sm:$0xff]
    %v1311 = vld [vmem:[%s1302 + $0x40] sm:$0xff]
    %v1312 = vld [vmem:[%s1302 + $0x48] sm:$0xff]
    %v1313 = vld [vmem:[%s1302 + $0x50] sm:$0xff]
    %v1314 = vld [vmem:[%s1302 + $0x58] sm:$0xff]
    %v1315 = vld [vmem:[%s1302 + $0x60] sm:$0xff]
    %v1316 = vld [vmem:[%s1302 + $0x68] sm:$0xff]
    %v1317 = vld [vmem:[%s1302 + $0x70] sm:$0xff]
    %v1318 = vld [vmem:[%s1302 + $0x78] sm:$0xff]
    %v1319 = vld [vmem:[%s1302 + $0x80] sm:$0xff]
    %v1320 = vld [vmem:[%s1302 + $0x88] sm:$0xff]
    %v1321 = vld [vmem:[%s1302 + $0x90] sm:$0xff]
    %v1322 = vld [vmem:[%s1302 + $0x98] sm:$0xff]
    %v1323 = vld [vmem:[%s1302 + $0xa0] sm:$0xff]
    %v1324 = vld [vmem:[%s1302 + $0xa8] sm:$0xff]
    %v1325 = vld [vmem:[%s1302 + $0xb0] sm:$0xff]
    %v1326 = vld [vmem:[%s1302 + $0xb8] sm:$0xff]
    %v1327 = vld [vmem:[%s1302 + $0xc0] sm:$0xff]
    %v1328 = vld [vmem:[%s1302 + $0xc8] sm:$0xff]
    %v1329 = vld [vmem:[%s1302 + $0xd0] sm:$0xff]
    %v1330 = vld [vmem:[%s1302 + $0xd8] sm:$0xff]
    %v1331 = vld [vmem:[%s1302 + $0xe0] sm:$0xff]
    %v1332 = vld [vmem:[%s1302 + $0xe8] sm:$0xff]
    %v1333 = vld [vmem:[%s1302 + $0xf0] sm:$0xff]
    %v1334 = vld [vmem:[%s1302 + $0xf8] sm:$0xff]
    %v1335 = vld [vmem:[%s1302 + $0x100] sm:$0xff]
    %v1336 = vld [vmem:[%s1302 + $0x108] sm:$0xff]
    %v1337 = vld [vmem:[%s1302 + $0x110] sm:$0xff]
    %v1338 = vld [vmem:[%s1302 + $0x118] sm:$0xff]
    %v1339 = vld [vmem:[%s1302 + $0x120] sm:$0xff]
    %v1340 = vld [vmem:[%s1302 + $0x128] sm:$0xff]
    %v1341 = vld [vmem:[%s1302 + $0x130] sm:$0xff]
    %v1342 = vld [vmem:[%s1302 + $0x138] sm:$0xff]
    %v1343 = vld [vmem:[%s1302 + $0x140] sm:$0xff]
    %v1344 = vld [vmem:[%s1302 + $0x148] sm:$0xff]
    %v1345 = vld [vmem:[%s1302 + $0x150] sm:$0xff]
    %v1346 = vld [vmem:[%s1302 + $0x158] sm:$0xff]
    %v1347 = vld [vmem:[%s1302 + $0x160] sm:$0xff]
    %v1348 = vld [vmem:[%s1302 + $0x168] sm:$0xff]
    %v1349 = vld [vmem:[%s1302 + $0x170] sm:$0xff]
    %v1350 = vld [vmem:[%s1302 + $0x178] sm:$0xff]
    %v1351 = vld [vmem:[%s1302 + $0x180] sm:$0xff]
    %v1352 = vld [vmem:[%s1302 + $0x188] sm:$0xff]
    %v1353 = vld [vmem:[%s1302 + $0x190] sm:$0xff]
    %v1354 = vld [vmem:[%s1302 + $0x198] sm:$0xff]
    %v1355 = vld [vmem:[%s1302 + $0x1a0] sm:$0xff]
    %v1356 = vld [vmem:[%s1302 + $0x1a8] sm:$0xff]
    %v1357 = vld [vmem:[%s1302 + $0x1b0] sm:$0xff]
    %v1358 = vld [vmem:[%s1302 + $0x1b8] sm:$0xff]
    %v1359 = vld [vmem:[%s1302 + $0x1c0] sm:$0xff]
    %v1360 = vld [vmem:[%s1302 + $0x1c8] sm:$0xff]
    %v1361 = vld [vmem:[%s1302 + $0x1d0] sm:$0xff]
    %v1362 = vld [vmem:[%s1302 + $0x1d8] sm:$0xff]
    %v1363 = vld [vmem:[%s1302 + $0x1e0] sm:$0xff]
    %v1364 = vld [vmem:[%s1302 + $0x1e8] sm:$0xff]
    %v1365 = vld [vmem:[%s1302 + $0x1f0] sm:$0xff]
    %v1366 = vld [vmem:[%s1302 + $0x1f8] sm:$0xff]
    %1367 = vmatpush.msra.mxu0 %v1333
    %1368 = vmatpush.msra.mxu0 %v1331
    %1369 = vmatpush.msra.mxu0 %v1329
    %1370 = vmatpush.msra.mxu0 %v1327
    %1371 = vmatpush.msra.mxu0 %v1325
    %1372 = vmatpush.msra.mxu0 %v1323
    %1373 = vmatpush.msra.mxu0 %v1321
    %1374 = vmatpush.msra.mxu0 %v1319
    %1375 = vmatpush.msra.mxu0 %v1317
    %1376 = vmatpush.msra.mxu0 %v1315
    %1377 = vmatpush.msra.mxu0 %v1313
    %1378 = vmatpush.msra.mxu0 %v1311
    %1379 = vmatpush.msra.mxu0 %v1309
    %1380 = vmatpush.msra.mxu0 %v1307
    %1381 = vmatpush.msra.mxu0 %v1305
    %1382 = vmatpush.msra.mxu0 %v1303
    %1383 = vmatmul.f32.gmra.mxu0 %v153
    %v1384 = vpop.f32.mrf.mxu0
    %v1385 = vadd.f32 0.0, %v1384
    %1386 = vdwg.mxu0
    %1387 = vmatpush.msra.mxu0 %v1365
    %1388 = vmatpush.msra.mxu0 %v1363
    %1389 = vmatpush.msra.mxu0 %v1361
    %1390 = vmatpush.msra.mxu0 %v1359
    %1391 = vmatpush.msra.mxu0 %v1357
    %1392 = vmatpush.msra.mxu0 %v1355
    %1393 = vmatpush.msra.mxu0 %v1353
    %1394 = vmatpush.msra.mxu0 %v1351
    %1395 = vmatpush.msra.mxu0 %v1349
    %1396 = vmatpush.msra.mxu0 %v1347
    %1397 = vmatpush.msra.mxu0 %v1345
    %1398 = vmatpush.msra.mxu0 %v1343
    %1399 = vmatpush.msra.mxu0 %v1341
    %1400 = vmatpush.msra.mxu0 %v1339
    %1401 = vmatpush.msra.mxu0 %v1337
    %1402 = vmatpush.msra.mxu0 %v1335
    %1403 = vmatmul.f32.gmra.mxu0 %v154
    %v1404 = vpop.f32.mrf.mxu0
    %v1405 = vadd.f32 %v1385, %v1404
    %1406 = vdwg.mxu0
    %1407 = vmatpush.msra.mxu0 %v1334
    %1408 = vmatpush.msra.mxu0 %v1332
    %1409 = vmatpush.msra.mxu0 %v1330
    %1410 = vmatpush.msra.mxu0 %v1328
    %1411 = vmatpush.msra.mxu0 %v1326
    %1412 = vmatpush.msra.mxu0 %v1324
    %1413 = vmatpush.msra.mxu0 %v1322
    %1414 = vmatpush.msra.mxu0 %v1320
    %1415 = vmatpush.msra.mxu0 %v1318
    %1416 = vmatpush.msra.mxu0 %v1316
    %1417 = vmatpush.msra.mxu0 %v1314
    %1418 = vmatpush.msra.mxu0 %v1312
    %1419 = vmatpush.msra.mxu0 %v1310
    %1420 = vmatpush.msra.mxu0 %v1308
    %1421 = vmatpush.msra.mxu0 %v1306
    %1422 = vmatpush.msra.mxu0 %v1304
    %1423 = vmatmul.f32.gmra.mxu0 %v153
    %v1424 = vpop.f32.mrf.mxu0
    %v1425 = vadd.f32 0.0, %v1424
    %1426 = vdwg.mxu0
    %1427 = vmatpush.msra.mxu0 %v1366
    %1428 = vmatpush.msra.mxu0 %v1364
    %1429 = vmatpush.msra.mxu0 %v1362
    %1430 = vmatpush.msra.mxu0 %v1360
    %1431 = vmatpush.msra.mxu0 %v1358
    %1432 = vmatpush.msra.mxu0 %v1356
    %1433 = vmatpush.msra.mxu0 %v1354
    %1434 = vmatpush.msra.mxu0 %v1352
    %1435 = vmatpush.msra.mxu0 %v1350
    %1436 = vmatpush.msra.mxu0 %v1348
    %1437 = vmatpush.msra.mxu0 %v1346
    %1438 = vmatpush.msra.mxu0 %v1344
    %1439 = vmatpush.msra.mxu0 %v1342
    %1440 = vmatpush.msra.mxu0 %v1340
    %1441 = vmatpush.msra.mxu0 %v1338
    %1442 = vmatpush.msra.mxu0 %v1336
    %1443 = vmatmul.f32.gmra.mxu0 %v154
    %v1444 = vpop.f32.mrf.mxu0
    %v1445 = vadd.f32 %v1425, %v1444
    %1446 = vdwg.mxu0
    %s1447 = scalar_lea.vmem [#allocation2], 48
    %v1448 = vld [vmem:[%s1447] sm:$0xff]
    %v1450 = vsel %vm447, %v1448, 0
    %1452 = vmatpush.msra.mxu0 0.0
    %1453 = vmatpush.msra.mxu0 0.0
    %1454 = vmatpush.msra.mxu0 0.0
    %1455 = vmatpush.msra.mxu0 0.0
    %1456 = vmatpush.msra.mxu0 0.0
    %1457 = vmatpush.msra.mxu0 0.0
    %1458 = vmatpush.msra.mxu0 0.0
    %1459 = vmatpush.msra.mxu0 0.0
    %1460 = vmatpush.msra.mxu0 0.0
    %1461 = vmatpush.msra.mxu0 0.0
    %1462 = vmatpush.msra.mxu0 0.0
    %1463 = vmatpush.msra.mxu0 0.0
    %1464 = vmatpush.msra.mxu0 0.0
    %1465 = vmatpush.msra.mxu0 0.0
    %1466 = vmatpush.msra.mxu0 0.0
    %1467 = vmatpush.msra.mxu0 %v1405
    %1468 = vmatmul.f32.gmra.mxu0 %v1450
    %v1469 = vpop.f32.mrf.mxu0
    %v1470 = vadd.f32 0.0, %v1469
    %1471 = vdwg.mxu0
    %1472 = vmatpush.msra.mxu0 0.0
    %1473 = vmatpush.msra.mxu0 0.0
    %1474 = vmatpush.msra.mxu0 0.0
    %1475 = vmatpush.msra.mxu0 0.0
    %1476 = vmatpush.msra.mxu0 0.0
    %1477 = vmatpush.msra.mxu0 0.0
    %1478 = vmatpush.msra.mxu0 0.0
    %1479 = vmatpush.msra.mxu0 0.0
    %1480 = vmatpush.msra.mxu0 0.0
    %1481 = vmatpush.msra.mxu0 0.0
    %1482 = vmatpush.msra.mxu0 0.0
    %1483 = vmatpush.msra.mxu0 0.0
    %1484 = vmatpush.msra.mxu0 0.0
    %1485 = vmatpush.msra.mxu0 0.0
    %1486 = vmatpush.msra.mxu0 0.0
    %1487 = vmatpush.msra.mxu0 %v1445
    %1488 = vmatmul.f32.gmra.mxu0 %v1450
    %v1489 = vpop.f32.mrf.mxu0
    %v1490 = vadd.f32 0.0, %v1489
    %1491 = vdwg.mxu0
    %v1492 = vadd.f32 %v1300, %v1470
    %v1493 = vadd.f32 %v1301, %v1490
    %s1494 = scalar_lea.vmem [#allocation6], 3584
    %v1495 = vld [vmem:[%s1494] sm:$0xff]
    %v1496 = vld [vmem:[%s1494 + $0x8] sm:$0xff]
    %v1497 = vld [vmem:[%s1494 + $0x10] sm:$0xff]
    %v1498 = vld [vmem:[%s1494 + $0x18] sm:$0xff]
    %v1499 = vld [vmem:[%s1494 + $0x20] sm:$0xff]
    %v1500 = vld [vmem:[%s1494 + $0x28] sm:$0xff]
    %v1501 = vld [vmem:[%s1494 + $0x30] sm:$0xff]
    %v1502 = vld [vmem:[%s1494 + $0x38] sm:$0xff]
    %v1503 = vld [vmem:[%s1494 + $0x40] sm:$0xff]
    %v1504 = vld [vmem:[%s1494 + $0x48] sm:$0xff]
    %v1505 = vld [vmem:[%s1494 + $0x50] sm:$0xff]
    %v1506 = vld [vmem:[%s1494 + $0x58] sm:$0xff]
    %v1507 = vld [vmem:[%s1494 + $0x60] sm:$0xff]
    %v1508 = vld [vmem:[%s1494 + $0x68] sm:$0xff]
    %v1509 = vld [vmem:[%s1494 + $0x70] sm:$0xff]
    %v1510 = vld [vmem:[%s1494 + $0x78] sm:$0xff]
    %v1511 = vld [vmem:[%s1494 + $0x80] sm:$0xff]
    %v1512 = vld [vmem:[%s1494 + $0x88] sm:$0xff]
    %v1513 = vld [vmem:[%s1494 + $0x90] sm:$0xff]
    %v1514 = vld [vmem:[%s1494 + $0x98] sm:$0xff]
    %v1515 = vld [vmem:[%s1494 + $0xa0] sm:$0xff]
    %v1516 = vld [vmem:[%s1494 + $0xa8] sm:$0xff]
    %v1517 = vld [vmem:[%s1494 + $0xb0] sm:$0xff]
    %v1518 = vld [vmem:[%s1494 + $0xb8] sm:$0xff]
    %v1519 = vld [vmem:[%s1494 + $0xc0] sm:$0xff]
    %v1520 = vld [vmem:[%s1494 + $0xc8] sm:$0xff]
    %v1521 = vld [vmem:[%s1494 + $0xd0] sm:$0xff]
    %v1522 = vld [vmem:[%s1494 + $0xd8] sm:$0xff]
    %v1523 = vld [vmem:[%s1494 + $0xe0] sm:$0xff]
    %v1524 = vld [vmem:[%s1494 + $0xe8] sm:$0xff]
    %v1525 = vld [vmem:[%s1494 + $0xf0] sm:$0xff]
    %v1526 = vld [vmem:[%s1494 + $0xf8] sm:$0xff]
    %v1527 = vld [vmem:[%s1494 + $0x100] sm:$0xff]
    %v1528 = vld [vmem:[%s1494 + $0x108] sm:$0xff]
    %v1529 = vld [vmem:[%s1494 + $0x110] sm:$0xff]
    %v1530 = vld [vmem:[%s1494 + $0x118] sm:$0xff]
    %v1531 = vld [vmem:[%s1494 + $0x120] sm:$0xff]
    %v1532 = vld [vmem:[%s1494 + $0x128] sm:$0xff]
    %v1533 = vld [vmem:[%s1494 + $0x130] sm:$0xff]
    %v1534 = vld [vmem:[%s1494 + $0x138] sm:$0xff]
    %v1535 = vld [vmem:[%s1494 + $0x140] sm:$0xff]
    %v1536 = vld [vmem:[%s1494 + $0x148] sm:$0xff]
    %v1537 = vld [vmem:[%s1494 + $0x150] sm:$0xff]
    %v1538 = vld [vmem:[%s1494 + $0x158] sm:$0xff]
    %v1539 = vld [vmem:[%s1494 + $0x160] sm:$0xff]
    %v1540 = vld [vmem:[%s1494 + $0x168] sm:$0xff]
    %v1541 = vld [vmem:[%s1494 + $0x170] sm:$0xff]
    %v1542 = vld [vmem:[%s1494 + $0x178] sm:$0xff]
    %v1543 = vld [vmem:[%s1494 + $0x180] sm:$0xff]
    %v1544 = vld [vmem:[%s1494 + $0x188] sm:$0xff]
    %v1545 = vld [vmem:[%s1494 + $0x190] sm:$0xff]
    %v1546 = vld [vmem:[%s1494 + $0x198] sm:$0xff]
    %v1547 = vld [vmem:[%s1494 + $0x1a0] sm:$0xff]
    %v1548 = vld [vmem:[%s1494 + $0x1a8] sm:$0xff]
    %v1549 = vld [vmem:[%s1494 + $0x1b0] sm:$0xff]
    %v1550 = vld [vmem:[%s1494 + $0x1b8] sm:$0xff]
    %v1551 = vld [vmem:[%s1494 + $0x1c0] sm:$0xff]
    %v1552 = vld [vmem:[%s1494 + $0x1c8] sm:$0xff]
    %v1553 = vld [vmem:[%s1494 + $0x1d0] sm:$0xff]
    %v1554 = vld [vmem:[%s1494 + $0x1d8] sm:$0xff]
    %v1555 = vld [vmem:[%s1494 + $0x1e0] sm:$0xff]
    %v1556 = vld [vmem:[%s1494 + $0x1e8] sm:$0xff]
    %v1557 = vld [vmem:[%s1494 + $0x1f0] sm:$0xff]
    %v1558 = vld [vmem:[%s1494 + $0x1f8] sm:$0xff]
    %1559 = vmatpush.msra.mxu0 %v1525
    %1560 = vmatpush.msra.mxu0 %v1523
    %1561 = vmatpush.msra.mxu0 %v1521
    %1562 = vmatpush.msra.mxu0 %v1519
    %1563 = vmatpush.msra.mxu0 %v1517
    %1564 = vmatpush.msra.mxu0 %v1515
    %1565 = vmatpush.msra.mxu0 %v1513
    %1566 = vmatpush.msra.mxu0 %v1511
    %1567 = vmatpush.msra.mxu0 %v1509
    %1568 = vmatpush.msra.mxu0 %v1507
    %1569 = vmatpush.msra.mxu0 %v1505
    %1570 = vmatpush.msra.mxu0 %v1503
    %1571 = vmatpush.msra.mxu0 %v1501
    %1572 = vmatpush.msra.mxu0 %v1499
    %1573 = vmatpush.msra.mxu0 %v1497
    %1574 = vmatpush.msra.mxu0 %v1495
    %1575 = vmatmul.f32.gmra.mxu0 %v153
    %v1576 = vpop.f32.mrf.mxu0
    %v1577 = vadd.f32 0.0, %v1576
    %1578 = vdwg.mxu0
    %1579 = vmatpush.msra.mxu0 %v1557
    %1580 = vmatpush.msra.mxu0 %v1555
    %1581 = vmatpush.msra.mxu0 %v1553
    %1582 = vmatpush.msra.mxu0 %v1551
    %1583 = vmatpush.msra.mxu0 %v1549
    %1584 = vmatpush.msra.mxu0 %v1547
    %1585 = vmatpush.msra.mxu0 %v1545
    %1586 = vmatpush.msra.mxu0 %v1543
    %1587 = vmatpush.msra.mxu0 %v1541
    %1588 = vmatpush.msra.mxu0 %v1539
    %1589 = vmatpush.msra.mxu0 %v1537
    %1590 = vmatpush.msra.mxu0 %v1535
    %1591 = vmatpush.msra.mxu0 %v1533
    %1592 = vmatpush.msra.mxu0 %v1531
    %1593 = vmatpush.msra.mxu0 %v1529
    %1594 = vmatpush.msra.mxu0 %v1527
    %1595 = vmatmul.f32.gmra.mxu0 %v154
    %v1596 = vpop.f32.mrf.mxu0
    %v1597 = vadd.f32 %v1577, %v1596
    %1598 = vdwg.mxu0
    %1599 = vmatpush.msra.mxu0 %v1526
    %1600 = vmatpush.msra.mxu0 %v1524
    %1601 = vmatpush.msra.mxu0 %v1522
    %1602 = vmatpush.msra.mxu0 %v1520
    %1603 = vmatpush.msra.mxu0 %v1518
    %1604 = vmatpush.msra.mxu0 %v1516
    %1605 = vmatpush.msra.mxu0 %v1514
    %1606 = vmatpush.msra.mxu0 %v1512
    %1607 = vmatpush.msra.mxu0 %v1510
    %1608 = vmatpush.msra.mxu0 %v1508
    %1609 = vmatpush.msra.mxu0 %v1506
    %1610 = vmatpush.msra.mxu0 %v1504
    %1611 = vmatpush.msra.mxu0 %v1502
    %1612 = vmatpush.msra.mxu0 %v1500
    %1613 = vmatpush.msra.mxu0 %v1498
    %1614 = vmatpush.msra.mxu0 %v1496
    %1615 = vmatmul.f32.gmra.mxu0 %v153
    %v1616 = vpop.f32.mrf.mxu0
    %v1617 = vadd.f32 0.0, %v1616
    %1618 = vdwg.mxu0
    %1619 = vmatpush.msra.mxu0 %v1558
    %1620 = vmatpush.msra.mxu0 %v1556
    %1621 = vmatpush.msra.mxu0 %v1554
    %1622 = vmatpush.msra.mxu0 %v1552
    %1623 = vmatpush.msra.mxu0 %v1550
    %1624 = vmatpush.msra.mxu0 %v1548
    %1625 = vmatpush.msra.mxu0 %v1546
    %1626 = vmatpush.msra.mxu0 %v1544
    %1627 = vmatpush.msra.mxu0 %v1542
    %1628 = vmatpush.msra.mxu0 %v1540
    %1629 = vmatpush.msra.mxu0 %v1538
    %1630 = vmatpush.msra.mxu0 %v1536
    %1631 = vmatpush.msra.mxu0 %v1534
    %1632 = vmatpush.msra.mxu0 %v1532
    %1633 = vmatpush.msra.mxu0 %v1530
    %1634 = vmatpush.msra.mxu0 %v1528
    %1635 = vmatmul.f32.gmra.mxu0 %v154
    %v1636 = vpop.f32.mrf.mxu0
    %v1637 = vadd.f32 %v1617, %v1636
    %1638 = vdwg.mxu0
    %s1639 = scalar_lea.vmem [#allocation2], 56
    %v1640 = vld [vmem:[%s1639] sm:$0xff]
    %v1642 = vsel %vm447, %v1640, 0
    %1644 = vmatpush.msra.mxu0 0.0
    %1645 = vmatpush.msra.mxu0 0.0
    %1646 = vmatpush.msra.mxu0 0.0
    %1647 = vmatpush.msra.mxu0 0.0
    %1648 = vmatpush.msra.mxu0 0.0
    %1649 = vmatpush.msra.mxu0 0.0
    %1650 = vmatpush.msra.mxu0 0.0
    %1651 = vmatpush.msra.mxu0 0.0
    %1652 = vmatpush.msra.mxu0 0.0
    %1653 = vmatpush.msra.mxu0 0.0
    %1654 = vmatpush.msra.mxu0 0.0
    %1655 = vmatpush.msra.mxu0 0.0
    %1656 = vmatpush.msra.mxu0 0.0
    %1657 = vmatpush.msra.mxu0 0.0
    %1658 = vmatpush.msra.mxu0 0.0
    %1659 = vmatpush.msra.mxu0 %v1597
    %1660 = vmatmul.f32.gmra.mxu0 %v1642
    %v1661 = vpop.f32.mrf.mxu0
    %v1662 = vadd.f32 0.0, %v1661
    %1663 = vdwg.mxu0
    %1664 = vmatpush.msra.mxu0 0.0
    %1665 = vmatpush.msra.mxu0 0.0
    %1666 = vmatpush.msra.mxu0 0.0
    %1667 = vmatpush.msra.mxu0 0.0
    %1668 = vmatpush.msra.mxu0 0.0
    %1669 = vmatpush.msra.mxu0 0.0
    %1670 = vmatpush.msra.mxu0 0.0
    %1671 = vmatpush.msra.mxu0 0.0
    %1672 = vmatpush.msra.mxu0 0.0
    %1673 = vmatpush.msra.mxu0 0.0
    %1674 = vmatpush.msra.mxu0 0.0
    %1675 = vmatpush.msra.mxu0 0.0
    %1676 = vmatpush.msra.mxu0 0.0
    %1677 = vmatpush.msra.mxu0 0.0
    %1678 = vmatpush.msra.mxu0 0.0
    %1679 = vmatpush.msra.mxu0 %v1637
    %1680 = vmatmul.f32.gmra.mxu0 %v1642
    %v1681 = vpop.f32.mrf.mxu0
    %v1682 = vadd.f32 0.0, %v1681
    %1683 = vdwg.mxu0
    %v1684 = vadd.f32 %v1492, %v1662
    %v1685 = vadd.f32 %v1493, %v1682
    %s1686 = scalar_lea.vmem [#allocation6], 4096
    %v1687 = vld [vmem:[%s1686] sm:$0xff]
    %v1688 = vld [vmem:[%s1686 + $0x8] sm:$0xff]
    %v1689 = vld [vmem:[%s1686 + $0x10] sm:$0xff]
    %v1690 = vld [vmem:[%s1686 + $0x18] sm:$0xff]
    %v1691 = vld [vmem:[%s1686 + $0x20] sm:$0xff]
    %v1692 = vld [vmem:[%s1686 + $0x28] sm:$0xff]
    %v1693 = vld [vmem:[%s1686 + $0x30] sm:$0xff]
    %v1694 = vld [vmem:[%s1686 + $0x38] sm:$0xff]
    %v1695 = vld [vmem:[%s1686 + $0x40] sm:$0xff]
    %v1696 = vld [vmem:[%s1686 + $0x48] sm:$0xff]
    %v1697 = vld [vmem:[%s1686 + $0x50] sm:$0xff]
    %v1698 = vld [vmem:[%s1686 + $0x58] sm:$0xff]
    %v1699 = vld [vmem:[%s1686 + $0x60] sm:$0xff]
    %v1700 = vld [vmem:[%s1686 + $0x68] sm:$0xff]
    %v1701 = vld [vmem:[%s1686 + $0x70] sm:$0xff]
    %v1702 = vld [vmem:[%s1686 + $0x78] sm:$0xff]
    %v1703 = vld [vmem:[%s1686 + $0x80] sm:$0xff]
    %v1704 = vld [vmem:[%s1686 + $0x88] sm:$0xff]
    %v1705 = vld [vmem:[%s1686 + $0x90] sm:$0xff]
    %v1706 = vld [vmem:[%s1686 + $0x98] sm:$0xff]
    %v1707 = vld [vmem:[%s1686 + $0xa0] sm:$0xff]
    %v1708 = vld [vmem:[%s1686 + $0xa8] sm:$0xff]
    %v1709 = vld [vmem:[%s1686 + $0xb0] sm:$0xff]
    %v1710 = vld [vmem:[%s1686 + $0xb8] sm:$0xff]
    %v1711 = vld [vmem:[%s1686 + $0xc0] sm:$0xff]
    %v1712 = vld [vmem:[%s1686 + $0xc8] sm:$0xff]
    %v1713 = vld [vmem:[%s1686 + $0xd0] sm:$0xff]
    %v1714 = vld [vmem:[%s1686 + $0xd8] sm:$0xff]
    %v1715 = vld [vmem:[%s1686 + $0xe0] sm:$0xff]
    %v1716 = vld [vmem:[%s1686 + $0xe8] sm:$0xff]
    %v1717 = vld [vmem:[%s1686 + $0xf0] sm:$0xff]
    %v1718 = vld [vmem:[%s1686 + $0xf8] sm:$0xff]
    %v1719 = vld [vmem:[%s1686 + $0x100] sm:$0xff]
    %v1720 = vld [vmem:[%s1686 + $0x108] sm:$0xff]
    %v1721 = vld [vmem:[%s1686 + $0x110] sm:$0xff]
    %v1722 = vld [vmem:[%s1686 + $0x118] sm:$0xff]
    %v1723 = vld [vmem:[%s1686 + $0x120] sm:$0xff]
    %v1724 = vld [vmem:[%s1686 + $0x128] sm:$0xff]
    %v1725 = vld [vmem:[%s1686 + $0x130] sm:$0xff]
    %v1726 = vld [vmem:[%s1686 + $0x138] sm:$0xff]
    %v1727 = vld [vmem:[%s1686 + $0x140] sm:$0xff]
    %v1728 = vld [vmem:[%s1686 + $0x148] sm:$0xff]
    %v1729 = vld [vmem:[%s1686 + $0x150] sm:$0xff]
    %v1730 = vld [vmem:[%s1686 + $0x158] sm:$0xff]
    %v1731 = vld [vmem:[%s1686 + $0x160] sm:$0xff]
    %v1732 = vld [vmem:[%s1686 + $0x168] sm:$0xff]
    %v1733 = vld [vmem:[%s1686 + $0x170] sm:$0xff]
    %v1734 = vld [vmem:[%s1686 + $0x178] sm:$0xff]
    %v1735 = vld [vmem:[%s1686 + $0x180] sm:$0xff]
    %v1736 = vld [vmem:[%s1686 + $0x188] sm:$0xff]
    %v1737 = vld [vmem:[%s1686 + $0x190] sm:$0xff]
    %v1738 = vld [vmem:[%s1686 + $0x198] sm:$0xff]
    %v1739 = vld [vmem:[%s1686 + $0x1a0] sm:$0xff]
    %v1740 = vld [vmem:[%s1686 + $0x1a8] sm:$0xff]
    %v1741 = vld [vmem:[%s1686 + $0x1b0] sm:$0xff]
    %v1742 = vld [vmem:[%s1686 + $0x1b8] sm:$0xff]
    %v1743 = vld [vmem:[%s1686 + $0x1c0] sm:$0xff]
    %v1744 = vld [vmem:[%s1686 + $0x1c8] sm:$0xff]
    %v1745 = vld [vmem:[%s1686 + $0x1d0] sm:$0xff]
    %v1746 = vld [vmem:[%s1686 + $0x1d8] sm:$0xff]
    %v1747 = vld [vmem:[%s1686 + $0x1e0] sm:$0xff]
    %v1748 = vld [vmem:[%s1686 + $0x1e8] sm:$0xff]
    %v1749 = vld [vmem:[%s1686 + $0x1f0] sm:$0xff]
    %v1750 = vld [vmem:[%s1686 + $0x1f8] sm:$0xff]
    %1751 = vmatpush.msra.mxu0 %v1717
    %1752 = vmatpush.msra.mxu0 %v1715
    %1753 = vmatpush.msra.mxu0 %v1713
    %1754 = vmatpush.msra.mxu0 %v1711
    %1755 = vmatpush.msra.mxu0 %v1709
    %1756 = vmatpush.msra.mxu0 %v1707
    %1757 = vmatpush.msra.mxu0 %v1705
    %1758 = vmatpush.msra.mxu0 %v1703
    %1759 = vmatpush.msra.mxu0 %v1701
    %1760 = vmatpush.msra.mxu0 %v1699
    %1761 = vmatpush.msra.mxu0 %v1697
    %1762 = vmatpush.msra.mxu0 %v1695
    %1763 = vmatpush.msra.mxu0 %v1693
    %1764 = vmatpush.msra.mxu0 %v1691
    %1765 = vmatpush.msra.mxu0 %v1689
    %1766 = vmatpush.msra.mxu0 %v1687
    %1767 = vmatmul.f32.gmra.mxu0 %v153
    %v1768 = vpop.f32.mrf.mxu0
    %v1769 = vadd.f32 0.0, %v1768
    %1770 = vdwg.mxu0
    %1771 = vmatpush.msra.mxu0 %v1749
    %1772 = vmatpush.msra.mxu0 %v1747
    %1773 = vmatpush.msra.mxu0 %v1745
    %1774 = vmatpush.msra.mxu0 %v1743
    %1775 = vmatpush.msra.mxu0 %v1741
    %1776 = vmatpush.msra.mxu0 %v1739
    %1777 = vmatpush.msra.mxu0 %v1737
    %1778 = vmatpush.msra.mxu0 %v1735
    %1779 = vmatpush.msra.mxu0 %v1733
    %1780 = vmatpush.msra.mxu0 %v1731
    %1781 = vmatpush.msra.mxu0 %v1729
    %1782 = vmatpush.msra.mxu0 %v1727
    %1783 = vmatpush.msra.mxu0 %v1725
    %1784 = vmatpush.msra.mxu0 %v1723
    %1785 = vmatpush.msra.mxu0 %v1721
    %1786 = vmatpush.msra.mxu0 %v1719
    %1787 = vmatmul.f32.gmra.mxu0 %v154
    %v1788 = vpop.f32.mrf.mxu0
    %v1789 = vadd.f32 %v1769, %v1788
    %1790 = vdwg.mxu0
    %1791 = vmatpush.msra.mxu0 %v1718
    %1792 = vmatpush.msra.mxu0 %v1716
    %1793 = vmatpush.msra.mxu0 %v1714
    %1794 = vmatpush.msra.mxu0 %v1712
    %1795 = vmatpush.msra.mxu0 %v1710
    %1796 = vmatpush.msra.mxu0 %v1708
    %1797 = vmatpush.msra.mxu0 %v1706
    %1798 = vmatpush.msra.mxu0 %v1704
    %1799 = vmatpush.msra.mxu0 %v1702
    %1800 = vmatpush.msra.mxu0 %v1700
    %1801 = vmatpush.msra.mxu0 %v1698
    %1802 = vmatpush.msra.mxu0 %v1696
    %1803 = vmatpush.msra.mxu0 %v1694
    %1804 = vmatpush.msra.mxu0 %v1692
    %1805 = vmatpush.msra.mxu0 %v1690
    %1806 = vmatpush.msra.mxu0 %v1688
    %1807 = vmatmul.f32.gmra.mxu0 %v153
    %v1808 = vpop.f32.mrf.mxu0
    %v1809 = vadd.f32 0.0, %v1808
    %1810 = vdwg.mxu0
    %1811 = vmatpush.msra.mxu0 %v1750
    %1812 = vmatpush.msra.mxu0 %v1748
    %1813 = vmatpush.msra.mxu0 %v1746
    %1814 = vmatpush.msra.mxu0 %v1744
    %1815 = vmatpush.msra.mxu0 %v1742
    %1816 = vmatpush.msra.mxu0 %v1740
    %1817 = vmatpush.msra.mxu0 %v1738
    %1818 = vmatpush.msra.mxu0 %v1736
    %1819 = vmatpush.msra.mxu0 %v1734
    %1820 = vmatpush.msra.mxu0 %v1732
    %1821 = vmatpush.msra.mxu0 %v1730
    %1822 = vmatpush.msra.mxu0 %v1728
    %1823 = vmatpush.msra.mxu0 %v1726
    %1824 = vmatpush.msra.mxu0 %v1724
    %1825 = vmatpush.msra.mxu0 %v1722
    %1826 = vmatpush.msra.mxu0 %v1720
    %1827 = vmatmul.f32.gmra.mxu0 %v154
    %v1828 = vpop.f32.mrf.mxu0
    %v1829 = vadd.f32 %v1809, %v1828
    %1830 = vdwg.mxu0
    %s1831 = scalar_lea.vmem [#allocation2], 64
    %v1832 = vld [vmem:[%s1831] sm:$0xff]
    %v1834 = vsel %vm447, %v1832, 0
    %1836 = vmatpush.msra.mxu0 0.0
    %1837 = vmatpush.msra.mxu0 0.0
    %1838 = vmatpush.msra.mxu0 0.0
    %1839 = vmatpush.msra.mxu0 0.0
    %1840 = vmatpush.msra.mxu0 0.0
    %1841 = vmatpush.msra.mxu0 0.0
    %1842 = vmatpush.msra.mxu0 0.0
    %1843 = vmatpush.msra.mxu0 0.0
    %1844 = vmatpush.msra.mxu0 0.0
    %1845 = vmatpush.msra.mxu0 0.0
    %1846 = vmatpush.msra.mxu0 0.0
    %1847 = vmatpush.msra.mxu0 0.0
    %1848 = vmatpush.msra.mxu0 0.0
    %1849 = vmatpush.msra.mxu0 0.0
    %1850 = vmatpush.msra.mxu0 0.0
    %1851 = vmatpush.msra.mxu0 %v1789
    %1852 = vmatmul.f32.gmra.mxu0 %v1834
    %v1853 = vpop.f32.mrf.mxu0
    %v1854 = vadd.f32 0.0, %v1853
    %1855 = vdwg.mxu0
    %1856 = vmatpush.msra.mxu0 0.0
    %1857 = vmatpush.msra.mxu0 0.0
    %1858 = vmatpush.msra.mxu0 0.0
    %1859 = vmatpush.msra.mxu0 0.0
    %1860 = vmatpush.msra.mxu0 0.0
    %1861 = vmatpush.msra.mxu0 0.0
    %1862 = vmatpush.msra.mxu0 0.0
    %1863 = vmatpush.msra.mxu0 0.0
    %1864 = vmatpush.msra.mxu0 0.0
    %1865 = vmatpush.msra.mxu0 0.0
    %1866 = vmatpush.msra.mxu0 0.0
    %1867 = vmatpush.msra.mxu0 0.0
    %1868 = vmatpush.msra.mxu0 0.0
    %1869 = vmatpush.msra.mxu0 0.0
    %1870 = vmatpush.msra.mxu0 0.0
    %1871 = vmatpush.msra.mxu0 %v1829
    %1872 = vmatmul.f32.gmra.mxu0 %v1834
    %v1873 = vpop.f32.mrf.mxu0
    %v1874 = vadd.f32 0.0, %v1873
    %1875 = vdwg.mxu0
    %v1876 = vadd.f32 %v1684, %v1854
    %v1877 = vadd.f32 %v1685, %v1874
    %v1878 = vld [vmem:[#allocation4] sm:$0xff]
    %1880 = vset.pattern.permute.xlu0 0
    %1881 = vperm.xlu0 %1880, %v1878
    %v1882 = vpop.permute.xlu0 %1881
    %v1884 = vadd.f32 %v1876, %v1882
    %v1885 = vadd.f32 %v1877, %v1882
    %v1886 = vmax.f32 %v1884, 0.0
    %v1887 = vmax.f32 %v1885, 0.0
    %v1888 = vld [vmem:[#allocation10] sm:$0xff]
    %v1889 = vld [vmem:[#allocation10 + $0x8] sm:$0xff]
    %v1890 = vld [vmem:[#allocation10 + $0x10] sm:$0xff]
    %v1891 = vld [vmem:[#allocation10 + $0x18] sm:$0xff]
    %v1892 = vld [vmem:[#allocation10 + $0x20] sm:$0xff]
    %v1893 = vld [vmem:[#allocation10 + $0x28] sm:$0xff]
    %v1894 = vld [vmem:[#allocation10 + $0x30] sm:$0xff]
    %v1895 = vld [vmem:[#allocation10 + $0x38] sm:$0xff]
    %v1896 = vld [vmem:[#allocation10 + $0x40] sm:$0xff]
    %v1897 = vld [vmem:[#allocation10 + $0x48] sm:$0xff]
    %v1898 = vld [vmem:[#allocation10 + $0x50] sm:$0xff]
    %v1899 = vld [vmem:[#allocation10 + $0x58] sm:$0xff]
    %v1900 = vld [vmem:[#allocation10 + $0x60] sm:$0xff]
    %v1901 = vld [vmem:[#allocation10 + $0x68] sm:$0xff]
    %v1902 = vld [vmem:[#allocation10 + $0x70] sm:$0xff]
    %v1903 = vld [vmem:[#allocation10 + $0x78] sm:$0xff]
    %v1904 = vld [vmem:[#allocation10 + $0x80] sm:$0xff]
    %v1905 = vld [vmem:[#allocation10 + $0x88] sm:$0xff]
    %v1906 = vld [vmem:[#allocation10 + $0x90] sm:$0xff]
    %v1907 = vld [vmem:[#allocation10 + $0x98] sm:$0xff]
    %v1908 = vld [vmem:[#allocation10 + $0xa0] sm:$0xff]
    %v1909 = vld [vmem:[#allocation10 + $0xa8] sm:$0xff]
    %v1910 = vld [vmem:[#allocation10 + $0xb0] sm:$0xff]
    %v1911 = vld [vmem:[#allocation10 + $0xb8] sm:$0xff]
    %v1912 = vld [vmem:[#allocation10 + $0xc0] sm:$0xff]
    %v1913 = vld [vmem:[#allocation10 + $0xc8] sm:$0xff]
    %v1914 = vld [vmem:[#allocation10 + $0xd0] sm:$0xff]
    %v1915 = vld [vmem:[#allocation10 + $0xd8] sm:$0xff]
    %v1916 = vld [vmem:[#allocation10 + $0xe0] sm:$0xff]
    %v1917 = vld [vmem:[#allocation10 + $0xe8] sm:$0xff]
    %v1918 = vld [vmem:[#allocation10 + $0xf0] sm:$0xff]
    %v1919 = vld [vmem:[#allocation10 + $0xf8] sm:$0xff]
    %1920 = vmatpush.msra.mxu0 %v1903
    %1921 = vmatpush.msra.mxu0 %v1902
    %1922 = vmatpush.msra.mxu0 %v1901
    %1923 = vmatpush.msra.mxu0 %v1900
    %1924 = vmatpush.msra.mxu0 %v1899
    %1925 = vmatpush.msra.mxu0 %v1898
    %1926 = vmatpush.msra.mxu0 %v1897
    %1927 = vmatpush.msra.mxu0 %v1896
    %1928 = vmatpush.msra.mxu0 %v1895
    %1929 = vmatpush.msra.mxu0 %v1894
    %1930 = vmatpush.msra.mxu0 %v1893
    %1931 = vmatpush.msra.mxu0 %v1892
    %1932 = vmatpush.msra.mxu0 %v1891
    %1933 = vmatpush.msra.mxu0 %v1890
    %1934 = vmatpush.msra.mxu0 %v1889
    %1935 = vmatpush.msra.mxu0 %v1888
    %1936 = vmatmul.f32.gmra.mxu0 %v1886
    %v1937 = vpop.f32.mrf.mxu0
    %v1938 = vadd.f32 0.0, %v1937
    %1939 = vdwg.mxu0
    %1940 = vmatpush.msra.mxu0 %v1919
    %1941 = vmatpush.msra.mxu0 %v1918
    %1942 = vmatpush.msra.mxu0 %v1917
    %1943 = vmatpush.msra.mxu0 %v1916
    %1944 = vmatpush.msra.mxu0 %v1915
    %1945 = vmatpush.msra.mxu0 %v1914
    %1946 = vmatpush.msra.mxu0 %v1913
    %1947 = vmatpush.msra.mxu0 %v1912
    %1948 = vmatpush.msra.mxu0 %v1911
    %1949 = vmatpush.msra.mxu0 %v1910
    %1950 = vmatpush.msra.mxu0 %v1909
    %1951 = vmatpush.msra.mxu0 %v1908
    %1952 = vmatpush.msra.mxu0 %v1907
    %1953 = vmatpush.msra.mxu0 %v1906
    %1954 = vmatpush.msra.mxu0 %v1905
    %1955 = vmatpush.msra.mxu0 %v1904
    %1956 = vmatmul.f32.gmra.mxu0 %v1887
    %v1957 = vpop.f32.mrf.mxu0
    %v1958 = vadd.f32 %v1938, %v1957
    %1959 = vdwg.mxu0
    %v1960 = vld [vmem:[#allocation7] sm:$0xff]
    %v1961 = vld [vmem:[#allocation7 + $0x8] sm:$0xff]
    %s1962 = scalar_lea.vmem [#allocation10], 256
    %v1963 = vld [vmem:[%s1962] sm:$0xff]
    %v1964 = vld [vmem:[%s1962 + $0x8] sm:$0xff]
    %v1965 = vld [vmem:[%s1962 + $0x10] sm:$0xff]
    %v1966 = vld [vmem:[%s1962 + $0x18] sm:$0xff]
    %v1967 = vld [vmem:[%s1962 + $0x20] sm:$0xff]
    %v1968 = vld [vmem:[%s1962 + $0x28] sm:$0xff]
    %v1969 = vld [vmem:[%s1962 + $0x30] sm:$0xff]
    %v1970 = vld [vmem:[%s1962 + $0x38] sm:$0xff]
    %v1971 = vld [vmem:[%s1962 + $0x40] sm:$0xff]
    %v1972 = vld [vmem:[%s1962 + $0x48] sm:$0xff]
    %v1973 = vld [vmem:[%s1962 + $0x50] sm:$0xff]
    %v1974 = vld [vmem:[%s1962 + $0x58] sm:$0xff]
    %v1975 = vld [vmem:[%s1962 + $0x60] sm:$0xff]
    %v1976 = vld [vmem:[%s1962 + $0x68] sm:$0xff]
    %v1977 = vld [vmem:[%s1962 + $0x70] sm:$0xff]
    %v1978 = vld [vmem:[%s1962 + $0x78] sm:$0xff]
    %v1979 = vld [vmem:[%s1962 + $0x80] sm:$0xff]
    %v1980 = vld [vmem:[%s1962 + $0x88] sm:$0xff]
    %v1981 = vld [vmem:[%s1962 + $0x90] sm:$0xff]
    %v1982 = vld [vmem:[%s1962 + $0x98] sm:$0xff]
    %v1983 = vld [vmem:[%s1962 + $0xa0] sm:$0xff]
    %v1984 = vld [vmem:[%s1962 + $0xa8] sm:$0xff]
    %v1985 = vld [vmem:[%s1962 + $0xb0] sm:$0xff]
    %v1986 = vld [vmem:[%s1962 + $0xb8] sm:$0xff]
    %v1987 = vld [vmem:[%s1962 + $0xc0] sm:$0xff]
    %v1988 = vld [vmem:[%s1962 + $0xc8] sm:$0xff]
    %v1989 = vld [vmem:[%s1962 + $0xd0] sm:$0xff]
    %v1990 = vld [vmem:[%s1962 + $0xd8] sm:$0xff]
    %v1991 = vld [vmem:[%s1962 + $0xe0] sm:$0xff]
    %v1992 = vld [vmem:[%s1962 + $0xe8] sm:$0xff]
    %v1993 = vld [vmem:[%s1962 + $0xf0] sm:$0xff]
    %v1994 = vld [vmem:[%s1962 + $0xf8] sm:$0xff]
    %1995 = vmatpush.msra.mxu0 %v1978
    %1996 = vmatpush.msra.mxu0 %v1977
    %1997 = vmatpush.msra.mxu0 %v1976
    %1998 = vmatpush.msra.mxu0 %v1975
    %1999 = vmatpush.msra.mxu0 %v1974
    %2000 = vmatpush.msra.mxu0 %v1973
    %2001 = vmatpush.msra.mxu0 %v1972
    %2002 = vmatpush.msra.mxu0 %v1971
    %2003 = vmatpush.msra.mxu0 %v1970
    %2004 = vmatpush.msra.mxu0 %v1969
    %2005 = vmatpush.msra.mxu0 %v1968
    %2006 = vmatpush.msra.mxu0 %v1967
    %2007 = vmatpush.msra.mxu0 %v1966
    %2008 = vmatpush.msra.mxu0 %v1965
    %2009 = vmatpush.msra.mxu0 %v1964
    %2010 = vmatpush.msra.mxu0 %v1963
    %2011 = vmatmul.f32.gmra.mxu0 %v1886
    %v2012 = vpop.f32.mrf.mxu0
    %v2013 = vadd.f32 0.0, %v2012
    %2014 = vdwg.mxu0
    %2015 = vmatpush.msra.mxu0 %v1994
    %2016 = vmatpush.msra.mxu0 %v1993
    %2017 = vmatpush.msra.mxu0 %v1992
    %2018 = vmatpush.msra.mxu0 %v1991
    %2019 = vmatpush.msra.mxu0 %v1990
    %2020 = vmatpush.msra.mxu0 %v1989
    %2021 = vmatpush.msra.mxu0 %v1988
    %2022 = vmatpush.msra.mxu0 %v1987
    %2023 = vmatpush.msra.mxu0 %v1986
    %2024 = vmatpush.msra.mxu0 %v1985
    %2025 = vmatpush.msra.mxu0 %v1984
    %2026 = vmatpush.msra.mxu0 %v1983
    %2027 = vmatpush.msra.mxu0 %v1982
    %2028 = vmatpush.msra.mxu0 %v1981
    %2029 = vmatpush.msra.mxu0 %v1980
    %2030 = vmatpush.msra.mxu0 %v1979
    %2031 = vmatmul.f32.gmra.mxu0 %v1887
    %v2032 = vpop.f32.mrf.mxu0
    %v2033 = vadd.f32 %v2013, %v2032
    %2034 = vdwg.mxu0
    %s2035 = scalar_lea.vmem [#allocation7], 16
    %v2036 = vld [vmem:[%s2035] sm:$0xff]
    %v2037 = vld [vmem:[%s2035 + $0x8] sm:$0xff]
    %v2039 = vsel %vm447, %v2036, 0
    %v2042 = vsel %vm447, %v2037, 0
    %2044 = vmatpush.msra.mxu0 0.0
    %2045 = vmatpush.msra.mxu0 0.0
    %2046 = vmatpush.msra.mxu0 0.0
    %2047 = vmatpush.msra.mxu0 0.0
    %2048 = vmatpush.msra.mxu0 0.0
    %2049 = vmatpush.msra.mxu0 0.0
    %2050 = vmatpush.msra.mxu0 0.0
    %2051 = vmatpush.msra.mxu0 0.0
    %2052 = vmatpush.msra.mxu0 0.0
    %2053 = vmatpush.msra.mxu0 0.0
    %2054 = vmatpush.msra.mxu0 0.0
    %2055 = vmatpush.msra.mxu0 0.0
    %2056 = vmatpush.msra.mxu0 0.0
    %2057 = vmatpush.msra.mxu0 0.0
    %2058 = vmatpush.msra.mxu0 0.0
    %2059 = vmatpush.msra.mxu0 %v2033
    %2060 = vmatmul.f32.gmra.mxu0 %v2039
    %v2061 = vpop.f32.mrf.mxu0
    %v2062 = vadd.f32 0.0, %v2061
    %2063 = vmatmul.f32.gmra.mxu0 %v2042
    %v2064 = vpop.f32.mrf.mxu0
    %v2065 = vadd.f32 0.0, %v2064
    %2066 = vdwg.mxu0
    %v2068 = vsel %vm447, %v1960, 0
    %v2071 = vsel %vm447, %v1961, 0
    %2073 = vmatpush.msra.mxu0 0.0
    %2074 = vmatpush.msra.mxu0 0.0
    %2075 = vmatpush.msra.mxu0 0.0
    %2076 = vmatpush.msra.mxu0 0.0
    %2077 = vmatpush.msra.mxu0 0.0
    %2078 = vmatpush.msra.mxu0 0.0
    %2079 = vmatpush.msra.mxu0 0.0
    %2080 = vmatpush.msra.mxu0 0.0
    %2081 = vmatpush.msra.mxu0 0.0
    %2082 = vmatpush.msra.mxu0 0.0
    %2083 = vmatpush.msra.mxu0 0.0
    %2084 = vmatpush.msra.mxu0 0.0
    %2085 = vmatpush.msra.mxu0 0.0
    %2086 = vmatpush.msra.mxu0 0.0
    %2087 = vmatpush.msra.mxu0 0.0
    %2088 = vmatpush.msra.mxu0 %v1958
    %2089 = vmatmul.f32.gmra.mxu0 %v2068
    %v2090 = vpop.f32.mrf.mxu0
    %v2091 = vadd.f32 %v2062, %v2090
    %2092 = vmatmul.f32.gmra.mxu0 %v2071
    %v2093 = vpop.f32.mrf.mxu0
    %v2094 = vadd.f32 %v2065, %v2093
    %2095 = vdwg.mxu0
    %s2096 = scalar_lea.vmem [#allocation10], 512
    %v2097 = vld [vmem:[%s2096] sm:$0xff]
    %v2098 = vld [vmem:[%s2096 + $0x8] sm:$0xff]
    %v2099 = vld [vmem:[%s2096 + $0x10] sm:$0xff]
    %v2100 = vld [vmem:[%s2096 + $0x18] sm:$0xff]
    %v2101 = vld [vmem:[%s2096 + $0x20] sm:$0xff]
    %v2102 = vld [vmem:[%s2096 + $0x28] sm:$0xff]
    %v2103 = vld [vmem:[%s2096 + $0x30] sm:$0xff]
    %v2104 = vld [vmem:[%s2096 + $0x38] sm:$0xff]
    %v2105 = vld [vmem:[%s2096 + $0x40] sm:$0xff]
    %v2106 = vld [vmem:[%s2096 + $0x48] sm:$0xff]
    %v2107 = vld [vmem:[%s2096 + $0x50] sm:$0xff]
    %v2108 = vld [vmem:[%s2096 + $0x58] sm:$0xff]
    %v2109 = vld [vmem:[%s2096 + $0x60] sm:$0xff]
    %v2110 = vld [vmem:[%s2096 + $0x68] sm:$0xff]
    %v2111 = vld [vmem:[%s2096 + $0x70] sm:$0xff]
    %v2112 = vld [vmem:[%s2096 + $0x78] sm:$0xff]
    %v2113 = vld [vmem:[%s2096 + $0x80] sm:$0xff]
    %v2114 = vld [vmem:[%s2096 + $0x88] sm:$0xff]
    %v2115 = vld [vmem:[%s2096 + $0x90] sm:$0xff]
    %v2116 = vld [vmem:[%s2096 + $0x98] sm:$0xff]
    %v2117 = vld [vmem:[%s2096 + $0xa0] sm:$0xff]
    %v2118 = vld [vmem:[%s2096 + $0xa8] sm:$0xff]
    %v2119 = vld [vmem:[%s2096 + $0xb0] sm:$0xff]
    %v2120 = vld [vmem:[%s2096 + $0xb8] sm:$0xff]
    %v2121 = vld [vmem:[%s2096 + $0xc0] sm:$0xff]
    %v2122 = vld [vmem:[%s2096 + $0xc8] sm:$0xff]
    %v2123 = vld [vmem:[%s2096 + $0xd0] sm:$0xff]
    %v2124 = vld [vmem:[%s2096 + $0xd8] sm:$0xff]
    %v2125 = vld [vmem:[%s2096 + $0xe0] sm:$0xff]
    %v2126 = vld [vmem:[%s2096 + $0xe8] sm:$0xff]
    %v2127 = vld [vmem:[%s2096 + $0xf0] sm:$0xff]
    %v2128 = vld [vmem:[%s2096 + $0xf8] sm:$0xff]
    %2129 = vmatpush.msra.mxu0 %v2112
    %2130 = vmatpush.msra.mxu0 %v2111
    %2131 = vmatpush.msra.mxu0 %v2110
    %2132 = vmatpush.msra.mxu0 %v2109
    %2133 = vmatpush.msra.mxu0 %v2108
    %2134 = vmatpush.msra.mxu0 %v2107
    %2135 = vmatpush.msra.mxu0 %v2106
    %2136 = vmatpush.msra.mxu0 %v2105
    %2137 = vmatpush.msra.mxu0 %v2104
    %2138 = vmatpush.msra.mxu0 %v2103
    %2139 = vmatpush.msra.mxu0 %v2102
    %2140 = vmatpush.msra.mxu0 %v2101
    %2141 = vmatpush.msra.mxu0 %v2100
    %2142 = vmatpush.msra.mxu0 %v2099
    %2143 = vmatpush.msra.mxu0 %v2098
    %2144 = vmatpush.msra.mxu0 %v2097
    %2145 = vmatmul.f32.gmra.mxu0 %v1886
    %v2146 = vpop.f32.mrf.mxu0
    %v2147 = vadd.f32 0.0, %v2146
    %2148 = vdwg.mxu0
    %2149 = vmatpush.msra.mxu0 %v2128
    %2150 = vmatpush.msra.mxu0 %v2127
    %2151 = vmatpush.msra.mxu0 %v2126
    %2152 = vmatpush.msra.mxu0 %v2125
    %2153 = vmatpush.msra.mxu0 %v2124
    %2154 = vmatpush.msra.mxu0 %v2123
    %2155 = vmatpush.msra.mxu0 %v2122
    %2156 = vmatpush.msra.mxu0 %v2121
    %2157 = vmatpush.msra.mxu0 %v2120
    %2158 = vmatpush.msra.mxu0 %v2119
    %2159 = vmatpush.msra.mxu0 %v2118
    %2160 = vmatpush.msra.mxu0 %v2117
    %2161 = vmatpush.msra.mxu0 %v2116
    %2162 = vmatpush.msra.mxu0 %v2115
    %2163 = vmatpush.msra.mxu0 %v2114
    %2164 = vmatpush.msra.mxu0 %v2113
    %2165 = vmatmul.f32.gmra.mxu0 %v1887
    %v2166 = vpop.f32.mrf.mxu0
    %v2167 = vadd.f32 %v2147, %v2166
    %2168 = vdwg.mxu0
    %s2169 = scalar_lea.vmem [#allocation7], 32
    %v2170 = vld [vmem:[%s2169] sm:$0xff]
    %v2171 = vld [vmem:[%s2169 + $0x8] sm:$0xff]
    %v2173 = vsel %vm447, %v2170, 0
    %v2176 = vsel %vm447, %v2171, 0
    %2178 = vmatpush.msra.mxu0 0.0
    %2179 = vmatpush.msra.mxu0 0.0
    %2180 = vmatpush.msra.mxu0 0.0
    %2181 = vmatpush.msra.mxu0 0.0
    %2182 = vmatpush.msra.mxu0 0.0
    %2183 = vmatpush.msra.mxu0 0.0
    %2184 = vmatpush.msra.mxu0 0.0
    %2185 = vmatpush.msra.mxu0 0.0
    %2186 = vmatpush.msra.mxu0 0.0
    %2187 = vmatpush.msra.mxu0 0.0
    %2188 = vmatpush.msra.mxu0 0.0
    %2189 = vmatpush.msra.mxu0 0.0
    %2190 = vmatpush.msra.mxu0 0.0
    %2191 = vmatpush.msra.mxu0 0.0
    %2192 = vmatpush.msra.mxu0 0.0
    %2193 = vmatpush.msra.mxu0 %v2167
    %2194 = vmatmul.f32.gmra.mxu0 %v2173
    %v2195 = vpop.f32.mrf.mxu0
    %v2196 = vadd.f32 0.0, %v2195
    %2197 = vmatmul.f32.gmra.mxu0 %v2176
    %v2198 = vpop.f32.mrf.mxu0
    %v2199 = vadd.f32 0.0, %v2198
    %2200 = vdwg.mxu0
    %v2201 = vadd.f32 %v2091, %v2196
    %v2202 = vadd.f32 %v2094, %v2199
    %s2203 = scalar_lea.vmem [#allocation10], 768
    %v2204 = vld [vmem:[%s2203] sm:$0xff]
    %v2205 = vld [vmem:[%s2203 + $0x8] sm:$0xff]
    %v2206 = vld [vmem:[%s2203 + $0x10] sm:$0xff]
    %v2207 = vld [vmem:[%s2203 + $0x18] sm:$0xff]
    %v2208 = vld [vmem:[%s2203 + $0x20] sm:$0xff]
    %v2209 = vld [vmem:[%s2203 + $0x28] sm:$0xff]
    %v2210 = vld [vmem:[%s2203 + $0x30] sm:$0xff]
    %v2211 = vld [vmem:[%s2203 + $0x38] sm:$0xff]
    %v2212 = vld [vmem:[%s2203 + $0x40] sm:$0xff]
    %v2213 = vld [vmem:[%s2203 + $0x48] sm:$0xff]
    %v2214 = vld [vmem:[%s2203 + $0x50] sm:$0xff]
    %v2215 = vld [vmem:[%s2203 + $0x58] sm:$0xff]
    %v2216 = vld [vmem:[%s2203 + $0x60] sm:$0xff]
    %v2217 = vld [vmem:[%s2203 + $0x68] sm:$0xff]
    %v2218 = vld [vmem:[%s2203 + $0x70] sm:$0xff]
    %v2219 = vld [vmem:[%s2203 + $0x78] sm:$0xff]
    %v2220 = vld [vmem:[%s2203 + $0x80] sm:$0xff]
    %v2221 = vld [vmem:[%s2203 + $0x88] sm:$0xff]
    %v2222 = vld [vmem:[%s2203 + $0x90] sm:$0xff]
    %v2223 = vld [vmem:[%s2203 + $0x98] sm:$0xff]
    %v2224 = vld [vmem:[%s2203 + $0xa0] sm:$0xff]
    %v2225 = vld [vmem:[%s2203 + $0xa8] sm:$0xff]
    %v2226 = vld [vmem:[%s2203 + $0xb0] sm:$0xff]
    %v2227 = vld [vmem:[%s2203 + $0xb8] sm:$0xff]
    %v2228 = vld [vmem:[%s2203 + $0xc0] sm:$0xff]
    %v2229 = vld [vmem:[%s2203 + $0xc8] sm:$0xff]
    %v2230 = vld [vmem:[%s2203 + $0xd0] sm:$0xff]
    %v2231 = vld [vmem:[%s2203 + $0xd8] sm:$0xff]
    %v2232 = vld [vmem:[%s2203 + $0xe0] sm:$0xff]
    %v2233 = vld [vmem:[%s2203 + $0xe8] sm:$0xff]
    %v2234 = vld [vmem:[%s2203 + $0xf0] sm:$0xff]
    %v2235 = vld [vmem:[%s2203 + $0xf8] sm:$0xff]
    %2236 = vmatpush.msra.mxu0 %v2219
    %2237 = vmatpush.msra.mxu0 %v2218
    %2238 = vmatpush.msra.mxu0 %v2217
    %2239 = vmatpush.msra.mxu0 %v2216
    %2240 = vmatpush.msra.mxu0 %v2215
    %2241 = vmatpush.msra.mxu0 %v2214
    %2242 = vmatpush.msra.mxu0 %v2213
    %2243 = vmatpush.msra.mxu0 %v2212
    %2244 = vmatpush.msra.mxu0 %v2211
    %2245 = vmatpush.msra.mxu0 %v2210
    %2246 = vmatpush.msra.mxu0 %v2209
    %2247 = vmatpush.msra.mxu0 %v2208
    %2248 = vmatpush.msra.mxu0 %v2207
    %2249 = vmatpush.msra.mxu0 %v2206
    %2250 = vmatpush.msra.mxu0 %v2205
    %2251 = vmatpush.msra.mxu0 %v2204
    %2252 = vmatmul.f32.gmra.mxu0 %v1886
    %v2253 = vpop.f32.mrf.mxu0
    %v2254 = vadd.f32 0.0, %v2253
    %2255 = vdwg.mxu0
    %2256 = vmatpush.msra.mxu0 %v2235
    %2257 = vmatpush.msra.mxu0 %v2234
    %2258 = vmatpush.msra.mxu0 %v2233
    %2259 = vmatpush.msra.mxu0 %v2232
    %2260 = vmatpush.msra.mxu0 %v2231
    %2261 = vmatpush.msra.mxu0 %v2230
    %2262 = vmatpush.msra.mxu0 %v2229
    %2263 = vmatpush.msra.mxu0 %v2228
    %2264 = vmatpush.msra.mxu0 %v2227
    %2265 = vmatpush.msra.mxu0 %v2226
    %2266 = vmatpush.msra.mxu0 %v2225
    %2267 = vmatpush.msra.mxu0 %v2224
    %2268 = vmatpush.msra.mxu0 %v2223
    %2269 = vmatpush.msra.mxu0 %v2222
    %2270 = vmatpush.msra.mxu0 %v2221
    %2271 = vmatpush.msra.mxu0 %v2220
    %2272 = vmatmul.f32.gmra.mxu0 %v1887
    %v2273 = vpop.f32.mrf.mxu0
    %v2274 = vadd.f32 %v2254, %v2273
    %2275 = vdwg.mxu0
    %s2276 = scalar_lea.vmem [#allocation7], 48
    %v2277 = vld [vmem:[%s2276] sm:$0xff]
    %v2278 = vld [vmem:[%s2276 + $0x8] sm:$0xff]
    %v2280 = vsel %vm447, %v2277, 0
    %v2283 = vsel %vm447, %v2278, 0
    %2285 = vmatpush.msra.mxu0 0.0
    %2286 = vmatpush.msra.mxu0 0.0
    %2287 = vmatpush.msra.mxu0 0.0
    %2288 = vmatpush.msra.mxu0 0.0
    %2289 = vmatpush.msra.mxu0 0.0
    %2290 = vmatpush.msra.mxu0 0.0
    %2291 = vmatpush.msra.mxu0 0.0
    %2292 = vmatpush.msra.mxu0 0.0
    %2293 = vmatpush.msra.mxu0 0.0
    %2294 = vmatpush.msra.mxu0 0.0
    %2295 = vmatpush.msra.mxu0 0.0
    %2296 = vmatpush.msra.mxu0 0.0
    %2297 = vmatpush.msra.mxu0 0.0
    %2298 = vmatpush.msra.mxu0 0.0
    %2299 = vmatpush.msra.mxu0 0.0
    %2300 = vmatpush.msra.mxu0 %v2274
    %2301 = vmatmul.f32.gmra.mxu0 %v2280
    %v2302 = vpop.f32.mrf.mxu0
    %v2303 = vadd.f32 0.0, %v2302
    %2304 = vmatmul.f32.gmra.mxu0 %v2283
    %v2305 = vpop.f32.mrf.mxu0
    %v2306 = vadd.f32 0.0, %v2305
    %2307 = vdwg.mxu0
    %v2308 = vadd.f32 %v2201, %v2303
    %v2309 = vadd.f32 %v2202, %v2306
    %s2310 = scalar_lea.vmem [#allocation10], 1024
    %v2311 = vld [vmem:[%s2310] sm:$0xff]
    %v2312 = vld [vmem:[%s2310 + $0x8] sm:$0xff]
    %v2313 = vld [vmem:[%s2310 + $0x10] sm:$0xff]
    %v2314 = vld [vmem:[%s2310 + $0x18] sm:$0xff]
    %v2315 = vld [vmem:[%s2310 + $0x20] sm:$0xff]
    %v2316 = vld [vmem:[%s2310 + $0x28] sm:$0xff]
    %v2317 = vld [vmem:[%s2310 + $0x30] sm:$0xff]
    %v2318 = vld [vmem:[%s2310 + $0x38] sm:$0xff]
    %v2319 = vld [vmem:[%s2310 + $0x40] sm:$0xff]
    %v2320 = vld [vmem:[%s2310 + $0x48] sm:$0xff]
    %v2321 = vld [vmem:[%s2310 + $0x50] sm:$0xff]
    %v2322 = vld [vmem:[%s2310 + $0x58] sm:$0xff]
    %v2323 = vld [vmem:[%s2310 + $0x60] sm:$0xff]
    %v2324 = vld [vmem:[%s2310 + $0x68] sm:$0xff]
    %v2325 = vld [vmem:[%s2310 + $0x70] sm:$0xff]
    %v2326 = vld [vmem:[%s2310 + $0x78] sm:$0xff]
    %v2327 = vld [vmem:[%s2310 + $0x80] sm:$0xff]
    %v2328 = vld [vmem:[%s2310 + $0x88] sm:$0xff]
    %v2329 = vld [vmem:[%s2310 + $0x90] sm:$0xff]
    %v2330 = vld [vmem:[%s2310 + $0x98] sm:$0xff]
    %v2331 = vld [vmem:[%s2310 + $0xa0] sm:$0xff]
    %v2332 = vld [vmem:[%s2310 + $0xa8] sm:$0xff]
    %v2333 = vld [vmem:[%s2310 + $0xb0] sm:$0xff]
    %v2334 = vld [vmem:[%s2310 + $0xb8] sm:$0xff]
    %v2335 = vld [vmem:[%s2310 + $0xc0] sm:$0xff]
    %v2336 = vld [vmem:[%s2310 + $0xc8] sm:$0xff]
    %v2337 = vld [vmem:[%s2310 + $0xd0] sm:$0xff]
    %v2338 = vld [vmem:[%s2310 + $0xd8] sm:$0xff]
    %v2339 = vld [vmem:[%s2310 + $0xe0] sm:$0xff]
    %v2340 = vld [vmem:[%s2310 + $0xe8] sm:$0xff]
    %v2341 = vld [vmem:[%s2310 + $0xf0] sm:$0xff]
    %v2342 = vld [vmem:[%s2310 + $0xf8] sm:$0xff]
    %2343 = vmatpush.msra.mxu0 %v2326
    %2344 = vmatpush.msra.mxu0 %v2325
    %2345 = vmatpush.msra.mxu0 %v2324
    %2346 = vmatpush.msra.mxu0 %v2323
    %2347 = vmatpush.msra.mxu0 %v2322
    %2348 = vmatpush.msra.mxu0 %v2321
    %2349 = vmatpush.msra.mxu0 %v2320
    %2350 = vmatpush.msra.mxu0 %v2319
    %2351 = vmatpush.msra.mxu0 %v2318
    %2352 = vmatpush.msra.mxu0 %v2317
    %2353 = vmatpush.msra.mxu0 %v2316
    %2354 = vmatpush.msra.mxu0 %v2315
    %2355 = vmatpush.msra.mxu0 %v2314
    %2356 = vmatpush.msra.mxu0 %v2313
    %2357 = vmatpush.msra.mxu0 %v2312
    %2358 = vmatpush.msra.mxu0 %v2311
    %2359 = vmatmul.f32.gmra.mxu0 %v1886
    %v2360 = vpop.f32.mrf.mxu0
    %v2361 = vadd.f32 0.0, %v2360
    %2362 = vdwg.mxu0
    %2363 = vmatpush.msra.mxu0 %v2342
    %2364 = vmatpush.msra.mxu0 %v2341
    %2365 = vmatpush.msra.mxu0 %v2340
    %2366 = vmatpush.msra.mxu0 %v2339
    %2367 = vmatpush.msra.mxu0 %v2338
    %2368 = vmatpush.msra.mxu0 %v2337
    %2369 = vmatpush.msra.mxu0 %v2336
    %2370 = vmatpush.msra.mxu0 %v2335
    %2371 = vmatpush.msra.mxu0 %v2334
    %2372 = vmatpush.msra.mxu0 %v2333
    %2373 = vmatpush.msra.mxu0 %v2332
    %2374 = vmatpush.msra.mxu0 %v2331
    %2375 = vmatpush.msra.mxu0 %v2330
    %2376 = vmatpush.msra.mxu0 %v2329
    %2377 = vmatpush.msra.mxu0 %v2328
    %2378 = vmatpush.msra.mxu0 %v2327
    %2379 = vmatmul.f32.gmra.mxu0 %v1887
    %v2380 = vpop.f32.mrf.mxu0
    %v2381 = vadd.f32 %v2361, %v2380
    %2382 = vdwg.mxu0
    %s2383 = scalar_lea.vmem [#allocation7], 64
    %v2384 = vld [vmem:[%s2383] sm:$0xff]
    %v2385 = vld [vmem:[%s2383 + $0x8] sm:$0xff]
    %v2387 = vsel %vm447, %v2384, 0
    %v2390 = vsel %vm447, %v2385, 0
    %2392 = vmatpush.msra.mxu0 0.0
    %2393 = vmatpush.msra.mxu0 0.0
    %2394 = vmatpush.msra.mxu0 0.0
    %2395 = vmatpush.msra.mxu0 0.0
    %2396 = vmatpush.msra.mxu0 0.0
    %2397 = vmatpush.msra.mxu0 0.0
    %2398 = vmatpush.msra.mxu0 0.0
    %2399 = vmatpush.msra.mxu0 0.0
    %2400 = vmatpush.msra.mxu0 0.0
    %2401 = vmatpush.msra.mxu0 0.0
    %2402 = vmatpush.msra.mxu0 0.0
    %2403 = vmatpush.msra.mxu0 0.0
    %2404 = vmatpush.msra.mxu0 0.0
    %2405 = vmatpush.msra.mxu0 0.0
    %2406 = vmatpush.msra.mxu0 0.0
    %2407 = vmatpush.msra.mxu0 %v2381
    %2408 = vmatmul.f32.gmra.mxu0 %v2387
    %v2409 = vpop.f32.mrf.mxu0
    %v2410 = vadd.f32 0.0, %v2409
    %2411 = vmatmul.f32.gmra.mxu0 %v2390
    %v2412 = vpop.f32.mrf.mxu0
    %v2413 = vadd.f32 0.0, %v2412
    %2414 = vdwg.mxu0
    %v2415 = vadd.f32 %v2308, %v2410
    %v2416 = vadd.f32 %v2309, %v2413
    %s2417 = scalar_lea.vmem [#allocation10], 1280
    %v2418 = vld [vmem:[%s2417] sm:$0xff]
    %v2419 = vld [vmem:[%s2417 + $0x8] sm:$0xff]
    %v2420 = vld [vmem:[%s2417 + $0x10] sm:$0xff]
    %v2421 = vld [vmem:[%s2417 + $0x18] sm:$0xff]
    %v2422 = vld [vmem:[%s2417 + $0x20] sm:$0xff]
    %v2423 = vld [vmem:[%s2417 + $0x28] sm:$0xff]
    %v2424 = vld [vmem:[%s2417 + $0x30] sm:$0xff]
    %v2425 = vld [vmem:[%s2417 + $0x38] sm:$0xff]
    %v2426 = vld [vmem:[%s2417 + $0x40] sm:$0xff]
    %v2427 = vld [vmem:[%s2417 + $0x48] sm:$0xff]
    %v2428 = vld [vmem:[%s2417 + $0x50] sm:$0xff]
    %v2429 = vld [vmem:[%s2417 + $0x58] sm:$0xff]
    %v2430 = vld [vmem:[%s2417 + $0x60] sm:$0xff]
    %v2431 = vld [vmem:[%s2417 + $0x68] sm:$0xff]
    %v2432 = vld [vmem:[%s2417 + $0x70] sm:$0xff]
    %v2433 = vld [vmem:[%s2417 + $0x78] sm:$0xff]
    %v2434 = vld [vmem:[%s2417 + $0x80] sm:$0xff]
    %v2435 = vld [vmem:[%s2417 + $0x88] sm:$0xff]
    %v2436 = vld [vmem:[%s2417 + $0x90] sm:$0xff]
    %v2437 = vld [vmem:[%s2417 + $0x98] sm:$0xff]
    %v2438 = vld [vmem:[%s2417 + $0xa0] sm:$0xff]
    %v2439 = vld [vmem:[%s2417 + $0xa8] sm:$0xff]
    %v2440 = vld [vmem:[%s2417 + $0xb0] sm:$0xff]
    %v2441 = vld [vmem:[%s2417 + $0xb8] sm:$0xff]
    %v2442 = vld [vmem:[%s2417 + $0xc0] sm:$0xff]
    %v2443 = vld [vmem:[%s2417 + $0xc8] sm:$0xff]
    %v2444 = vld [vmem:[%s2417 + $0xd0] sm:$0xff]
    %v2445 = vld [vmem:[%s2417 + $0xd8] sm:$0xff]
    %v2446 = vld [vmem:[%s2417 + $0xe0] sm:$0xff]
    %v2447 = vld [vmem:[%s2417 + $0xe8] sm:$0xff]
    %v2448 = vld [vmem:[%s2417 + $0xf0] sm:$0xff]
    %v2449 = vld [vmem:[%s2417 + $0xf8] sm:$0xff]
    %2450 = vmatpush.msra.mxu0 %v2433
    %2451 = vmatpush.msra.mxu0 %v2432
    %2452 = vmatpush.msra.mxu0 %v2431
    %2453 = vmatpush.msra.mxu0 %v2430
    %2454 = vmatpush.msra.mxu0 %v2429
    %2455 = vmatpush.msra.mxu0 %v2428
    %2456 = vmatpush.msra.mxu0 %v2427
    %2457 = vmatpush.msra.mxu0 %v2426
    %2458 = vmatpush.msra.mxu0 %v2425
    %2459 = vmatpush.msra.mxu0 %v2424
    %2460 = vmatpush.msra.mxu0 %v2423
    %2461 = vmatpush.msra.mxu0 %v2422
    %2462 = vmatpush.msra.mxu0 %v2421
    %2463 = vmatpush.msra.mxu0 %v2420
    %2464 = vmatpush.msra.mxu0 %v2419
    %2465 = vmatpush.msra.mxu0 %v2418
    %2466 = vmatmul.f32.gmra.mxu0 %v1886
    %v2467 = vpop.f32.mrf.mxu0
    %v2468 = vadd.f32 0.0, %v2467
    %2469 = vdwg.mxu0
    %2470 = vmatpush.msra.mxu0 %v2449
    %2471 = vmatpush.msra.mxu0 %v2448
    %2472 = vmatpush.msra.mxu0 %v2447
    %2473 = vmatpush.msra.mxu0 %v2446
    %2474 = vmatpush.msra.mxu0 %v2445
    %2475 = vmatpush.msra.mxu0 %v2444
    %2476 = vmatpush.msra.mxu0 %v2443
    %2477 = vmatpush.msra.mxu0 %v2442
    %2478 = vmatpush.msra.mxu0 %v2441
    %2479 = vmatpush.msra.mxu0 %v2440
    %2480 = vmatpush.msra.mxu0 %v2439
    %2481 = vmatpush.msra.mxu0 %v2438
    %2482 = vmatpush.msra.mxu0 %v2437
    %2483 = vmatpush.msra.mxu0 %v2436
    %2484 = vmatpush.msra.mxu0 %v2435
    %2485 = vmatpush.msra.mxu0 %v2434
    %2486 = vmatmul.f32.gmra.mxu0 %v1887
    %v2487 = vpop.f32.mrf.mxu0
    %v2488 = vadd.f32 %v2468, %v2487
    %2489 = vdwg.mxu0
    %s2490 = scalar_lea.vmem [#allocation7], 80
    %v2491 = vld [vmem:[%s2490] sm:$0xff]
    %v2492 = vld [vmem:[%s2490 + $0x8] sm:$0xff]
    %v2494 = vsel %vm447, %v2491, 0
    %v2497 = vsel %vm447, %v2492, 0
    %2499 = vmatpush.msra.mxu0 0.0
    %2500 = vmatpush.msra.mxu0 0.0
    %2501 = vmatpush.msra.mxu0 0.0
    %2502 = vmatpush.msra.mxu0 0.0
    %2503 = vmatpush.msra.mxu0 0.0
    %2504 = vmatpush.msra.mxu0 0.0
    %2505 = vmatpush.msra.mxu0 0.0
    %2506 = vmatpush.msra.mxu0 0.0
    %2507 = vmatpush.msra.mxu0 0.0
    %2508 = vmatpush.msra.mxu0 0.0
    %2509 = vmatpush.msra.mxu0 0.0
    %2510 = vmatpush.msra.mxu0 0.0
    %2511 = vmatpush.msra.mxu0 0.0
    %2512 = vmatpush.msra.mxu0 0.0
    %2513 = vmatpush.msra.mxu0 0.0
    %2514 = vmatpush.msra.mxu0 %v2488
    %2515 = vmatmul.f32.gmra.mxu0 %v2494
    %v2516 = vpop.f32.mrf.mxu0
    %v2517 = vadd.f32 0.0, %v2516
    %2518 = vmatmul.f32.gmra.mxu0 %v2497
    %v2519 = vpop.f32.mrf.mxu0
    %v2520 = vadd.f32 0.0, %v2519
    %2521 = vdwg.mxu0
    %v2522 = vadd.f32 %v2415, %v2517
    %v2523 = vadd.f32 %v2416, %v2520
    %s2524 = scalar_lea.vmem [#allocation10], 1536
    %v2525 = vld [vmem:[%s2524] sm:$0xff]
    %v2526 = vld [vmem:[%s2524 + $0x8] sm:$0xff]
    %v2527 = vld [vmem:[%s2524 + $0x10] sm:$0xff]
    %v2528 = vld [vmem:[%s2524 + $0x18] sm:$0xff]
    %v2529 = vld [vmem:[%s2524 + $0x20] sm:$0xff]
    %v2530 = vld [vmem:[%s2524 + $0x28] sm:$0xff]
    %v2531 = vld [vmem:[%s2524 + $0x30] sm:$0xff]
    %v2532 = vld [vmem:[%s2524 + $0x38] sm:$0xff]
    %v2533 = vld [vmem:[%s2524 + $0x40] sm:$0xff]
    %v2534 = vld [vmem:[%s2524 + $0x48] sm:$0xff]
    %v2535 = vld [vmem:[%s2524 + $0x50] sm:$0xff]
    %v2536 = vld [vmem:[%s2524 + $0x58] sm:$0xff]
    %v2537 = vld [vmem:[%s2524 + $0x60] sm:$0xff]
    %v2538 = vld [vmem:[%s2524 + $0x68] sm:$0xff]
    %v2539 = vld [vmem:[%s2524 + $0x70] sm:$0xff]
    %v2540 = vld [vmem:[%s2524 + $0x78] sm:$0xff]
    %v2541 = vld [vmem:[%s2524 + $0x80] sm:$0xff]
    %v2542 = vld [vmem:[%s2524 + $0x88] sm:$0xff]
    %v2543 = vld [vmem:[%s2524 + $0x90] sm:$0xff]
    %v2544 = vld [vmem:[%s2524 + $0x98] sm:$0xff]
    %v2545 = vld [vmem:[%s2524 + $0xa0] sm:$0xff]
    %v2546 = vld [vmem:[%s2524 + $0xa8] sm:$0xff]
    %v2547 = vld [vmem:[%s2524 + $0xb0] sm:$0xff]
    %v2548 = vld [vmem:[%s2524 + $0xb8] sm:$0xff]
    %v2549 = vld [vmem:[%s2524 + $0xc0] sm:$0xff]
    %v2550 = vld [vmem:[%s2524 + $0xc8] sm:$0xff]
    %v2551 = vld [vmem:[%s2524 + $0xd0] sm:$0xff]
    %v2552 = vld [vmem:[%s2524 + $0xd8] sm:$0xff]
    %v2553 = vld [vmem:[%s2524 + $0xe0] sm:$0xff]
    %v2554 = vld [vmem:[%s2524 + $0xe8] sm:$0xff]
    %v2555 = vld [vmem:[%s2524 + $0xf0] sm:$0xff]
    %v2556 = vld [vmem:[%s2524 + $0xf8] sm:$0xff]
    %2557 = vmatpush.msra.mxu0 %v2540
    %2558 = vmatpush.msra.mxu0 %v2539
    %2559 = vmatpush.msra.mxu0 %v2538
    %2560 = vmatpush.msra.mxu0 %v2537
    %2561 = vmatpush.msra.mxu0 %v2536
    %2562 = vmatpush.msra.mxu0 %v2535
    %2563 = vmatpush.msra.mxu0 %v2534
    %2564 = vmatpush.msra.mxu0 %v2533
    %2565 = vmatpush.msra.mxu0 %v2532
    %2566 = vmatpush.msra.mxu0 %v2531
    %2567 = vmatpush.msra.mxu0 %v2530
    %2568 = vmatpush.msra.mxu0 %v2529
    %2569 = vmatpush.msra.mxu0 %v2528
    %2570 = vmatpush.msra.mxu0 %v2527
    %2571 = vmatpush.msra.mxu0 %v2526
    %2572 = vmatpush.msra.mxu0 %v2525
    %2573 = vmatmul.f32.gmra.mxu0 %v1886
    %v2574 = vpop.f32.mrf.mxu0
    %v2575 = vadd.f32 0.0, %v2574
    %2576 = vdwg.mxu0
    %2577 = vmatpush.msra.mxu0 %v2556
    %2578 = vmatpush.msra.mxu0 %v2555
    %2579 = vmatpush.msra.mxu0 %v2554
    %2580 = vmatpush.msra.mxu0 %v2553
    %2581 = vmatpush.msra.mxu0 %v2552
    %2582 = vmatpush.msra.mxu0 %v2551
    %2583 = vmatpush.msra.mxu0 %v2550
    %2584 = vmatpush.msra.mxu0 %v2549
    %2585 = vmatpush.msra.mxu0 %v2548
    %2586 = vmatpush.msra.mxu0 %v2547
    %2587 = vmatpush.msra.mxu0 %v2546
    %2588 = vmatpush.msra.mxu0 %v2545
    %2589 = vmatpush.msra.mxu0 %v2544
    %2590 = vmatpush.msra.mxu0 %v2543
    %2591 = vmatpush.msra.mxu0 %v2542
    %2592 = vmatpush.msra.mxu0 %v2541
    %2593 = vmatmul.f32.gmra.mxu0 %v1887
    %v2594 = vpop.f32.mrf.mxu0
    %v2595 = vadd.f32 %v2575, %v2594
    %2596 = vdwg.mxu0
    %s2597 = scalar_lea.vmem [#allocation7], 96
    %v2598 = vld [vmem:[%s2597] sm:$0xff]
    %v2599 = vld [vmem:[%s2597 + $0x8] sm:$0xff]
    %v2601 = vsel %vm447, %v2598, 0
    %v2604 = vsel %vm447, %v2599, 0
    %2606 = vmatpush.msra.mxu0 0.0
    %2607 = vmatpush.msra.mxu0 0.0
    %2608 = vmatpush.msra.mxu0 0.0
    %2609 = vmatpush.msra.mxu0 0.0
    %2610 = vmatpush.msra.mxu0 0.0
    %2611 = vmatpush.msra.mxu0 0.0
    %2612 = vmatpush.msra.mxu0 0.0
    %2613 = vmatpush.msra.mxu0 0.0
    %2614 = vmatpush.msra.mxu0 0.0
    %2615 = vmatpush.msra.mxu0 0.0
    %2616 = vmatpush.msra.mxu0 0.0
    %2617 = vmatpush.msra.mxu0 0.0
    %2618 = vmatpush.msra.mxu0 0.0
    %2619 = vmatpush.msra.mxu0 0.0
    %2620 = vmatpush.msra.mxu0 0.0
    %2621 = vmatpush.msra.mxu0 %v2595
    %2622 = vmatmul.f32.gmra.mxu0 %v2601
    %v2623 = vpop.f32.mrf.mxu0
    %v2624 = vadd.f32 0.0, %v2623
    %2625 = vmatmul.f32.gmra.mxu0 %v2604
    %v2626 = vpop.f32.mrf.mxu0
    %v2627 = vadd.f32 0.0, %v2626
    %2628 = vdwg.mxu0
    %v2629 = vadd.f32 %v2522, %v2624
    %v2630 = vadd.f32 %v2523, %v2627
    %s2631 = scalar_lea.vmem [#allocation10], 1792
    %v2632 = vld [vmem:[%s2631] sm:$0xff]
    %v2633 = vld [vmem:[%s2631 + $0x8] sm:$0xff]
    %v2634 = vld [vmem:[%s2631 + $0x10] sm:$0xff]
    %v2635 = vld [vmem:[%s2631 + $0x18] sm:$0xff]
    %v2636 = vld [vmem:[%s2631 + $0x20] sm:$0xff]
    %v2637 = vld [vmem:[%s2631 + $0x28] sm:$0xff]
    %v2638 = vld [vmem:[%s2631 + $0x30] sm:$0xff]
    %v2639 = vld [vmem:[%s2631 + $0x38] sm:$0xff]
    %v2640 = vld [vmem:[%s2631 + $0x40] sm:$0xff]
    %v2641 = vld [vmem:[%s2631 + $0x48] sm:$0xff]
    %v2642 = vld [vmem:[%s2631 + $0x50] sm:$0xff]
    %v2643 = vld [vmem:[%s2631 + $0x58] sm:$0xff]
    %v2644 = vld [vmem:[%s2631 + $0x60] sm:$0xff]
    %v2645 = vld [vmem:[%s2631 + $0x68] sm:$0xff]
    %v2646 = vld [vmem:[%s2631 + $0x70] sm:$0xff]
    %v2647 = vld [vmem:[%s2631 + $0x78] sm:$0xff]
    %v2648 = vld [vmem:[%s2631 + $0x80] sm:$0xff]
    %v2649 = vld [vmem:[%s2631 + $0x88] sm:$0xff]
    %v2650 = vld [vmem:[%s2631 + $0x90] sm:$0xff]
    %v2651 = vld [vmem:[%s2631 + $0x98] sm:$0xff]
    %v2652 = vld [vmem:[%s2631 + $0xa0] sm:$0xff]
    %v2653 = vld [vmem:[%s2631 + $0xa8] sm:$0xff]
    %v2654 = vld [vmem:[%s2631 + $0xb0] sm:$0xff]
    %v2655 = vld [vmem:[%s2631 + $0xb8] sm:$0xff]
    %v2656 = vld [vmem:[%s2631 + $0xc0] sm:$0xff]
    %v2657 = vld [vmem:[%s2631 + $0xc8] sm:$0xff]
    %v2658 = vld [vmem:[%s2631 + $0xd0] sm:$0xff]
    %v2659 = vld [vmem:[%s2631 + $0xd8] sm:$0xff]
    %v2660 = vld [vmem:[%s2631 + $0xe0] sm:$0xff]
    %v2661 = vld [vmem:[%s2631 + $0xe8] sm:$0xff]
    %v2662 = vld [vmem:[%s2631 + $0xf0] sm:$0xff]
    %v2663 = vld [vmem:[%s2631 + $0xf8] sm:$0xff]
    %2664 = vmatpush.msra.mxu0 %v2647
    %2665 = vmatpush.msra.mxu0 %v2646
    %2666 = vmatpush.msra.mxu0 %v2645
    %2667 = vmatpush.msra.mxu0 %v2644
    %2668 = vmatpush.msra.mxu0 %v2643
    %2669 = vmatpush.msra.mxu0 %v2642
    %2670 = vmatpush.msra.mxu0 %v2641
    %2671 = vmatpush.msra.mxu0 %v2640
    %2672 = vmatpush.msra.mxu0 %v2639
    %2673 = vmatpush.msra.mxu0 %v2638
    %2674 = vmatpush.msra.mxu0 %v2637
    %2675 = vmatpush.msra.mxu0 %v2636
    %2676 = vmatpush.msra.mxu0 %v2635
    %2677 = vmatpush.msra.mxu0 %v2634
    %2678 = vmatpush.msra.mxu0 %v2633
    %2679 = vmatpush.msra.mxu0 %v2632
    %2680 = vmatmul.f32.gmra.mxu0 %v1886
    %v2681 = vpop.f32.mrf.mxu0
    %v2682 = vadd.f32 0.0, %v2681
    %2683 = vdwg.mxu0
    %2684 = vmatpush.msra.mxu0 %v2663
    %2685 = vmatpush.msra.mxu0 %v2662
    %2686 = vmatpush.msra.mxu0 %v2661
    %2687 = vmatpush.msra.mxu0 %v2660
    %2688 = vmatpush.msra.mxu0 %v2659
    %2689 = vmatpush.msra.mxu0 %v2658
    %2690 = vmatpush.msra.mxu0 %v2657
    %2691 = vmatpush.msra.mxu0 %v2656
    %2692 = vmatpush.msra.mxu0 %v2655
    %2693 = vmatpush.msra.mxu0 %v2654
    %2694 = vmatpush.msra.mxu0 %v2653
    %2695 = vmatpush.msra.mxu0 %v2652
    %2696 = vmatpush.msra.mxu0 %v2651
    %2697 = vmatpush.msra.mxu0 %v2650
    %2698 = vmatpush.msra.mxu0 %v2649
    %2699 = vmatpush.msra.mxu0 %v2648
    %2700 = vmatmul.f32.gmra.mxu0 %v1887
    %v2701 = vpop.f32.mrf.mxu0
    %v2702 = vadd.f32 %v2682, %v2701
    %2703 = vdwg.mxu0
    %s2704 = scalar_lea.vmem [#allocation7], 112
    %v2705 = vld [vmem:[%s2704] sm:$0xff]
    %v2706 = vld [vmem:[%s2704 + $0x8] sm:$0xff]
    %v2708 = vsel %vm447, %v2705, 0
    %v2711 = vsel %vm447, %v2706, 0
    %2713 = vmatpush.msra.mxu0 0.0
    %2714 = vmatpush.msra.mxu0 0.0
    %2715 = vmatpush.msra.mxu0 0.0
    %2716 = vmatpush.msra.mxu0 0.0
    %2717 = vmatpush.msra.mxu0 0.0
    %2718 = vmatpush.msra.mxu0 0.0
    %2719 = vmatpush.msra.mxu0 0.0
    %2720 = vmatpush.msra.mxu0 0.0
    %2721 = vmatpush.msra.mxu0 0.0
    %2722 = vmatpush.msra.mxu0 0.0
    %2723 = vmatpush.msra.mxu0 0.0
    %2724 = vmatpush.msra.mxu0 0.0
    %2725 = vmatpush.msra.mxu0 0.0
    %2726 = vmatpush.msra.mxu0 0.0
    %2727 = vmatpush.msra.mxu0 0.0
    %2728 = vmatpush.msra.mxu0 %v2702
    %2729 = vmatmul.f32.gmra.mxu0 %v2708
    %v2730 = vpop.f32.mrf.mxu0
    %v2731 = vadd.f32 0.0, %v2730
    %2732 = vmatmul.f32.gmra.mxu0 %v2711
    %v2733 = vpop.f32.mrf.mxu0
    %v2734 = vadd.f32 0.0, %v2733
    %2735 = vdwg.mxu0
    %v2736 = vadd.f32 %v2629, %v2731
    %v2737 = vadd.f32 %v2630, %v2734
    %s2738 = scalar_lea.vmem [#allocation10], 2048
    %v2739 = vld [vmem:[%s2738] sm:$0xff]
    %v2740 = vld [vmem:[%s2738 + $0x8] sm:$0xff]
    %v2741 = vld [vmem:[%s2738 + $0x10] sm:$0xff]
    %v2742 = vld [vmem:[%s2738 + $0x18] sm:$0xff]
    %v2743 = vld [vmem:[%s2738 + $0x20] sm:$0xff]
    %v2744 = vld [vmem:[%s2738 + $0x28] sm:$0xff]
    %v2745 = vld [vmem:[%s2738 + $0x30] sm:$0xff]
    %v2746 = vld [vmem:[%s2738 + $0x38] sm:$0xff]
    %v2747 = vld [vmem:[%s2738 + $0x40] sm:$0xff]
    %v2748 = vld [vmem:[%s2738 + $0x48] sm:$0xff]
    %v2749 = vld [vmem:[%s2738 + $0x50] sm:$0xff]
    %v2750 = vld [vmem:[%s2738 + $0x58] sm:$0xff]
    %v2751 = vld [vmem:[%s2738 + $0x60] sm:$0xff]
    %v2752 = vld [vmem:[%s2738 + $0x68] sm:$0xff]
    %v2753 = vld [vmem:[%s2738 + $0x70] sm:$0xff]
    %v2754 = vld [vmem:[%s2738 + $0x78] sm:$0xff]
    %v2755 = vld [vmem:[%s2738 + $0x80] sm:$0xff]
    %v2756 = vld [vmem:[%s2738 + $0x88] sm:$0xff]
    %v2757 = vld [vmem:[%s2738 + $0x90] sm:$0xff]
    %v2758 = vld [vmem:[%s2738 + $0x98] sm:$0xff]
    %v2759 = vld [vmem:[%s2738 + $0xa0] sm:$0xff]
    %v2760 = vld [vmem:[%s2738 + $0xa8] sm:$0xff]
    %v2761 = vld [vmem:[%s2738 + $0xb0] sm:$0xff]
    %v2762 = vld [vmem:[%s2738 + $0xb8] sm:$0xff]
    %v2763 = vld [vmem:[%s2738 + $0xc0] sm:$0xff]
    %v2764 = vld [vmem:[%s2738 + $0xc8] sm:$0xff]
    %v2765 = vld [vmem:[%s2738 + $0xd0] sm:$0xff]
    %v2766 = vld [vmem:[%s2738 + $0xd8] sm:$0xff]
    %v2767 = vld [vmem:[%s2738 + $0xe0] sm:$0xff]
    %v2768 = vld [vmem:[%s2738 + $0xe8] sm:$0xff]
    %v2769 = vld [vmem:[%s2738 + $0xf0] sm:$0xff]
    %v2770 = vld [vmem:[%s2738 + $0xf8] sm:$0xff]
    %2771 = vmatpush.msra.mxu0 %v2754
    %2772 = vmatpush.msra.mxu0 %v2753
    %2773 = vmatpush.msra.mxu0 %v2752
    %2774 = vmatpush.msra.mxu0 %v2751
    %2775 = vmatpush.msra.mxu0 %v2750
    %2776 = vmatpush.msra.mxu0 %v2749
    %2777 = vmatpush.msra.mxu0 %v2748
    %2778 = vmatpush.msra.mxu0 %v2747
    %2779 = vmatpush.msra.mxu0 %v2746
    %2780 = vmatpush.msra.mxu0 %v2745
    %2781 = vmatpush.msra.mxu0 %v2744
    %2782 = vmatpush.msra.mxu0 %v2743
    %2783 = vmatpush.msra.mxu0 %v2742
    %2784 = vmatpush.msra.mxu0 %v2741
    %2785 = vmatpush.msra.mxu0 %v2740
    %2786 = vmatpush.msra.mxu0 %v2739
    %2787 = vmatmul.f32.gmra.mxu0 %v1886
    %v2788 = vpop.f32.mrf.mxu0
    %v2789 = vadd.f32 0.0, %v2788
    %2790 = vdwg.mxu0
    %2791 = vmatpush.msra.mxu0 %v2770
    %2792 = vmatpush.msra.mxu0 %v2769
    %2793 = vmatpush.msra.mxu0 %v2768
    %2794 = vmatpush.msra.mxu0 %v2767
    %2795 = vmatpush.msra.mxu0 %v2766
    %2796 = vmatpush.msra.mxu0 %v2765
    %2797 = vmatpush.msra.mxu0 %v2764
    %2798 = vmatpush.msra.mxu0 %v2763
    %2799 = vmatpush.msra.mxu0 %v2762
    %2800 = vmatpush.msra.mxu0 %v2761
    %2801 = vmatpush.msra.mxu0 %v2760
    %2802 = vmatpush.msra.mxu0 %v2759
    %2803 = vmatpush.msra.mxu0 %v2758
    %2804 = vmatpush.msra.mxu0 %v2757
    %2805 = vmatpush.msra.mxu0 %v2756
    %2806 = vmatpush.msra.mxu0 %v2755
    %2807 = vmatmul.f32.gmra.mxu0 %v1887
    %v2808 = vpop.f32.mrf.mxu0
    %v2809 = vadd.f32 %v2789, %v2808
    %2810 = vdwg.mxu0
    %s2811 = scalar_lea.vmem [#allocation7], 128
    %v2812 = vld [vmem:[%s2811] sm:$0xff]
    %v2813 = vld [vmem:[%s2811 + $0x8] sm:$0xff]
    %v2815 = vsel %vm447, %v2812, 0
    %v2818 = vsel %vm447, %v2813, 0
    %2820 = vmatpush.msra.mxu0 0.0
    %2821 = vmatpush.msra.mxu0 0.0
    %2822 = vmatpush.msra.mxu0 0.0
    %2823 = vmatpush.msra.mxu0 0.0
    %2824 = vmatpush.msra.mxu0 0.0
    %2825 = vmatpush.msra.mxu0 0.0
    %2826 = vmatpush.msra.mxu0 0.0
    %2827 = vmatpush.msra.mxu0 0.0
    %2828 = vmatpush.msra.mxu0 0.0
    %2829 = vmatpush.msra.mxu0 0.0
    %2830 = vmatpush.msra.mxu0 0.0
    %2831 = vmatpush.msra.mxu0 0.0
    %2832 = vmatpush.msra.mxu0 0.0
    %2833 = vmatpush.msra.mxu0 0.0
    %2834 = vmatpush.msra.mxu0 0.0
    %2835 = vmatpush.msra.mxu0 %v2809
    %2836 = vmatmul.f32.gmra.mxu0 %v2815
    %v2837 = vpop.f32.mrf.mxu0
    %v2838 = vadd.f32 0.0, %v2837
    %2839 = vmatmul.f32.gmra.mxu0 %v2818
    %v2840 = vpop.f32.mrf.mxu0
    %v2841 = vadd.f32 0.0, %v2840
    %2842 = vdwg.mxu0
    %v2843 = vadd.f32 %v2736, %v2838
    %v2844 = vadd.f32 %v2737, %v2841
    %v2845 = vld [vmem:[#allocation9] sm:$0xff]
    %v2846 = vld [vmem:[#allocation9 + $0x8] sm:$0xff]
    %2848 = vset.pattern.permute.xlu0 0
    %2849 = vperm.xlu0 %2848, %v2845
    %v2850 = vpop.permute.xlu0 %2849
    %2853 = vset.pattern.permute.xlu0 0
    %2854 = vperm.xlu0 %2853, %v2846
    %v2855 = vpop.permute.xlu0 %2854
    %v2857 = vadd.f32 %v2843, %v2850
    %v2858 = vadd.f32 %v2844, %v2855
    %v2859 = vmax.f32 %v2857, 0.0
    %v2860 = vmax.f32 %v2858, 0.0
    %v2861 = vld [vmem:[#allocation13] sm:$0x1]
    %v2862 = vld [vmem:[#allocation12] sm:$0xff]
    %v2863 = vld [vmem:[#allocation12 + $0x8] sm:$0xff]
    %v2864 = vld [vmem:[#allocation12 + $0x10] sm:$0xff]
    %v2865 = vld [vmem:[#allocation12 + $0x18] sm:$0xff]
    %v2866 = vld [vmem:[#allocation12 + $0x20] sm:$0xff]
    %v2867 = vld [vmem:[#allocation12 + $0x28] sm:$0xff]
    %v2868 = vld [vmem:[#allocation12 + $0x30] sm:$0xff]
    %v2869 = vld [vmem:[#allocation12 + $0x38] sm:$0xff]
    %v2870 = vld [vmem:[#allocation12 + $0x40] sm:$0xff]
    %v2871 = vld [vmem:[#allocation12 + $0x48] sm:$0xff]
    %v2872 = vld [vmem:[#allocation12 + $0x50] sm:$0xff]
    %v2873 = vld [vmem:[#allocation12 + $0x58] sm:$0xff]
    %v2874 = vld [vmem:[#allocation12 + $0x60] sm:$0xff]
    %v2875 = vld [vmem:[#allocation12 + $0x68] sm:$0xff]
    %v2876 = vld [vmem:[#allocation12 + $0x70] sm:$0xff]
    %v2877 = vld [vmem:[#allocation12 + $0x78] sm:$0xff]
    %2878 = vmatpush.msra.mxu0 %v2877
    %2879 = vmatpush.msra.mxu0 %v2876
    %2880 = vmatpush.msra.mxu0 %v2875
    %2881 = vmatpush.msra.mxu0 %v2874
    %2882 = vmatpush.msra.mxu0 %v2873
    %2883 = vmatpush.msra.mxu0 %v2872
    %2884 = vmatpush.msra.mxu0 %v2871
    %2885 = vmatpush.msra.mxu0 %v2870
    %2886 = vmatpush.msra.mxu0 %v2869
    %2887 = vmatpush.msra.mxu0 %v2868
    %2888 = vmatpush.msra.mxu0 %v2867
    %2889 = vmatpush.msra.mxu0 %v2866
    %2890 = vmatpush.msra.mxu0 %v2865
    %2891 = vmatpush.msra.mxu0 %v2864
    %2892 = vmatpush.msra.mxu0 %v2863
    %2893 = vmatpush.msra.mxu0 %v2862
    %2894 = vmatmul.f32.gmra.mxu0 %v2859
    %v2895 = vpop.f32.mrf.mxu0
    %v2896 = vadd.f32 0.0, %v2895
    %2897 = vdwg.mxu0
    %v2898 = vadd.f32 %v2861, %v2896
    %s2899 = scalar_lea.vmem [#allocation12], 128
    %v2900 = vld [vmem:[%s2899] sm:$0xff]
    %v2901 = vld [vmem:[%s2899 + $0x8] sm:$0xff]
    %v2902 = vld [vmem:[%s2899 + $0x10] sm:$0xff]
    %v2903 = vld [vmem:[%s2899 + $0x18] sm:$0xff]
    %v2904 = vld [vmem:[%s2899 + $0x20] sm:$0xff]
    %v2905 = vld [vmem:[%s2899 + $0x28] sm:$0xff]
    %v2906 = vld [vmem:[%s2899 + $0x30] sm:$0xff]
    %v2907 = vld [vmem:[%s2899 + $0x38] sm:$0xff]
    %v2908 = vld [vmem:[%s2899 + $0x40] sm:$0xff]
    %v2909 = vld [vmem:[%s2899 + $0x48] sm:$0xff]
    %v2910 = vld [vmem:[%s2899 + $0x50] sm:$0xff]
    %v2911 = vld [vmem:[%s2899 + $0x58] sm:$0xff]
    %v2912 = vld [vmem:[%s2899 + $0x60] sm:$0xff]
    %v2913 = vld [vmem:[%s2899 + $0x68] sm:$0xff]
    %v2914 = vld [vmem:[%s2899 + $0x70] sm:$0xff]
    %v2915 = vld [vmem:[%s2899 + $0x78] sm:$0xff]
    %v2917 = vrot.slane %v2859, 1
    %2919 = vmatpush.msra.mxu0 %v2915
    %2920 = vmatpush.msra.mxu0 %v2914
    %2921 = vmatpush.msra.mxu0 %v2913
    %2922 = vmatpush.msra.mxu0 %v2912
    %2923 = vmatpush.msra.mxu0 %v2911
    %2924 = vmatpush.msra.mxu0 %v2910
    %2925 = vmatpush.msra.mxu0 %v2909
    %2926 = vmatpush.msra.mxu0 %v2908
    %2927 = vmatpush.msra.mxu0 %v2907
    %2928 = vmatpush.msra.mxu0 %v2906
    %2929 = vmatpush.msra.mxu0 %v2905
    %2930 = vmatpush.msra.mxu0 %v2904
    %2931 = vmatpush.msra.mxu0 %v2903
    %2932 = vmatpush.msra.mxu0 %v2902
    %2933 = vmatpush.msra.mxu0 %v2901
    %2934 = vmatpush.msra.mxu0 %v2900
    %2935 = vmatmul.f32.gmra.mxu0 %v2917
    %v2936 = vpop.f32.mrf.mxu0
    %v2937 = vadd.f32 0.0, %v2936
    %2938 = vdwg.mxu0
    %v2939 = vadd.f32 %v2898, %v2937
    %s2940 = scalar_lea.vmem [#allocation12], 256
    %v2941 = vld [vmem:[%s2940] sm:$0xff]
    %v2942 = vld [vmem:[%s2940 + $0x8] sm:$0xff]
    %v2943 = vld [vmem:[%s2940 + $0x10] sm:$0xff]
    %v2944 = vld [vmem:[%s2940 + $0x18] sm:$0xff]
    %v2945 = vld [vmem:[%s2940 + $0x20] sm:$0xff]
    %v2946 = vld [vmem:[%s2940 + $0x28] sm:$0xff]
    %v2947 = vld [vmem:[%s2940 + $0x30] sm:$0xff]
    %v2948 = vld [vmem:[%s2940 + $0x38] sm:$0xff]
    %v2949 = vld [vmem:[%s2940 + $0x40] sm:$0xff]
    %v2950 = vld [vmem:[%s2940 + $0x48] sm:$0xff]
    %v2951 = vld [vmem:[%s2940 + $0x50] sm:$0xff]
    %v2952 = vld [vmem:[%s2940 + $0x58] sm:$0xff]
    %v2953 = vld [vmem:[%s2940 + $0x60] sm:$0xff]
    %v2954 = vld [vmem:[%s2940 + $0x68] sm:$0xff]
    %v2955 = vld [vmem:[%s2940 + $0x70] sm:$0xff]
    %v2956 = vld [vmem:[%s2940 + $0x78] sm:$0xff]
    %v2957 = vrot.slane %v2859, 2
    %2959 = vmatpush.msra.mxu0 %v2956
    %2960 = vmatpush.msra.mxu0 %v2955
    %2961 = vmatpush.msra.mxu0 %v2954
    %2962 = vmatpush.msra.mxu0 %v2953
    %2963 = vmatpush.msra.mxu0 %v2952
    %2964 = vmatpush.msra.mxu0 %v2951
    %2965 = vmatpush.msra.mxu0 %v2950
    %2966 = vmatpush.msra.mxu0 %v2949
    %2967 = vmatpush.msra.mxu0 %v2948
    %2968 = vmatpush.msra.mxu0 %v2947
    %2969 = vmatpush.msra.mxu0 %v2946
    %2970 = vmatpush.msra.mxu0 %v2945
    %2971 = vmatpush.msra.mxu0 %v2944
    %2972 = vmatpush.msra.mxu0 %v2943
    %2973 = vmatpush.msra.mxu0 %v2942
    %2974 = vmatpush.msra.mxu0 %v2941
    %2975 = vmatmul.f32.gmra.mxu0 %v2957
    %v2976 = vpop.f32.mrf.mxu0
    %v2977 = vadd.f32 0.0, %v2976
    %2978 = vdwg.mxu0
    %v2979 = vadd.f32 %v2939, %v2977
    %s2980 = scalar_lea.vmem [#allocation12], 384
    %v2981 = vld [vmem:[%s2980] sm:$0xff]
    %v2982 = vld [vmem:[%s2980 + $0x8] sm:$0xff]
    %v2983 = vld [vmem:[%s2980 + $0x10] sm:$0xff]
    %v2984 = vld [vmem:[%s2980 + $0x18] sm:$0xff]
    %v2985 = vld [vmem:[%s2980 + $0x20] sm:$0xff]
    %v2986 = vld [vmem:[%s2980 + $0x28] sm:$0xff]
    %v2987 = vld [vmem:[%s2980 + $0x30] sm:$0xff]
    %v2988 = vld [vmem:[%s2980 + $0x38] sm:$0xff]
    %v2989 = vld [vmem:[%s2980 + $0x40] sm:$0xff]
    %v2990 = vld [vmem:[%s2980 + $0x48] sm:$0xff]
    %v2991 = vld [vmem:[%s2980 + $0x50] sm:$0xff]
    %v2992 = vld [vmem:[%s2980 + $0x58] sm:$0xff]
    %v2993 = vld [vmem:[%s2980 + $0x60] sm:$0xff]
    %v2994 = vld [vmem:[%s2980 + $0x68] sm:$0xff]
    %v2995 = vld [vmem:[%s2980 + $0x70] sm:$0xff]
    %v2996 = vld [vmem:[%s2980 + $0x78] sm:$0xff]
    %v2997 = vrot.slane %v2859, 3
    %2999 = vmatpush.msra.mxu0 %v2996
    %3000 = vmatpush.msra.mxu0 %v2995
    %3001 = vmatpush.msra.mxu0 %v2994
    %3002 = vmatpush.msra.mxu0 %v2993
    %3003 = vmatpush.msra.mxu0 %v2992
    %3004 = vmatpush.msra.mxu0 %v2991
    %3005 = vmatpush.msra.mxu0 %v2990
    %3006 = vmatpush.msra.mxu0 %v2989
    %3007 = vmatpush.msra.mxu0 %v2988
    %3008 = vmatpush.msra.mxu0 %v2987
    %3009 = vmatpush.msra.mxu0 %v2986
    %3010 = vmatpush.msra.mxu0 %v2985
    %3011 = vmatpush.msra.mxu0 %v2984
    %3012 = vmatpush.msra.mxu0 %v2983
    %3013 = vmatpush.msra.mxu0 %v2982
    %3014 = vmatpush.msra.mxu0 %v2981
    %3015 = vmatmul.f32.gmra.mxu0 %v2997
    %v3016 = vpop.f32.mrf.mxu0
    %v3017 = vadd.f32 0.0, %v3016
    %3018 = vdwg.mxu0
    %v3019 = vadd.f32 %v2979, %v3017
    %s3020 = scalar_lea.vmem [#allocation12], 512
    %v3021 = vld [vmem:[%s3020] sm:$0xff]
    %v3022 = vld [vmem:[%s3020 + $0x8] sm:$0xff]
    %v3023 = vld [vmem:[%s3020 + $0x10] sm:$0xff]
    %v3024 = vld [vmem:[%s3020 + $0x18] sm:$0xff]
    %v3025 = vld [vmem:[%s3020 + $0x20] sm:$0xff]
    %v3026 = vld [vmem:[%s3020 + $0x28] sm:$0xff]
    %v3027 = vld [vmem:[%s3020 + $0x30] sm:$0xff]
    %v3028 = vld [vmem:[%s3020 + $0x38] sm:$0xff]
    %v3029 = vld [vmem:[%s3020 + $0x40] sm:$0xff]
    %v3030 = vld [vmem:[%s3020 + $0x48] sm:$0xff]
    %v3031 = vld [vmem:[%s3020 + $0x50] sm:$0xff]
    %v3032 = vld [vmem:[%s3020 + $0x58] sm:$0xff]
    %v3033 = vld [vmem:[%s3020 + $0x60] sm:$0xff]
    %v3034 = vld [vmem:[%s3020 + $0x68] sm:$0xff]
    %v3035 = vld [vmem:[%s3020 + $0x70] sm:$0xff]
    %v3036 = vld [vmem:[%s3020 + $0x78] sm:$0xff]
    %v3037 = vrot.slane %v2859, 4
    %3039 = vmatpush.msra.mxu0 %v3036
    %3040 = vmatpush.msra.mxu0 %v3035
    %3041 = vmatpush.msra.mxu0 %v3034
    %3042 = vmatpush.msra.mxu0 %v3033
    %3043 = vmatpush.msra.mxu0 %v3032
    %3044 = vmatpush.msra.mxu0 %v3031
    %3045 = vmatpush.msra.mxu0 %v3030
    %3046 = vmatpush.msra.mxu0 %v3029
    %3047 = vmatpush.msra.mxu0 %v3028
    %3048 = vmatpush.msra.mxu0 %v3027
    %3049 = vmatpush.msra.mxu0 %v3026
    %3050 = vmatpush.msra.mxu0 %v3025
    %3051 = vmatpush.msra.mxu0 %v3024
    %3052 = vmatpush.msra.mxu0 %v3023
    %3053 = vmatpush.msra.mxu0 %v3022
    %3054 = vmatpush.msra.mxu0 %v3021
    %3055 = vmatmul.f32.gmra.mxu0 %v3037
    %v3056 = vpop.f32.mrf.mxu0
    %v3057 = vadd.f32 0.0, %v3056
    %3058 = vdwg.mxu0
    %v3059 = vadd.f32 %v3019, %v3057
    %s3060 = scalar_lea.vmem [#allocation12], 640
    %v3061 = vld [vmem:[%s3060] sm:$0xff]
    %v3062 = vld [vmem:[%s3060 + $0x8] sm:$0xff]
    %v3063 = vld [vmem:[%s3060 + $0x10] sm:$0xff]
    %v3064 = vld [vmem:[%s3060 + $0x18] sm:$0xff]
    %v3065 = vld [vmem:[%s3060 + $0x20] sm:$0xff]
    %v3066 = vld [vmem:[%s3060 + $0x28] sm:$0xff]
    %v3067 = vld [vmem:[%s3060 + $0x30] sm:$0xff]
    %v3068 = vld [vmem:[%s3060 + $0x38] sm:$0xff]
    %v3069 = vld [vmem:[%s3060 + $0x40] sm:$0xff]
    %v3070 = vld [vmem:[%s3060 + $0x48] sm:$0xff]
    %v3071 = vld [vmem:[%s3060 + $0x50] sm:$0xff]
    %v3072 = vld [vmem:[%s3060 + $0x58] sm:$0xff]
    %v3073 = vld [vmem:[%s3060 + $0x60] sm:$0xff]
    %v3074 = vld [vmem:[%s3060 + $0x68] sm:$0xff]
    %v3075 = vld [vmem:[%s3060 + $0x70] sm:$0xff]
    %v3076 = vld [vmem:[%s3060 + $0x78] sm:$0xff]
    %v3077 = vrot.slane %v2859, 5
    %3079 = vmatpush.msra.mxu0 %v3076
    %3080 = vmatpush.msra.mxu0 %v3075
    %3081 = vmatpush.msra.mxu0 %v3074
    %3082 = vmatpush.msra.mxu0 %v3073
    %3083 = vmatpush.msra.mxu0 %v3072
    %3084 = vmatpush.msra.mxu0 %v3071
    %3085 = vmatpush.msra.mxu0 %v3070
    %3086 = vmatpush.msra.mxu0 %v3069
    %3087 = vmatpush.msra.mxu0 %v3068
    %3088 = vmatpush.msra.mxu0 %v3067
    %3089 = vmatpush.msra.mxu0 %v3066
    %3090 = vmatpush.msra.mxu0 %v3065
    %3091 = vmatpush.msra.mxu0 %v3064
    %3092 = vmatpush.msra.mxu0 %v3063
    %3093 = vmatpush.msra.mxu0 %v3062
    %3094 = vmatpush.msra.mxu0 %v3061
    %3095 = vmatmul.f32.gmra.mxu0 %v3077
    %v3096 = vpop.f32.mrf.mxu0
    %v3097 = vadd.f32 0.0, %v3096
    %3098 = vdwg.mxu0
    %v3099 = vadd.f32 %v3059, %v3097
    %s3100 = scalar_lea.vmem [#allocation12], 768
    %v3101 = vld [vmem:[%s3100] sm:$0xff]
    %v3102 = vld [vmem:[%s3100 + $0x8] sm:$0xff]
    %v3103 = vld [vmem:[%s3100 + $0x10] sm:$0xff]
    %v3104 = vld [vmem:[%s3100 + $0x18] sm:$0xff]
    %v3105 = vld [vmem:[%s3100 + $0x20] sm:$0xff]
    %v3106 = vld [vmem:[%s3100 + $0x28] sm:$0xff]
    %v3107 = vld [vmem:[%s3100 + $0x30] sm:$0xff]
    %v3108 = vld [vmem:[%s3100 + $0x38] sm:$0xff]
    %v3109 = vld [vmem:[%s3100 + $0x40] sm:$0xff]
    %v3110 = vld [vmem:[%s3100 + $0x48] sm:$0xff]
    %v3111 = vld [vmem:[%s3100 + $0x50] sm:$0xff]
    %v3112 = vld [vmem:[%s3100 + $0x58] sm:$0xff]
    %v3113 = vld [vmem:[%s3100 + $0x60] sm:$0xff]
    %v3114 = vld [vmem:[%s3100 + $0x68] sm:$0xff]
    %v3115 = vld [vmem:[%s3100 + $0x70] sm:$0xff]
    %v3116 = vld [vmem:[%s3100 + $0x78] sm:$0xff]
    %v3117 = vrot.slane %v2859, 6
    %3119 = vmatpush.msra.mxu0 %v3116
    %3120 = vmatpush.msra.mxu0 %v3115
    %3121 = vmatpush.msra.mxu0 %v3114
    %3122 = vmatpush.msra.mxu0 %v3113
    %3123 = vmatpush.msra.mxu0 %v3112
    %3124 = vmatpush.msra.mxu0 %v3111
    %3125 = vmatpush.msra.mxu0 %v3110
    %3126 = vmatpush.msra.mxu0 %v3109
    %3127 = vmatpush.msra.mxu0 %v3108
    %3128 = vmatpush.msra.mxu0 %v3107
    %3129 = vmatpush.msra.mxu0 %v3106
    %3130 = vmatpush.msra.mxu0 %v3105
    %3131 = vmatpush.msra.mxu0 %v3104
    %3132 = vmatpush.msra.mxu0 %v3103
    %3133 = vmatpush.msra.mxu0 %v3102
    %3134 = vmatpush.msra.mxu0 %v3101
    %3135 = vmatmul.f32.gmra.mxu0 %v3117
    %v3136 = vpop.f32.mrf.mxu0
    %v3137 = vadd.f32 0.0, %v3136
    %3138 = vdwg.mxu0
    %v3139 = vadd.f32 %v3099, %v3137
    %s3140 = scalar_lea.vmem [#allocation12], 896
    %v3141 = vld [vmem:[%s3140] sm:$0xff]
    %v3142 = vld [vmem:[%s3140 + $0x8] sm:$0xff]
    %v3143 = vld [vmem:[%s3140 + $0x10] sm:$0xff]
    %v3144 = vld [vmem:[%s3140 + $0x18] sm:$0xff]
    %v3145 = vld [vmem:[%s3140 + $0x20] sm:$0xff]
    %v3146 = vld [vmem:[%s3140 + $0x28] sm:$0xff]
    %v3147 = vld [vmem:[%s3140 + $0x30] sm:$0xff]
    %v3148 = vld [vmem:[%s3140 + $0x38] sm:$0xff]
    %v3149 = vld [vmem:[%s3140 + $0x40] sm:$0xff]
    %v3150 = vld [vmem:[%s3140 + $0x48] sm:$0xff]
    %v3151 = vld [vmem:[%s3140 + $0x50] sm:$0xff]
    %v3152 = vld [vmem:[%s3140 + $0x58] sm:$0xff]
    %v3153 = vld [vmem:[%s3140 + $0x60] sm:$0xff]
    %v3154 = vld [vmem:[%s3140 + $0x68] sm:$0xff]
    %v3155 = vld [vmem:[%s3140 + $0x70] sm:$0xff]
    %v3156 = vld [vmem:[%s3140 + $0x78] sm:$0xff]
    %v3157 = vrot.slane %v2859, 7
    %3159 = vmatpush.msra.mxu0 %v3156
    %3160 = vmatpush.msra.mxu0 %v3155
    %3161 = vmatpush.msra.mxu0 %v3154
    %3162 = vmatpush.msra.mxu0 %v3153
    %3163 = vmatpush.msra.mxu0 %v3152
    %3164 = vmatpush.msra.mxu0 %v3151
    %3165 = vmatpush.msra.mxu0 %v3150
    %3166 = vmatpush.msra.mxu0 %v3149
    %3167 = vmatpush.msra.mxu0 %v3148
    %3168 = vmatpush.msra.mxu0 %v3147
    %3169 = vmatpush.msra.mxu0 %v3146
    %3170 = vmatpush.msra.mxu0 %v3145
    %3171 = vmatpush.msra.mxu0 %v3144
    %3172 = vmatpush.msra.mxu0 %v3143
    %3173 = vmatpush.msra.mxu0 %v3142
    %3174 = vmatpush.msra.mxu0 %v3141
    %3175 = vmatmul.f32.gmra.mxu0 %v3157
    %v3176 = vpop.f32.mrf.mxu0
    %v3177 = vadd.f32 0.0, %v3176
    %3178 = vdwg.mxu0
    %v3179 = vadd.f32 %v3139, %v3177
    %s3180 = scalar_lea.vmem [#allocation12], 1024
    %v3181 = vld [vmem:[%s3180] sm:$0xff]
    %v3182 = vld [vmem:[%s3180 + $0x8] sm:$0xff]
    %v3183 = vld [vmem:[%s3180 + $0x10] sm:$0xff]
    %v3184 = vld [vmem:[%s3180 + $0x18] sm:$0xff]
    %v3185 = vld [vmem:[%s3180 + $0x20] sm:$0xff]
    %v3186 = vld [vmem:[%s3180 + $0x28] sm:$0xff]
    %v3187 = vld [vmem:[%s3180 + $0x30] sm:$0xff]
    %v3188 = vld [vmem:[%s3180 + $0x38] sm:$0xff]
    %v3189 = vld [vmem:[%s3180 + $0x40] sm:$0xff]
    %v3190 = vld [vmem:[%s3180 + $0x48] sm:$0xff]
    %v3191 = vld [vmem:[%s3180 + $0x50] sm:$0xff]
    %v3192 = vld [vmem:[%s3180 + $0x58] sm:$0xff]
    %v3193 = vld [vmem:[%s3180 + $0x60] sm:$0xff]
    %v3194 = vld [vmem:[%s3180 + $0x68] sm:$0xff]
    %v3195 = vld [vmem:[%s3180 + $0x70] sm:$0xff]
    %v3196 = vld [vmem:[%s3180 + $0x78] sm:$0xff]
    %3197 = vmatpush.msra.mxu0 %v3196
    %3198 = vmatpush.msra.mxu0 %v3195
    %3199 = vmatpush.msra.mxu0 %v3194
    %3200 = vmatpush.msra.mxu0 %v3193
    %3201 = vmatpush.msra.mxu0 %v3192
    %3202 = vmatpush.msra.mxu0 %v3191
    %3203 = vmatpush.msra.mxu0 %v3190
    %3204 = vmatpush.msra.mxu0 %v3189
    %3205 = vmatpush.msra.mxu0 %v3188
    %3206 = vmatpush.msra.mxu0 %v3187
    %3207 = vmatpush.msra.mxu0 %v3186
    %3208 = vmatpush.msra.mxu0 %v3185
    %3209 = vmatpush.msra.mxu0 %v3184
    %3210 = vmatpush.msra.mxu0 %v3183
    %3211 = vmatpush.msra.mxu0 %v3182
    %3212 = vmatpush.msra.mxu0 %v3181
    %3213 = vmatmul.f32.gmra.mxu0 %v2860
    %v3214 = vpop.f32.mrf.mxu0
    %v3215 = vadd.f32 0.0, %v3214
    %3216 = vdwg.mxu0
    %v3217 = vadd.f32 %v3179, %v3215
    %s3218 = scalar_lea.vmem [#allocation12], 1152
    %v3219 = vld [vmem:[%s3218] sm:$0xff]
    %v3220 = vld [vmem:[%s3218 + $0x8] sm:$0xff]
    %v3221 = vld [vmem:[%s3218 + $0x10] sm:$0xff]
    %v3222 = vld [vmem:[%s3218 + $0x18] sm:$0xff]
    %v3223 = vld [vmem:[%s3218 + $0x20] sm:$0xff]
    %v3224 = vld [vmem:[%s3218 + $0x28] sm:$0xff]
    %v3225 = vld [vmem:[%s3218 + $0x30] sm:$0xff]
    %v3226 = vld [vmem:[%s3218 + $0x38] sm:$0xff]
    %v3227 = vld [vmem:[%s3218 + $0x40] sm:$0xff]
    %v3228 = vld [vmem:[%s3218 + $0x48] sm:$0xff]
    %v3229 = vld [vmem:[%s3218 + $0x50] sm:$0xff]
    %v3230 = vld [vmem:[%s3218 + $0x58] sm:$0xff]
    %v3231 = vld [vmem:[%s3218 + $0x60] sm:$0xff]
    %v3232 = vld [vmem:[%s3218 + $0x68] sm:$0xff]
    %v3233 = vld [vmem:[%s3218 + $0x70] sm:$0xff]
    %v3234 = vld [vmem:[%s3218 + $0x78] sm:$0xff]
    %v3236 = vrot.slane %v2860, 1
    %3238 = vmatpush.msra.mxu0 %v3234
    %3239 = vmatpush.msra.mxu0 %v3233
    %3240 = vmatpush.msra.mxu0 %v3232
    %3241 = vmatpush.msra.mxu0 %v3231
    %3242 = vmatpush.msra.mxu0 %v3230
    %3243 = vmatpush.msra.mxu0 %v3229
    %3244 = vmatpush.msra.mxu0 %v3228
    %3245 = vmatpush.msra.mxu0 %v3227
    %3246 = vmatpush.msra.mxu0 %v3226
    %3247 = vmatpush.msra.mxu0 %v3225
    %3248 = vmatpush.msra.mxu0 %v3224
    %3249 = vmatpush.msra.mxu0 %v3223
    %3250 = vmatpush.msra.mxu0 %v3222
    %3251 = vmatpush.msra.mxu0 %v3221
    %3252 = vmatpush.msra.mxu0 %v3220
    %3253 = vmatpush.msra.mxu0 %v3219
    %3254 = vmatmul.f32.gmra.mxu0 %v3236
    %v3255 = vpop.f32.mrf.mxu0
    %v3256 = vadd.f32 0.0, %v3255
    %3257 = vdwg.mxu0
    %v3258 = vadd.f32 %v3217, %v3256
    %s3259 = scalar_lea.vmem [#allocation12], 1280
    %v3260 = vld [vmem:[%s3259] sm:$0xff]
    %v3261 = vld [vmem:[%s3259 + $0x8] sm:$0xff]
    %v3262 = vld [vmem:[%s3259 + $0x10] sm:$0xff]
    %v3263 = vld [vmem:[%s3259 + $0x18] sm:$0xff]
    %v3264 = vld [vmem:[%s3259 + $0x20] sm:$0xff]
    %v3265 = vld [vmem:[%s3259 + $0x28] sm:$0xff]
    %v3266 = vld [vmem:[%s3259 + $0x30] sm:$0xff]
    %v3267 = vld [vmem:[%s3259 + $0x38] sm:$0xff]
    %v3268 = vld [vmem:[%s3259 + $0x40] sm:$0xff]
    %v3269 = vld [vmem:[%s3259 + $0x48] sm:$0xff]
    %v3270 = vld [vmem:[%s3259 + $0x50] sm:$0xff]
    %v3271 = vld [vmem:[%s3259 + $0x58] sm:$0xff]
    %v3272 = vld [vmem:[%s3259 + $0x60] sm:$0xff]
    %v3273 = vld [vmem:[%s3259 + $0x68] sm:$0xff]
    %v3274 = vld [vmem:[%s3259 + $0x70] sm:$0xff]
    %v3275 = vld [vmem:[%s3259 + $0x78] sm:$0xff]
    %v3276 = vrot.slane %v2860, 2
    %3278 = vmatpush.msra.mxu0 %v3275
    %3279 = vmatpush.msra.mxu0 %v3274
    %3280 = vmatpush.msra.mxu0 %v3273
    %3281 = vmatpush.msra.mxu0 %v3272
    %3282 = vmatpush.msra.mxu0 %v3271
    %3283 = vmatpush.msra.mxu0 %v3270
    %3284 = vmatpush.msra.mxu0 %v3269
    %3285 = vmatpush.msra.mxu0 %v3268
    %3286 = vmatpush.msra.mxu0 %v3267
    %3287 = vmatpush.msra.mxu0 %v3266
    %3288 = vmatpush.msra.mxu0 %v3265
    %3289 = vmatpush.msra.mxu0 %v3264
    %3290 = vmatpush.msra.mxu0 %v3263
    %3291 = vmatpush.msra.mxu0 %v3262
    %3292 = vmatpush.msra.mxu0 %v3261
    %3293 = vmatpush.msra.mxu0 %v3260
    %3294 = vmatmul.f32.gmra.mxu0 %v3276
    %v3295 = vpop.f32.mrf.mxu0
    %v3296 = vadd.f32 0.0, %v3295
    %3297 = vdwg.mxu0
    %v3298 = vadd.f32 %v3258, %v3296
    %s3299 = scalar_lea.vmem [#allocation12], 1408
    %v3300 = vld [vmem:[%s3299] sm:$0xff]
    %v3301 = vld [vmem:[%s3299 + $0x8] sm:$0xff]
    %v3302 = vld [vmem:[%s3299 + $0x10] sm:$0xff]
    %v3303 = vld [vmem:[%s3299 + $0x18] sm:$0xff]
    %v3304 = vld [vmem:[%s3299 + $0x20] sm:$0xff]
    %v3305 = vld [vmem:[%s3299 + $0x28] sm:$0xff]
    %v3306 = vld [vmem:[%s3299 + $0x30] sm:$0xff]
    %v3307 = vld [vmem:[%s3299 + $0x38] sm:$0xff]
    %v3308 = vld [vmem:[%s3299 + $0x40] sm:$0xff]
    %v3309 = vld [vmem:[%s3299 + $0x48] sm:$0xff]
    %v3310 = vld [vmem:[%s3299 + $0x50] sm:$0xff]
    %v3311 = vld [vmem:[%s3299 + $0x58] sm:$0xff]
    %v3312 = vld [vmem:[%s3299 + $0x60] sm:$0xff]
    %v3313 = vld [vmem:[%s3299 + $0x68] sm:$0xff]
    %v3314 = vld [vmem:[%s3299 + $0x70] sm:$0xff]
    %v3315 = vld [vmem:[%s3299 + $0x78] sm:$0xff]
    %v3316 = vrot.slane %v2860, 3
    %3318 = vmatpush.msra.mxu0 %v3315
    %3319 = vmatpush.msra.mxu0 %v3314
    %3320 = vmatpush.msra.mxu0 %v3313
    %3321 = vmatpush.msra.mxu0 %v3312
    %3322 = vmatpush.msra.mxu0 %v3311
    %3323 = vmatpush.msra.mxu0 %v3310
    %3324 = vmatpush.msra.mxu0 %v3309
    %3325 = vmatpush.msra.mxu0 %v3308
    %3326 = vmatpush.msra.mxu0 %v3307
    %3327 = vmatpush.msra.mxu0 %v3306
    %3328 = vmatpush.msra.mxu0 %v3305
    %3329 = vmatpush.msra.mxu0 %v3304
    %3330 = vmatpush.msra.mxu0 %v3303
    %3331 = vmatpush.msra.mxu0 %v3302
    %3332 = vmatpush.msra.mxu0 %v3301
    %3333 = vmatpush.msra.mxu0 %v3300
    %3334 = vmatmul.f32.gmra.mxu0 %v3316
    %v3335 = vpop.f32.mrf.mxu0
    %v3336 = vadd.f32 0.0, %v3335
    %3337 = vdwg.mxu0
    %v3338 = vadd.f32 %v3298, %v3336
    %s3339 = scalar_lea.vmem [#allocation12], 1536
    %v3340 = vld [vmem:[%s3339] sm:$0xff]
    %v3341 = vld [vmem:[%s3339 + $0x8] sm:$0xff]
    %v3342 = vld [vmem:[%s3339 + $0x10] sm:$0xff]
    %v3343 = vld [vmem:[%s3339 + $0x18] sm:$0xff]
    %v3344 = vld [vmem:[%s3339 + $0x20] sm:$0xff]
    %v3345 = vld [vmem:[%s3339 + $0x28] sm:$0xff]
    %v3346 = vld [vmem:[%s3339 + $0x30] sm:$0xff]
    %v3347 = vld [vmem:[%s3339 + $0x38] sm:$0xff]
    %v3348 = vld [vmem:[%s3339 + $0x40] sm:$0xff]
    %v3349 = vld [vmem:[%s3339 + $0x48] sm:$0xff]
    %v3350 = vld [vmem:[%s3339 + $0x50] sm:$0xff]
    %v3351 = vld [vmem:[%s3339 + $0x58] sm:$0xff]
    %v3352 = vld [vmem:[%s3339 + $0x60] sm:$0xff]
    %v3353 = vld [vmem:[%s3339 + $0x68] sm:$0xff]
    %v3354 = vld [vmem:[%s3339 + $0x70] sm:$0xff]
    %v3355 = vld [vmem:[%s3339 + $0x78] sm:$0xff]
    %v3356 = vrot.slane %v2860, 4
    %3358 = vmatpush.msra.mxu0 %v3355
    %3359 = vmatpush.msra.mxu0 %v3354
    %3360 = vmatpush.msra.mxu0 %v3353
    %3361 = vmatpush.msra.mxu0 %v3352
    %3362 = vmatpush.msra.mxu0 %v3351
    %3363 = vmatpush.msra.mxu0 %v3350
    %3364 = vmatpush.msra.mxu0 %v3349
    %3365 = vmatpush.msra.mxu0 %v3348
    %3366 = vmatpush.msra.mxu0 %v3347
    %3367 = vmatpush.msra.mxu0 %v3346
    %3368 = vmatpush.msra.mxu0 %v3345
    %3369 = vmatpush.msra.mxu0 %v3344
    %3370 = vmatpush.msra.mxu0 %v3343
    %3371 = vmatpush.msra.mxu0 %v3342
    %3372 = vmatpush.msra.mxu0 %v3341
    %3373 = vmatpush.msra.mxu0 %v3340
    %3374 = vmatmul.f32.gmra.mxu0 %v3356
    %v3375 = vpop.f32.mrf.mxu0
    %v3376 = vadd.f32 0.0, %v3375
    %3377 = vdwg.mxu0
    %v3378 = vadd.f32 %v3338, %v3376
    %s3379 = scalar_lea.vmem [#allocation12], 1664
    %v3380 = vld [vmem:[%s3379] sm:$0xff]
    %v3381 = vld [vmem:[%s3379 + $0x8] sm:$0xff]
    %v3382 = vld [vmem:[%s3379 + $0x10] sm:$0xff]
    %v3383 = vld [vmem:[%s3379 + $0x18] sm:$0xff]
    %v3384 = vld [vmem:[%s3379 + $0x20] sm:$0xff]
    %v3385 = vld [vmem:[%s3379 + $0x28] sm:$0xff]
    %v3386 = vld [vmem:[%s3379 + $0x30] sm:$0xff]
    %v3387 = vld [vmem:[%s3379 + $0x38] sm:$0xff]
    %v3388 = vld [vmem:[%s3379 + $0x40] sm:$0xff]
    %v3389 = vld [vmem:[%s3379 + $0x48] sm:$0xff]
    %v3390 = vld [vmem:[%s3379 + $0x50] sm:$0xff]
    %v3391 = vld [vmem:[%s3379 + $0x58] sm:$0xff]
    %v3392 = vld [vmem:[%s3379 + $0x60] sm:$0xff]
    %v3393 = vld [vmem:[%s3379 + $0x68] sm:$0xff]
    %v3394 = vld [vmem:[%s3379 + $0x70] sm:$0xff]
    %v3395 = vld [vmem:[%s3379 + $0x78] sm:$0xff]
    %v3396 = vrot.slane %v2860, 5
    %3398 = vmatpush.msra.mxu0 %v3395
    %3399 = vmatpush.msra.mxu0 %v3394
    %3400 = vmatpush.msra.mxu0 %v3393
    %3401 = vmatpush.msra.mxu0 %v3392
    %3402 = vmatpush.msra.mxu0 %v3391
    %3403 = vmatpush.msra.mxu0 %v3390
    %3404 = vmatpush.msra.mxu0 %v3389
    %3405 = vmatpush.msra.mxu0 %v3388
    %3406 = vmatpush.msra.mxu0 %v3387
    %3407 = vmatpush.msra.mxu0 %v3386
    %3408 = vmatpush.msra.mxu0 %v3385
    %3409 = vmatpush.msra.mxu0 %v3384
    %3410 = vmatpush.msra.mxu0 %v3383
    %3411 = vmatpush.msra.mxu0 %v3382
    %3412 = vmatpush.msra.mxu0 %v3381
    %3413 = vmatpush.msra.mxu0 %v3380
    %3414 = vmatmul.f32.gmra.mxu0 %v3396
    %v3415 = vpop.f32.mrf.mxu0
    %v3416 = vadd.f32 0.0, %v3415
    %3417 = vdwg.mxu0
    %v3418 = vadd.f32 %v3378, %v3416
    %s3419 = scalar_lea.vmem [#allocation12], 1792
    %v3420 = vld [vmem:[%s3419] sm:$0xff]
    %v3421 = vld [vmem:[%s3419 + $0x8] sm:$0xff]
    %v3422 = vld [vmem:[%s3419 + $0x10] sm:$0xff]
    %v3423 = vld [vmem:[%s3419 + $0x18] sm:$0xff]
    %v3424 = vld [vmem:[%s3419 + $0x20] sm:$0xff]
    %v3425 = vld [vmem:[%s3419 + $0x28] sm:$0xff]
    %v3426 = vld [vmem:[%s3419 + $0x30] sm:$0xff]
    %v3427 = vld [vmem:[%s3419 + $0x38] sm:$0xff]
    %v3428 = vld [vmem:[%s3419 + $0x40] sm:$0xff]
    %v3429 = vld [vmem:[%s3419 + $0x48] sm:$0xff]
    %v3430 = vld [vmem:[%s3419 + $0x50] sm:$0xff]
    %v3431 = vld [vmem:[%s3419 + $0x58] sm:$0xff]
    %v3432 = vld [vmem:[%s3419 + $0x60] sm:$0xff]
    %v3433 = vld [vmem:[%s3419 + $0x68] sm:$0xff]
    %v3434 = vld [vmem:[%s3419 + $0x70] sm:$0xff]
    %v3435 = vld [vmem:[%s3419 + $0x78] sm:$0xff]
    %v3436 = vrot.slane %v2860, 6
    %3438 = vmatpush.msra.mxu0 %v3435
    %3439 = vmatpush.msra.mxu0 %v3434
    %3440 = vmatpush.msra.mxu0 %v3433
    %3441 = vmatpush.msra.mxu0 %v3432
    %3442 = vmatpush.msra.mxu0 %v3431
    %3443 = vmatpush.msra.mxu0 %v3430
    %3444 = vmatpush.msra.mxu0 %v3429
    %3445 = vmatpush.msra.mxu0 %v3428
    %3446 = vmatpush.msra.mxu0 %v3427
    %3447 = vmatpush.msra.mxu0 %v3426
    %3448 = vmatpush.msra.mxu0 %v3425
    %3449 = vmatpush.msra.mxu0 %v3424
    %3450 = vmatpush.msra.mxu0 %v3423
    %3451 = vmatpush.msra.mxu0 %v3422
    %3452 = vmatpush.msra.mxu0 %v3421
    %3453 = vmatpush.msra.mxu0 %v3420
    %3454 = vmatmul.f32.gmra.mxu0 %v3436
    %v3455 = vpop.f32.mrf.mxu0
    %v3456 = vadd.f32 0.0, %v3455
    %3457 = vdwg.mxu0
    %v3458 = vadd.f32 %v3418, %v3456
    %s3459 = scalar_lea.vmem [#allocation12], 1920
    %v3460 = vld [vmem:[%s3459] sm:$0xff]
    %v3461 = vld [vmem:[%s3459 + $0x8] sm:$0xff]
    %v3462 = vld [vmem:[%s3459 + $0x10] sm:$0xff]
    %v3463 = vld [vmem:[%s3459 + $0x18] sm:$0xff]
    %v3464 = vld [vmem:[%s3459 + $0x20] sm:$0xff]
    %v3465 = vld [vmem:[%s3459 + $0x28] sm:$0xff]
    %v3466 = vld [vmem:[%s3459 + $0x30] sm:$0xff]
    %v3467 = vld [vmem:[%s3459 + $0x38] sm:$0xff]
    %v3468 = vld [vmem:[%s3459 + $0x40] sm:$0xff]
    %v3469 = vld [vmem:[%s3459 + $0x48] sm:$0xff]
    %v3470 = vld [vmem:[%s3459 + $0x50] sm:$0xff]
    %v3471 = vld [vmem:[%s3459 + $0x58] sm:$0xff]
    %v3472 = vld [vmem:[%s3459 + $0x60] sm:$0xff]
    %v3473 = vld [vmem:[%s3459 + $0x68] sm:$0xff]
    %v3474 = vld [vmem:[%s3459 + $0x70] sm:$0xff]
    %v3475 = vld [vmem:[%s3459 + $0x78] sm:$0xff]
    %v3476 = vrot.slane %v2860, 7
    %3478 = vmatpush.msra.mxu0 %v3475
    %3479 = vmatpush.msra.mxu0 %v3474
    %3480 = vmatpush.msra.mxu0 %v3473
    %3481 = vmatpush.msra.mxu0 %v3472
    %3482 = vmatpush.msra.mxu0 %v3471
    %3483 = vmatpush.msra.mxu0 %v3470
    %3484 = vmatpush.msra.mxu0 %v3469
    %3485 = vmatpush.msra.mxu0 %v3468
    %3486 = vmatpush.msra.mxu0 %v3467
    %3487 = vmatpush.msra.mxu0 %v3466
    %3488 = vmatpush.msra.mxu0 %v3465
    %3489 = vmatpush.msra.mxu0 %v3464
    %3490 = vmatpush.msra.mxu0 %v3463
    %3491 = vmatpush.msra.mxu0 %v3462
    %3492 = vmatpush.msra.mxu0 %v3461
    %3493 = vmatpush.msra.mxu0 %v3460
    %3494 = vmatmul.f32.gmra.mxu0 %v3476
    %v3495 = vpop.f32.mrf.mxu0
    %v3496 = vadd.f32 0.0, %v3495
    %3497 = vdwg.mxu0
    %v3498 = vadd.f32 %v3458, %v3496
    %3499 = vst [vmem:[%s9] sm:$0x1] %v3498
    // Predicated region
    $region70: #{batched_chw.1} parent=1 // pred_check
      _
    $region71: #{batched_chw.1} parent=1 // pred_check_branch
      %3501 = sbr.rel (0) target = $region73
    $region72: #{batched_chw.1} parent=1 // pred_region
      _
    $region73: #{batched_chw.1} parent=1 // pred_fallthru
      _
    // Predicated region
    $region74: #{batched_chw.1} parent=1 // pred_check
      _
    $region75: #{batched_chw.1} parent=1 // pred_check_branch
      %3503 = sbr.rel (0) target = $region77
    $region76: #{batched_chw.1} parent=1 // pred_region
      _
    $region77: #{batched_chw.1} parent=1 // pred_fallthru
      _
    %3504 = vsyncpa [#allocation3], 1
    %3505 = vsyncpa [#allocation5], 1
    %3506 = vsyncpa [#allocation8], 1
    %3507 = vsyncpa [#allocation11], 1
    %3508 = vsyncpa [#allocation14], 1

</llo_original>
